<compile_context>
chip_gen: v7x
topology: tpu7x:2x2x1
jax: 0.10.0
libtpu: 0.0.40
codegen_flags: <defaults>
</compile_context>

<pallas_src>
import math
import functools

import jax
import jax.numpy as jnp
from jax.experimental import pallas as pl
from jax.experimental.pallas import tpu as pltpu

_LN_EPS = 1e-6          # nn.LayerNorm(..., eps=1e-06) in the module
_BN_EPS = 1e-5          # nn.BatchNorm1d default
_MAX_ROW_TILE = 128     # row tile for [N, D] slabs (multiple of 8 / lane friendly)

_PAR1 = pltpu.CompilerParams(dimension_semantics=("parallel",))


def _row_tiles(n):
    """Pick a row tile (second-to-last dim) and grid size for an [n, D] slab."""
    if n <= _MAX_ROW_TILE:
        return n, 1
    return _MAX_ROW_TILE, pl.cdiv(n, _MAX_ROW_TILE)


# --------------------------------------------------------------------------
# Pallas kernels
# --------------------------------------------------------------------------
def _ln_qkv_kernel(x_ref, g_ref, b_ref, w_ref, o_ref):
    # Fused LayerNorm + QKV projection.  x: (tm, D); w: (D, 3D) bf16 -> o: (tm, 3D)
    x = x_ref[...].astype(jnp.float32)
    mean = jnp.mean(x, axis=-1, keepdims=True)
    var = jnp.mean(jnp.square(x - mean), axis=-1, keepdims=True)
    xn = (x - mean) * jax.lax.rsqrt(var + _LN_EPS)
    xn = xn * g_ref[...] + b_ref[...]
    y = jnp.dot(xn.astype(jnp.bfloat16), w_ref[...],
                preferred_element_type=jnp.float32)
    o_ref[...] = y.astype(o_ref.dtype)


def _mha_kernel(qkv_ref, o_ref, *, n_head, d_model):
    # One program per batch element; all heads computed inside, output lane-dense (T, D).
    # qkv: (T, 3D) with feature layout [q | k | v], each head-major (h, dk).
    # The Encoder's src_mask is all zeros -> no masking.
    # TODO(synk): for long sequences switch to KV-tiled online-softmax; full (T,T) scores
    #             are fine in VMEM at these sizes.
    D = d_model
    dk = D // n_head
    scale = 1.0 / math.sqrt(dk)
    qkv = qkv_ref[...]
    q = qkv[:, 0:D]
    k = qkv[:, D:2 * D]
    v = qkv[:, 2 * D:3 * D]
    dn_qkT = (((1,), (1,)), ((), ()))   # contract feature dims: q @ k^T without k.T
    outs = []
    for h in range(n_head):
        sl = slice(h * dk, (h + 1) * dk)
        qh = q[:, sl].astype(jnp.bfloat16)
        kh = k[:, sl].astype(jnp.bfloat16)
        vh = v[:, sl].astype(jnp.bfloat16)
        s = jax.lax.dot_general(qh, kh, dn_qkT,
                                preferred_element_type=jnp.float32) * scale
        s_max = jnp.max(s, axis=-1, keepdims=True)
        e = jnp.exp(s - s_max)
        denom = jnp.sum(e, axis=-1, keepdims=True)
        p = e * pl.reciprocal(denom, approx=True)
        outs.append(jnp.dot(p.astype(jnp.bfloat16), vh,
                            preferred_element_type=jnp.float32))
    o_ref[...] = jnp.concatenate(outs, axis=-1).astype(o_ref.dtype)


def _proj_res_kernel(ctx_ref, w_ref, res_ref, o_ref):
    # Attention output projection (no bias) fused with the residual add.
    y = jnp.dot(ctx_ref[...].astype(jnp.bfloat16), w_ref[...],
                preferred_element_type=jnp.float32)
    o_ref[...] = (y + res_ref[...].astype(jnp.float32)).astype(o_ref.dtype)


def _ffn_kernel(x_ref, g_ref, b_ref, w1_ref, b1_ref, w2_ref, b2_ref, o_ref):
    # Fused FFN: out = W2(relu(W1(LayerNorm(x)))) + x
    x = x_ref[...].astype(jnp.float32)
    mean = jnp.mean(x, axis=-1, keepdims=True)
    var = jnp.mean(jnp.square(x - mean), axis=-1, keepdims=True)
    xn = (x - mean) * jax.lax.rsqrt(var + _LN_EPS) * g_ref[...] + b_ref[...]
    h = jnp.dot(xn.astype(jnp.bfloat16), w1_ref[...],
                preferred_element_type=jnp.float32) + b1_ref[...]
    h = jnp.maximum(h, 0.0)
    y = jnp.dot(h.astype(jnp.bfloat16), w2_ref[...],
                preferred_element_type=jnp.float32) + b2_ref[...]
    o_ref[...] = (y + x).astype(o_ref.dtype)


def _layernorm_kernel(x_ref, g_ref, b_ref, o_ref):
    x = x_ref[...].astype(jnp.float32)
    mean = jnp.mean(x, axis=-1, keepdims=True)
    var = jnp.mean(jnp.square(x - mean), axis=-1, keepdims=True)
    y = (x - mean) * jax.lax.rsqrt(var + _LN_EPS)
    o_ref[...] = (y * g_ref[...] + b_ref[...]).astype(o_ref.dtype)


def _conv_bn_relu_kernel(p_ref, w_ref, s_ref, b_ref, o_ref):
    # im2col conv-as-matmul with folded eval-mode BatchNorm and ReLU.
    # p: (tm, 3*Cin), w: (3*Cin, Cout) bf16, s/b: (1, Cout)
    y = jnp.dot(p_ref[...].astype(jnp.bfloat16), w_ref[...],
                preferred_element_type=jnp.float32)
    y = y * s_ref[...] + b_ref[...]
    o_ref[...] = jnp.maximum(y, 0.0).astype(o_ref.dtype)


# --------------------------------------------------------------------------
# Pallas wrappers
# --------------------------------------------------------------------------
def ln_qkv_pallas(x2d, g, b, wqkv):
    N, D = x2d.shape
    Dout = wqkv.shape[1]
    tm, nrt = _row_tiles(N)
    return pl.pallas_call(
        _ln_qkv_kernel,
        out_shape=jax.ShapeDtypeStruct((N, Dout), x2d.dtype),
        grid=(nrt,),
        in_specs=[
            pl.BlockSpec((tm, D), lambda i: (i, 0)),
            pl.BlockSpec((1, D), lambda i: (0, 0)),
            pl.BlockSpec((1, D), lambda i: (0, 0)),
            pl.BlockSpec((D, Dout), lambda i: (0, 0)),
        ],
        out_specs=pl.BlockSpec((tm, Dout), lambda i: (i, 0)),
        compiler_params=_PAR1,
    )(x2d, g.reshape(1, D), b.reshape(1, D), wqkv)


def mha_pallas(qkv, n_head):
    B, T, D3 = qkv.shape
    D = D3 // 3
    kern = functools.partial(_mha_kernel, n_head=n_head, d_model=D)
    return pl.pallas_call(
        kern,
        out_shape=jax.ShapeDtypeStruct((B, T, D), qkv.dtype),
        grid=(B,),
        in_specs=[pl.BlockSpec((None, T, D3), lambda b: (b, 0, 0))],
        out_specs=pl.BlockSpec((None, T, D), lambda b: (b, 0, 0)),
        compiler_params=_PAR1,
    )(qkv)


def proj_residual_pallas(ctx2d, wfc, res2d):
    N, D = ctx2d.shape
    tm, nrt = _row_tiles(N)
    return pl.pallas_call(
        _proj_res_kernel,
        out_shape=jax.ShapeDtypeStruct((N, D), res2d.dtype),
        grid=(nrt,),
        in_specs=[
            pl.BlockSpec((tm, D), lambda i: (i, 0)),
            pl.BlockSpec((D, D), lambda i: (0, 0)),
            pl.BlockSpec((tm, D), lambda i: (i, 0)),
        ],
        out_specs=pl.BlockSpec((tm, D), lambda i: (i, 0)),
        compiler_params=_PAR1,
    )(ctx2d, wfc, res2d)


def ffn_pallas(x2d, ln_g, ln_b, w1, b1, w2, b2):
    N, D = x2d.shape
    F = w1.shape[1]
    tm, nrt = _row_tiles(N)
    return pl.pallas_call(
        _ffn_kernel,
        out_shape=jax.ShapeDtypeStruct((N, D), x2d.dtype),
        grid=(nrt,),
        in_specs=[
            pl.BlockSpec((tm, D), lambda i: (i, 0)),
            pl.BlockSpec((1, D), lambda i: (0, 0)),
            pl.BlockSpec((1, D), lambda i: (0, 0)),
            pl.BlockSpec((D, F), lambda i: (0, 0)),
            pl.BlockSpec((1, F), lambda i: (0, 0)),
            pl.BlockSpec((F, D), lambda i: (0, 0)),
            pl.BlockSpec((1, D), lambda i: (0, 0)),
        ],
        out_specs=pl.BlockSpec((tm, D), lambda i: (i, 0)),
        compiler_params=_PAR1,
    )(x2d, ln_g.reshape(1, D), ln_b.reshape(1, D),
      w1, b1.reshape(1, F), w2, b2.reshape(1, D))


def layernorm_pallas(x2d, g, b):
    N, D = x2d.shape
    tm, nrt = _row_tiles(N)
    return pl.pallas_call(
        _layernorm_kernel,
        out_shape=jax.ShapeDtypeStruct((N, D), x2d.dtype),
        grid=(nrt,),
        in_specs=[
            pl.BlockSpec((tm, D), lambda i: (i, 0)),
            pl.BlockSpec((1, D), lambda i: (0, 0)),
            pl.BlockSpec((1, D), lambda i: (0, 0)),
        ],
        out_specs=pl.BlockSpec((tm, D), lambda i: (i, 0)),
        compiler_params=_PAR1,
    )(x2d, g.reshape(1, D), b.reshape(1, D))


def conv1d_bn_relu_pallas(x, w2d, scale, bias):
    # x: (B, L, Cin); w2d: (3*Cin, Cout) bf16 (offset-major im2col layout); scale/bias: (Cout,)
    B, L, Cin = x.shape
    Cout = w2d.shape[1]
    xp = jnp.pad(x, ((0, 0), (1, 1), (0, 0)))
    patches = jnp.concatenate(
        [xp[:, 0:L, :], xp[:, 1:L + 1, :], xp[:, 2:L + 2, :]], axis=-1)
    p2d = patches.reshape(B * L, 3 * Cin)
    N = B * L
    tm, nrt = _row_tiles(N)
    out = pl.pallas_call(
        _conv_bn_relu_kernel,
        out_shape=jax.ShapeDtypeStruct((N, Cout), x.dtype),
        grid=(nrt,),
        in_specs=[
            pl.BlockSpec((tm, 3 * Cin), lambda i: (i, 0)),
            pl.BlockSpec((3 * Cin, Cout), lambda i: (0, 0)),
            pl.BlockSpec((1, Cout), lambda i: (0, 0)),
            pl.BlockSpec((1, Cout), lambda i: (0, 0)),
        ],
        out_specs=pl.BlockSpec((tm, Cout), lambda i: (i, 0)),
        compiler_params=_PAR1,
    )(p2d, w2d, scale.reshape(1, Cout), bias.reshape(1, Cout))
    return out.reshape(B, L, Cout)


# --------------------------------------------------------------------------
# Model glue (plain JAX)
# --------------------------------------------------------------------------
def maxpool1d_k3s2p1(x):
    # x: (B, L, C) -> (B, Lout, C); PyTorch MaxPool1d(kernel=3, stride=2, padding=1)
    B, L, C = x.shape
    Lout = (L - 1) // 2 + 1
    neg = jnp.full((B, 1, C), -jnp.inf, x.dtype)
    xp = jnp.concatenate([neg, x, neg], axis=1)
    a = xp[:, 0:2 * Lout - 1:2, :]
    b = xp[:, 1:2 * Lout:2, :]
    c = xp[:, 2:2 * Lout + 1:2, :]
    return jnp.maximum(jnp.maximum(a, b), c)


def src_embed(signal, p):
    # signal: (B, L, 1) channel-last (the PyTorch module transposes to (B,1,L) for Conv1d)
    x = conv1d_bn_relu_pallas(signal, p["c1_w"], p["c1_s"], p["c1_b"])
    x = maxpool1d_k3s2p1(x)
    x = conv1d_bn_relu_pallas(x, p["c2_w"], p["c2_s"], p["c2_b"])
    x = maxpool1d_k3s2p1(x)
    x = conv1d_bn_relu_pallas(x, p["c3_w"], p["c3_s"], p["c3_b"])
    x = maxpool1d_k3s2p1(x)
    return x


def encoder_layer_fwd(x, lp, n_head):
    B, T, D = x.shape
    x2d = x.reshape(B * T, D)
    # LN + fused QKV projection (no bias, matching nn.Linear(..., bias=False))
    qkv = ln_qkv_pallas(x2d, lp["ln_g"], lp["ln_b"], lp["wqkv"]).reshape(B, T, 3 * D)
    # multi-head attention (src_mask is all-zero -> unmasked)
    ctx = mha_pallas(qkv, n_head)                              # (B, T, D) lane-dense
    # output projection + residual
    x2d = proj_residual_pallas(ctx.reshape(B * T, D), lp["wfc"], x2d)
    # FFN (fused LN + MLP + residual)
    x2d = ffn_pallas(x2d, lp["ffn_ln_g"], lp["ffn_ln_b"],
                     lp["ffn_w1"], lp["ffn_b1"], lp["ffn_w2"], lp["ffn_b2"])
    return x2d.reshape(B, T, D)


def positional_encoding_table(max_len, d_model):
    position = jnp.arange(max_len, dtype=jnp.float32)[:, None]
    div_term = jnp.exp(jnp.arange(0, d_model, 2, dtype=jnp.float32)
                       * -(math.log(10000.0) / d_model))
    pe = jnp.zeros((max_len, d_model), jnp.float32)
    pe = pe.at[:, 0::2].set(jnp.sin(position * div_term))
    pe = pe.at[:, 1::2].set(jnp.cos(position * div_term))
    return pe


@functools.partial(jax.jit, static_argnames=("n_head",))
def encoder_forward(params, signal, n_head):
    emb = src_embed(signal, params)                # (B, T, D)
    B, T, D = emb.shape
    x = emb + params["pe"][None, :T, :]            # positional encoding (dropout == identity)
    src_mask = jnp.zeros((B, 1, T), jnp.uint8)     # module always builds an all-zero mask
    for lp in params["layers"]:
        x = encoder_layer_fwd(x, lp, n_head)
    x = layernorm_pallas(x.reshape(B * T, D), params["ln_g"], params["ln_b"]).reshape(B, T, D)
    return x, src_mask


# --------------------------------------------------------------------------
# Deterministic parameter init
# --------------------------------------------------------------------------
def init_params(key, d_model, d_ff, n_head, num_layers, max_len=5000):
    half = d_model // 2

    def nrm(k, shape, scale=0.02, dtype=jnp.float32):
        return (scale * jax.random.normal(k, shape, jnp.float32)).astype(dtype)

    def bn_fold(c):
        # eval-mode BatchNorm1d with fresh running stats (mean=0, var=1, gamma=1, beta=0)
        gamma = jnp.ones((c,), jnp.float32)
        beta = jnp.zeros((c,), jnp.float32)
        mean = jnp.zeros((c,), jnp.float32)
        var = jnp.ones((c,), jnp.float32)
        s = gamma * jax.lax.rsqrt(var + _BN_EPS)
        return s, beta - mean * s

    keys = jax.random.split(key, 3 + num_layers)
    c1_s, c1_b = bn_fold(half)
    c2_s, c2_b = bn_fold(d_model)
    c3_s, c3_b = bn_fold(d_model)

    layers = []
    for li in range(num_layers):
        k = jax.random.split(keys[3 + li], 6)
        wq = nrm(k[0], (d_model, d_model))
        wk = nrm(k[1], (d_model, d_model))
        wv = nrm(k[2], (d_model, d_model))
        layers.append(dict(
            ln_g=jnp.ones((d_model,)), ln_b=jnp.zeros((d_model,)),
            wqkv=jnp.concatenate([wq, wk, wv], axis=1).astype(jnp.bfloat16),
            wfc=nrm(k[3], (d_model, d_model), dtype=jnp.bfloat16),
            ffn_ln_g=jnp.ones((d_model,)), ffn_ln_b=jnp.zeros((d_model,)),
            ffn_w1=nrm(k[4], (d_model, d_ff), dtype=jnp.bfloat16),
            ffn_b1=jnp.zeros((d_ff,)),
            ffn_w2=nrm(k[5], (d_ff, d_model), dtype=jnp.bfloat16),
            ffn_b2=jnp.zeros((d_model,)),
        ))

    return dict(
        # conv weights stored in offset-major im2col layout (K*Cin, Cout), bf16 MXU operands
        c1_w=nrm(keys[0], (3 * 1, half), dtype=jnp.bfloat16), c1_s=c1_s, c1_b=c1_b,
        c2_w=nrm(keys[1], (3 * half, d_model), dtype=jnp.bfloat16), c2_s=c2_s, c2_b=c2_b,
        c3_w=nrm(keys[2], (3 * d_model, d_model), dtype=jnp.bfloat16), c3_s=c3_s, c3_b=c3_b,
        pe=positional_encoding_table(max_len, d_model),
        layers=layers,
        ln_g=jnp.ones((d_model,)), ln_b=jnp.zeros((d_model,)),
    )


# --------------------------------------------------------------------------
if __name__ == "__main__":
    B, L = 2, 128                      # raw signal length; three stride-2 pools -> T = 16
    d_model, d_ff, n_head = 128, 256, 4
    num_layers = 2

    root = jax.random.PRNGKey(0)
    kp, ks = jax.random.split(root)

    params = init_params(kp, d_model, d_ff, n_head, num_layers, max_len=64)
    signal = jax.random.normal(ks, (B, L, 1), jnp.float32)

    out, src_mask = encoder_forward(params, signal, n_head)
    out = jax.block_until_ready(out)

    T = L // 8
    assert out.shape == (B, T, d_model)
    assert src_mask.shape == (B, 1, T)
    assert bool(jnp.all(jnp.isfinite(out)))
    print("KERNEL_OK")
</pallas_src>

<mosaic_0001>
module attributes {stable_mosaic.version = 11 : i64} {
  func.func @_conv_bn_relu_kernel(%arg0: i32, %arg1: memref<128x3xf32, #tpu.memory_space<vmem>>, %arg2: memref<3x64xbf16, #tpu.memory_space<vmem>>, %arg3: memref<1x64xf32, #tpu.memory_space<vmem>>, %arg4: memref<1x64xf32, #tpu.memory_space<vmem>>, %arg5: memref<128x64xf32, #tpu.memory_space<vmem>>) attributes {dimension_semantics = [#tpu.dimension_semantics<parallel>], iteration_bounds = array<i64: 2>, scalar_prefetch = 0 : i64, scratch_operands = 0 : i64, tpu.core_type = #tpu.core_type<tc>, window_params = [{transform_indices = @transform_0, window_bounds = array<i64: 128, 3>}, {pipeline_mode = #tpu.pipeline_mode<synchronous>, transform_indices = @transform_1, window_bounds = array<i64: 3, 64>}, {pipeline_mode = #tpu.pipeline_mode<synchronous>, transform_indices = @transform_2, window_bounds = array<i64: 1, 64>}, {pipeline_mode = #tpu.pipeline_mode<synchronous>, transform_indices = @transform_3, window_bounds = array<i64: 1, 64>}, {transform_indices = @transform_4, window_bounds = array<i64: 128, 64>}]} {
    %c0 = arith.constant 0 : index
    %c0_0 = arith.constant 0 : index
    %0 = vector.load %arg1[%c0, %c0_0] : memref<128x3xf32, #tpu.memory_space<vmem>>, vector<128x3xf32>
    %1 = arith.truncf %0 : vector<128x3xf32> to vector<128x3xbf16>
    %c0_1 = arith.constant 0 : index
    %c0_2 = arith.constant 0 : index
    %2 = vector.load %arg2[%c0_1, %c0_2] : memref<3x64xbf16, #tpu.memory_space<vmem>>, vector<3x64xbf16>
    %cst = arith.constant dense<0.000000e+00> : vector<128x64xf32>
    %3 = tpu.matmul %1, %2, %cst {dimension_numbers = #tpu.dot_dimension_numbers<[1], [0], [0], [1], [0, 0, 1, 1], [], []>} : vector<128x3xbf16>, vector<3x64xbf16>, vector<128x64xf32> -> vector<128x64xf32>
    %c0_3 = arith.constant 0 : index
    %c0_4 = arith.constant 0 : index
    %4 = vector.load %arg3[%c0_3, %c0_4] : memref<1x64xf32, #tpu.memory_space<vmem>>, vector<1x64xf32>
    %5 = vector.broadcast %4 : vector<1x64xf32> to vector<128x64xf32>
    %6 = arith.mulf %3, %5 : vector<128x64xf32>
    %c0_5 = arith.constant 0 : index
    %c0_6 = arith.constant 0 : index
    %7 = vector.load %arg4[%c0_5, %c0_6] : memref<1x64xf32, #tpu.memory_space<vmem>>, vector<1x64xf32>
    %8 = vector.broadcast %7 : vector<1x64xf32> to vector<128x64xf32>
    %9 = arith.addf %6, %8 : vector<128x64xf32>
    %cst_7 = arith.constant 0.000000e+00 : f32
    %10 = vector.broadcast %cst_7 : f32 to vector<128x64xf32>
    %11 = arith.maximumf %9, %10 : vector<128x64xf32>
    %c0_8 = arith.constant 0 : index
    %c0_9 = arith.constant 0 : index
    %12 = vector.load %arg5[%c0_8, %c0_9] : memref<128x64xf32, #tpu.memory_space<vmem>>, vector<128x64xf32>
    tpu.vector_store %arg5[%c0_8, %c0_9], %11 {strides = array<i32>} : memref<128x64xf32, #tpu.memory_space<vmem>>, vector<128x64xf32>,
    return
  }
  func.func @transform_0(%arg0: i32) -> (i32, i32) {
    %c0_i32 = arith.constant 0 : i32
    %c0_i32_0 = arith.constant 0 : i32
    return %arg0, %c0_i32 : i32, i32
  }
  func.func @transform_1(%arg0: i32) -> (i32, i32) {
    %c0_i32 = arith.constant 0 : i32
    %c0_i32_0 = arith.constant 0 : i32
    %c0_i32_1 = arith.constant 0 : i32
    return %c0_i32, %c0_i32_0 : i32, i32
  }
  func.func @transform_2(%arg0: i32) -> (i32, i32) {
    %c0_i32 = arith.constant 0 : i32
    %c0_i32_0 = arith.constant 0 : i32
    %c0_i32_1 = arith.constant 0 : i32
    return %c0_i32, %c0_i32_0 : i32, i32
  }
  func.func @transform_3(%arg0: i32) -> (i32, i32) {
    %c0_i32 = arith.constant 0 : i32
    %c0_i32_0 = arith.constant 0 : i32
    %c0_i32_1 = arith.constant 0 : i32
    return %c0_i32, %c0_i32_0 : i32, i32
  }
  func.func @transform_4(%arg0: i32) -> (i32, i32) {
    %c0_i32 = arith.constant 0 : i32
    %c0_i32_0 = arith.constant 0 : i32
    return %arg0, %c0_i32 : i32, i32
  }
}

module attributes {stable_mosaic.version = 11 : i64} {
  func.func @_conv_bn_relu_kernel(%arg0: i32, %arg1: memref<128x192xf32, #tpu.memory_space<vmem>>, %arg2: memref<192x128xbf16, #tpu.memory_space<vmem>>, %arg3: memref<1x128xf32, #tpu.memory_space<vmem>>, %arg4: memref<1x128xf32, #tpu.memory_space<vmem>>, %arg5: memref<128x128xf32, #tpu.memory_space<vmem>>) attributes {dimension_semantics = [#tpu.dimension_semantics<parallel>], iteration_bounds = array<i64: 1>, scalar_prefetch = 0 : i64, scratch_operands = 0 : i64, tpu.core_type = #tpu.core_type<tc>, window_params = [{transform_indices = @transform_0, window_bounds = array<i64: 128, 192>}, {pipeline_mode = #tpu.pipeline_mode<synchronous>, transform_indices = @transform_1, window_bounds = array<i64: 192, 128>}, {pipeline_mode = #tpu.pipeline_mode<synchronous>, transform_indices = @transform_2, window_bounds = array<i64: 1, 128>}, {pipeline_mode = #tpu.pipeline_mode<synchronous>, transform_indices = @transform_3, window_bounds = array<i64: 1, 128>}, {transform_indices = @transform_4, window_bounds = array<i64: 128, 128>}]} {
    %c0 = arith.constant 0 : index
    %c0_0 = arith.constant 0 : index
    %0 = vector.load %arg1[%c0, %c0_0] : memref<128x192xf32, #tpu.memory_space<vmem>>, vector<128x192xf32>
    %1 = arith.truncf %0 : vector<128x192xf32> to vector<128x192xbf16>
    %c0_1 = arith.constant 0 : index
    %c0_2 = arith.constant 0 : index
    %2 = vector.load %arg2[%c0_1, %c0_2] : memref<192x128xbf16, #tpu.memory_space<vmem>>, vector<192x128xbf16>
    %cst = arith.constant dense<0.000000e+00> : vector<128x128xf32>
    %3 = tpu.matmul %1, %2, %cst {dimension_numbers = #tpu.dot_dimension_numbers<[1], [0], [0], [1], [0, 0, 1, 1], [], []>} : vector<128x192xbf16>, vector<192x128xbf16>, vector<128x128xf32> -> vector<128x128xf32>
    %c0_3 = arith.constant 0 : index
    %c0_4 = arith.constant 0 : index
    %4 = vector.load %arg3[%c0_3, %c0_4] : memref<1x128xf32, #tpu.memory_space<vmem>>, vector<1x128xf32>
    %5 = vector.broadcast %4 : vector<1x128xf32> to vector<128x128xf32>
    %6 = arith.mulf %3, %5 : vector<128x128xf32>
    %c0_5 = arith.constant 0 : index
    %c0_6 = arith.constant 0 : index
    %7 = vector.load %arg4[%c0_5, %c0_6] : memref<1x128xf32, #tpu.memory_space<vmem>>, vector<1x128xf32>
    %8 = vector.broadcast %7 : vector<1x128xf32> to vector<128x128xf32>
    %9 = arith.addf %6, %8 : vector<128x128xf32>
    %cst_7 = arith.constant 0.000000e+00 : f32
    %10 = vector.broadcast %cst_7 : f32 to vector<128x128xf32>
    %11 = arith.maximumf %9, %10 : vector<128x128xf32>
    %c0_8 = arith.constant 0 : index
    %c0_9 = arith.constant 0 : index
    %12 = vector.load %arg5[%c0_8, %c0_9] : memref<128x128xf32, #tpu.memory_space<vmem>>, vector<128x128xf32>
    tpu.vector_store %arg5[%c0_8, %c0_9], %11 {strides = array<i32>} : memref<128x128xf32, #tpu.memory_space<vmem>>, vector<128x128xf32>,
    return
  }
  func.func @transform_0(%arg0: i32) -> (i32, i32) {
    %c0_i32 = arith.constant 0 : i32
    %c0_i32_0 = arith.constant 0 : i32
    return %arg0, %c0_i32 : i32, i32
  }
  func.func @transform_1(%arg0: i32) -> (i32, i32) {
    %c0_i32 = arith.constant 0 : i32
    %c0_i32_0 = arith.constant 0 : i32
    %c0_i32_1 = arith.constant 0 : i32
    return %c0_i32, %c0_i32_0 : i32, i32
  }
  func.func @transform_2(%arg0: i32) -> (i32, i32) {
    %c0_i32 = arith.constant 0 : i32
    %c0_i32_0 = arith.constant 0 : i32
    %c0_i32_1 = arith.constant 0 : i32
    return %c0_i32, %c0_i32_0 : i32, i32
  }
  func.func @transform_3(%arg0: i32) -> (i32, i32) {
    %c0_i32 = arith.constant 0 : i32
    %c0_i32_0 = arith.constant 0 : i32
    %c0_i32_1 = arith.constant 0 : i32
    return %c0_i32, %c0_i32_0 : i32, i32
  }
  func.func @transform_4(%arg0: i32) -> (i32, i32) {
    %c0_i32 = arith.constant 0 : i32
    %c0_i32_0 = arith.constant 0 : i32
    return %arg0, %c0_i32 : i32, i32
  }
}

module attributes {stable_mosaic.version = 11 : i64} {
  func.func @_conv_bn_relu_kernel(%arg0: i32, %arg1: memref<64x384xf32, #tpu.memory_space<vmem>>, %arg2: memref<384x128xbf16, #tpu.memory_space<vmem>>, %arg3: memref<1x128xf32, #tpu.memory_space<vmem>>, %arg4: memref<1x128xf32, #tpu.memory_space<vmem>>, %arg5: memref<64x128xf32, #tpu.memory_space<vmem>>) attributes {dimension_semantics = [#tpu.dimension_semantics<parallel>], iteration_bounds = array<i64: 1>, scalar_prefetch = 0 : i64, scratch_operands = 0 : i64, tpu.core_type = #tpu.core_type<tc>, window_params = [{transform_indices = @transform_0, window_bounds = array<i64: 64, 384>}, {pipeline_mode = #tpu.pipeline_mode<synchronous>, transform_indices = @transform_1, window_bounds = array<i64: 384, 128>}, {pipeline_mode = #tpu.pipeline_mode<synchronous>, transform_indices = @transform_2, window_bounds = array<i64: 1, 128>}, {pipeline_mode = #tpu.pipeline_mode<synchronous>, transform_indices = @transform_3, window_bounds = array<i64: 1, 128>}, {transform_indices = @transform_4, window_bounds = array<i64: 64, 128>}]} {
    %c0 = arith.constant 0 : index
    %c0_0 = arith.constant 0 : index
    %0 = vector.load %arg1[%c0, %c0_0] : memref<64x384xf32, #tpu.memory_space<vmem>>, vector<64x384xf32>
    %1 = arith.truncf %0 : vector<64x384xf32> to vector<64x384xbf16>
    %c0_1 = arith.constant 0 : index
    %c0_2 = arith.constant 0 : index
    %2 = vector.load %arg2[%c0_1, %c0_2] : memref<384x128xbf16, #tpu.memory_space<vmem>>, vector<384x128xbf16>
    %cst = arith.constant dense<0.000000e+00> : vector<64x128xf32>
    %3 = tpu.matmul %1, %2, %cst {dimension_numbers = #tpu.dot_dimension_numbers<[1], [0], [0], [1], [0, 0, 1, 1], [], []>} : vector<64x384xbf16>, vector<384x128xbf16>, vector<64x128xf32> -> vector<64x128xf32>
    %c0_3 = arith.constant 0 : index
    %c0_4 = arith.constant 0 : index
    %4 = vector.load %arg3[%c0_3, %c0_4] : memref<1x128xf32, #tpu.memory_space<vmem>>, vector<1x128xf32>
    %5 = vector.broadcast %4 : vector<1x128xf32> to vector<64x128xf32>
    %6 = arith.mulf %3, %5 : vector<64x128xf32>
    %c0_5 = arith.constant 0 : index
    %c0_6 = arith.constant 0 : index
    %7 = vector.load %arg4[%c0_5, %c0_6] : memref<1x128xf32, #tpu.memory_space<vmem>>, vector<1x128xf32>
    %8 = vector.broadcast %7 : vector<1x128xf32> to vector<64x128xf32>
    %9 = arith.addf %6, %8 : vector<64x128xf32>
    %cst_7 = arith.constant 0.000000e+00 : f32
    %10 = vector.broadcast %cst_7 : f32 to vector<64x128xf32>
    %11 = arith.maximumf %9, %10 : vector<64x128xf32>
    %c0_8 = arith.constant 0 : index
    %c0_9 = arith.constant 0 : index
    %12 = vector.load %arg5[%c0_8, %c0_9] : memref<64x128xf32, #tpu.memory_space<vmem>>, vector<64x128xf32>
    tpu.vector_store %arg5[%c0_8, %c0_9], %11 {strides = array<i32>} : memref<64x128xf32, #tpu.memory_space<vmem>>, vector<64x128xf32>,
    return
  }
  func.func @transform_0(%arg0: i32) -> (i32, i32) {
    %c0_i32 = arith.constant 0 : i32
    %c0_i32_0 = arith.constant 0 : i32
    return %arg0, %c0_i32 : i32, i32
  }
  func.func @transform_1(%arg0: i32) -> (i32, i32) {
    %c0_i32 = arith.constant 0 : i32
    %c0_i32_0 = arith.constant 0 : i32
    %c0_i32_1 = arith.constant 0 : i32
    return %c0_i32, %c0_i32_0 : i32, i32
  }
  func.func @transform_2(%arg0: i32) -> (i32, i32) {
    %c0_i32 = arith.constant 0 : i32
    %c0_i32_0 = arith.constant 0 : i32
    %c0_i32_1 = arith.constant 0 : i32
    return %c0_i32, %c0_i32_0 : i32, i32
  }
  func.func @transform_3(%arg0: i32) -> (i32, i32) {
    %c0_i32 = arith.constant 0 : i32
    %c0_i32_0 = arith.constant 0 : i32
    %c0_i32_1 = arith.constant 0 : i32
    return %c0_i32, %c0_i32_0 : i32, i32
  }
  func.func @transform_4(%arg0: i32) -> (i32, i32) {
    %c0_i32 = arith.constant 0 : i32
    %c0_i32_0 = arith.constant 0 : i32
    return %arg0, %c0_i32 : i32, i32
  }
}

module attributes {stable_mosaic.version = 11 : i64} {
  func.func @_ln_qkv_kernel(%arg0: i32, %arg1: memref<32x128xf32, #tpu.memory_space<vmem>>, %arg2: memref<1x128xf32, #tpu.memory_space<vmem>>, %arg3: memref<1x128xf32, #tpu.memory_space<vmem>>, %arg4: memref<128x384xbf16, #tpu.memory_space<vmem>>, %arg5: memref<32x384xf32, #tpu.memory_space<vmem>>) attributes {dimension_semantics = [#tpu.dimension_semantics<parallel>], iteration_bounds = array<i64: 1>, scalar_prefetch = 0 : i64, scratch_operands = 0 : i64, tpu.core_type = #tpu.core_type<tc>, window_params = [{transform_indices = @transform_0, window_bounds = array<i64: 32, 128>}, {pipeline_mode = #tpu.pipeline_mode<synchronous>, transform_indices = @transform_1, window_bounds = array<i64: 1, 128>}, {pipeline_mode = #tpu.pipeline_mode<synchronous>, transform_indices = @transform_2, window_bounds = array<i64: 1, 128>}, {pipeline_mode = #tpu.pipeline_mode<synchronous>, transform_indices = @transform_3, window_bounds = array<i64: 128, 384>}, {transform_indices = @transform_4, window_bounds = array<i64: 32, 384>}]} {
    %c0 = arith.constant 0 : index
    %c0_0 = arith.constant 0 : index
    %0 = vector.load %arg1[%c0, %c0_0] : memref<32x128xf32, #tpu.memory_space<vmem>>, vector<32x128xf32>
    %cst = arith.constant dense<0.000000e+00> : vector<32xf32>
    %1 = vector.multi_reduction <add>, %0, %cst [1] : vector<32x128xf32> to vector<32xf32>
    %2 = vector.shape_cast %1 : vector<32xf32> to vector<32x1xf32>
    %cst_1 = arith.constant 1.280000e+02 : f32
    %3 = vector.broadcast %cst_1 : f32 to vector<32x1xf32>
    %4 = arith.divf %2, %3 : vector<32x1xf32>
    %5 = vector.broadcast %4 : vector<32x1xf32> to vector<32x128xf32>
    %6 = arith.subf %0, %5 : vector<32x128xf32>
    %7 = arith.mulf %6, %6 : vector<32x128xf32>
    %cst_2 = arith.constant dense<0.000000e+00> : vector<32xf32>
    %8 = vector.multi_reduction <add>, %7, %cst_2 [1] : vector<32x128xf32> to vector<32xf32>
    %9 = vector.shape_cast %8 : vector<32xf32> to vector<32x1xf32>
    %cst_3 = arith.constant 1.280000e+02 : f32
    %10 = vector.broadcast %cst_3 : f32 to vector<32x1xf32>
    %11 = arith.divf %9, %10 : vector<32x1xf32>
    %12 = vector.broadcast %4 : vector<32x1xf32> to vector<32x128xf32>
    %13 = arith.subf %0, %12 : vector<32x128xf32>
    %cst_4 = arith.constant 9.99999997E-7 : f32
    %14 = vector.broadcast %cst_4 : f32 to vector<32x1xf32>
    %15 = arith.addf %11, %14 : vector<32x1xf32>
    %16 = math.rsqrt %15 : vector<32x1xf32>
    %17 = vector.broadcast %16 : vector<32x1xf32> to vector<32x128xf32>
    %18 = arith.mulf %13, %17 : vector<32x128xf32>
    %c0_5 = arith.constant 0 : index
    %c0_6 = arith.constant 0 : index
    %19 = vector.load %arg2[%c0_5, %c0_6] : memref<1x128xf32, #tpu.memory_space<vmem>>, vector<1x128xf32>
    %20 = vector.broadcast %19 : vector<1x128xf32> to vector<32x128xf32>
    %21 = arith.mulf %18, %20 : vector<32x128xf32>
    %c0_7 = arith.constant 0 : index
    %c0_8 = arith.constant 0 : index
    %22 = vector.load %arg3[%c0_7, %c0_8] : memref<1x128xf32, #tpu.memory_space<vmem>>, vector<1x128xf32>
    %23 = vector.broadcast %22 : vector<1x128xf32> to vector<32x128xf32>
    %24 = arith.addf %21, %23 : vector<32x128xf32>
    %25 = arith.truncf %24 : vector<32x128xf32> to vector<32x128xbf16>
    %c0_9 = arith.constant 0 : index
    %c0_10 = arith.constant 0 : index
    %26 = vector.load %arg4[%c0_9, %c0_10] : memref<128x384xbf16, #tpu.memory_space<vmem>>, vector<128x384xbf16>
    %cst_11 = arith.constant dense<0.000000e+00> : vector<32x384xf32>
    %27 = tpu.matmul %25, %26, %cst_11 {dimension_numbers = #tpu.dot_dimension_numbers<[1], [0], [0], [1], [0, 0, 1, 1], [], []>} : vector<32x128xbf16>, vector<128x384xbf16>, vector<32x384xf32> -> vector<32x384xf32>
    %c0_12 = arith.constant 0 : index
    %c0_13 = arith.constant 0 : index
    %28 = vector.load %arg5[%c0_12, %c0_13] : memref<32x384xf32, #tpu.memory_space<vmem>>, vector<32x384xf32>
    tpu.vector_store %arg5[%c0_12, %c0_13], %27 {strides = array<i32>} : memref<32x384xf32, #tpu.memory_space<vmem>>, vector<32x384xf32>,
    return
  }
  func.func @transform_0(%arg0: i32) -> (i32, i32) {
    %c0_i32 = arith.constant 0 : i32
    %c0_i32_0 = arith.constant 0 : i32
    return %arg0, %c0_i32 : i32, i32
  }
  func.func @transform_1(%arg0: i32) -> (i32, i32) {
    %c0_i32 = arith.constant 0 : i32
    %c0_i32_0 = arith.constant 0 : i32
    %c0_i32_1 = arith.constant 0 : i32
    return %c0_i32, %c0_i32_0 : i32, i32
  }
  func.func @transform_2(%arg0: i32) -> (i32, i32) {
    %c0_i32 = arith.constant 0 : i32
    %c0_i32_0 = arith.constant 0 : i32
    %c0_i32_1 = arith.constant 0 : i32
    return %c0_i32, %c0_i32_0 : i32, i32
  }
  func.func @transform_3(%arg0: i32) -> (i32, i32) {
    %c0_i32 = arith.constant 0 : i32
    %c0_i32_0 = arith.constant 0 : i32
    %c0_i32_1 = arith.constant 0 : i32
    return %c0_i32, %c0_i32_0 : i32, i32
  }
  func.func @transform_4(%arg0: i32) -> (i32, i32) {
    %c0_i32 = arith.constant 0 : i32
    %c0_i32_0 = arith.constant 0 : i32
    return %arg0, %c0_i32 : i32, i32
  }
}

module attributes {stable_mosaic.version = 11 : i64} {
  func.func @_mha_kernel(%arg0: i32, %arg1: memref<1x16x384xf32, #tpu.memory_space<vmem>>, %arg2: memref<1x16x128xf32, #tpu.memory_space<vmem>>) attributes {dimension_semantics = [#tpu.dimension_semantics<parallel>], iteration_bounds = array<i64: 2>, scalar_prefetch = 0 : i64, scratch_operands = 0 : i64, tpu.core_type = #tpu.core_type<tc>, window_params = [{transform_indices = @transform_0, window_bounds = array<i64: 1, 16, 384>}, {transform_indices = @transform_1, window_bounds = array<i64: 1, 16, 128>}]} {
    %c0 = arith.constant 0 : index
    %c0_0 = arith.constant 0 : index
    %c0_1 = arith.constant 0 : index
    %0 = vector.load %arg1[%c0, %c0_0, %c0_1] : memref<1x16x384xf32, #tpu.memory_space<vmem>>, vector<1x16x384xf32>
    %1 = vector.shape_cast %0 : vector<1x16x384xf32> to vector<16x384xf32>
    %2 = vector.extract_strided_slice %1 {offsets = [0, 0], sizes = [16, 128], strides = [1, 1]} : vector<16x384xf32> to vector<16x128xf32>
    %3 = vector.extract_strided_slice %1 {offsets = [0, 128], sizes = [16, 128], strides = [1, 1]} : vector<16x384xf32> to vector<16x128xf32>
    %4 = vector.extract_strided_slice %1 {offsets = [0, 256], sizes = [16, 128], strides = [1, 1]} : vector<16x384xf32> to vector<16x128xf32>
    %5 = vector.extract_strided_slice %2 {offsets = [0, 0], sizes = [16, 32], strides = [1, 1]} : vector<16x128xf32> to vector<16x32xf32>
    %6 = arith.truncf %5 : vector<16x32xf32> to vector<16x32xbf16>
    %7 = vector.extract_strided_slice %3 {offsets = [0, 0], sizes = [16, 32], strides = [1, 1]} : vector<16x128xf32> to vector<16x32xf32>
    %8 = arith.truncf %7 : vector<16x32xf32> to vector<16x32xbf16>
    %9 = vector.extract_strided_slice %4 {offsets = [0, 0], sizes = [16, 32], strides = [1, 1]} : vector<16x128xf32> to vector<16x32xf32>
    %10 = arith.truncf %9 : vector<16x32xf32> to vector<16x32xbf16>
    %cst = arith.constant dense<0.000000e+00> : vector<16x16xf32>
    %11 = tpu.matmul %6, %8, %cst {dimension_numbers = #tpu.dot_dimension_numbers<[1], [1], [0], [0], [0, 0, 1, 0], [], []>} : vector<16x32xbf16>, vector<16x32xbf16>, vector<16x16xf32> -> vector<16x16xf32>
    %cst_2 = arith.constant 0.176776692 : f32
    %12 = vector.broadcast %cst_2 : f32 to vector<16x16xf32>
    %13 = arith.mulf %11, %12 : vector<16x16xf32>
    %cst_3 = arith.constant dense<0xFF800000> : vector<16xf32>
    %14 = vector.multi_reduction <maximumf>, %13, %cst_3 [1] : vector<16x16xf32> to vector<16xf32>
    %15 = vector.shape_cast %14 : vector<16xf32> to vector<16x1xf32>
    %16 = vector.broadcast %15 : vector<16x1xf32> to vector<16x16xf32>
    %17 = arith.subf %13, %16 : vector<16x16xf32>
    %18 = math.exp %17 : vector<16x16xf32>
    %cst_4 = arith.constant dense<0.000000e+00> : vector<16xf32>
    %19 = vector.multi_reduction <add>, %18, %cst_4 [1] : vector<16x16xf32> to vector<16xf32>
    %20 = vector.shape_cast %19 : vector<16xf32> to vector<16x1xf32>
    %21 = tpu.reciprocal %20 {approx = true} : vector<16x1xf32> -> vector<16x1xf32>
    %22 = vector.broadcast %21 : vector<16x1xf32> to vector<16x16xf32>
    %23 = arith.mulf %18, %22 : vector<16x16xf32>
    %24 = arith.truncf %23 : vector<16x16xf32> to vector<16x16xbf16>
    %cst_5 = arith.constant dense<0.000000e+00> : vector<16x32xf32>
    %25 = tpu.matmul %24, %10, %cst_5 {dimension_numbers = #tpu.dot_dimension_numbers<[1], [0], [0], [1], [0, 0, 1, 1], [], []>} : vector<16x16xbf16>, vector<16x32xbf16>, vector<16x32xf32> -> vector<16x32xf32>
    %26 = vector.extract_strided_slice %2 {offsets = [0, 32], sizes = [16, 32], strides = [1, 1]} : vector<16x128xf32> to vector<16x32xf32>
    %27 = arith.truncf %26 : vector<16x32xf32> to vector<16x32xbf16>
    %28 = vector.extract_strided_slice %3 {offsets = [0, 32], sizes = [16, 32], strides = [1, 1]} : vector<16x128xf32> to vector<16x32xf32>
    %29 = arith.truncf %28 : vector<16x32xf32> to vector<16x32xbf16>
    %30 = vector.extract_strided_slice %4 {offsets = [0, 32], sizes = [16, 32], strides = [1, 1]} : vector<16x128xf32> to vector<16x32xf32>
    %31 = arith.truncf %30 : vector<16x32xf32> to vector<16x32xbf16>
    %cst_6 = arith.constant dense<0.000000e+00> : vector<16x16xf32>
    %32 = tpu.matmul %27, %29, %cst_6 {dimension_numbers = #tpu.dot_dimension_numbers<[1], [1], [0], [0], [0, 0, 1, 0], [], []>} : vector<16x32xbf16>, vector<16x32xbf16>, vector<16x16xf32> -> vector<16x16xf32>
    %cst_7 = arith.constant 0.176776692 : f32
    %33 = vector.broadcast %cst_7 : f32 to vector<16x16xf32>
    %34 = arith.mulf %32, %33 : vector<16x16xf32>
    %cst_8 = arith.constant dense<0xFF800000> : vector<16xf32>
    %35 = vector.multi_reduction <maximumf>, %34, %cst_8 [1] : vector<16x16xf32> to vector<16xf32>
    %36 = vector.shape_cast %35 : vector<16xf32> to vector<16x1xf32>
    %37 = vector.broadcast %36 : vector<16x1xf32> to vector<16x16xf32>
    %38 = arith.subf %34, %37 : vector<16x16xf32>
    %39 = math.exp %38 : vector<16x16xf32>
    %cst_9 = arith.constant dense<0.000000e+00> : vector<16xf32>
    %40 = vector.multi_reduction <add>, %39, %cst_9 [1] : vector<16x16xf32> to vector<16xf32>
    %41 = vector.shape_cast %40 : vector<16xf32> to vector<16x1xf32>
    %42 = tpu.reciprocal %41 {approx = true} : vector<16x1xf32> -> vector<16x1xf32>
    %43 = vector.broadcast %42 : vector<16x1xf32> to vector<16x16xf32>
    %44 = arith.mulf %39, %43 : vector<16x16xf32>
    %45 = arith.truncf %44 : vector<16x16xf32> to vector<16x16xbf16>
    %cst_10 = arith.constant dense<0.000000e+00> : vector<16x32xf32>
    %46 = tpu.matmul %45, %31, %cst_10 {dimension_numbers = #tpu.dot_dimension_numbers<[1], [0], [0], [1], [0, 0, 1, 1], [], []>} : vector<16x16xbf16>, vector<16x32xbf16>, vector<16x32xf32> -> vector<16x32xf32>
    %47 = vector.extract_strided_slice %2 {offsets = [0, 64], sizes = [16, 32], strides = [1, 1]} : vector<16x128xf32> to vector<16x32xf32>
    %48 = arith.truncf %47 : vector<16x32xf32> to vector<16x32xbf16>
    %49 = vector.extract_strided_slice %3 {offsets = [0, 64], sizes = [16, 32], strides = [1, 1]} : vector<16x128xf32> to vector<16x32xf32>
    %50 = arith.truncf %49 : vector<16x32xf32> to vector<16x32xbf16>
    %51 = vector.extract_strided_slice %4 {offsets = [0, 64], sizes = [16, 32], strides = [1, 1]} : vector<16x128xf32> to vector<16x32xf32>
    %52 = arith.truncf %51 : vector<16x32xf32> to vector<16x32xbf16>
    %cst_11 = arith.constant dense<0.000000e+00> : vector<16x16xf32>
    %53 = tpu.matmul %48, %50, %cst_11 {dimension_numbers = #tpu.dot_dimension_numbers<[1], [1], [0], [0], [0, 0, 1, 0], [], []>} : vector<16x32xbf16>, vector<16x32xbf16>, vector<16x16xf32> -> vector<16x16xf32>
    %cst_12 = arith.constant 0.176776692 : f32
    %54 = vector.broadcast %cst_12 : f32 to vector<16x16xf32>
    %55 = arith.mulf %53, %54 : vector<16x16xf32>
    %cst_13 = arith.constant dense<0xFF800000> : vector<16xf32>
    %56 = vector.multi_reduction <maximumf>, %55, %cst_13 [1] : vector<16x16xf32> to vector<16xf32>
    %57 = vector.shape_cast %56 : vector<16xf32> to vector<16x1xf32>
    %58 = vector.broadcast %57 : vector<16x1xf32> to vector<16x16xf32>
    %59 = arith.subf %55, %58 : vector<16x16xf32>
    %60 = math.exp %59 : vector<16x16xf32>
    %cst_14 = arith.constant dense<0.000000e+00> : vector<16xf32>
    %61 = vector.multi_reduction <add>, %60, %cst_14 [1] : vector<16x16xf32> to vector<16xf32>
    %62 = vector.shape_cast %61 : vector<16xf32> to vector<16x1xf32>
    %63 = tpu.reciprocal %62 {approx = true} : vector<16x1xf32> -> vector<16x1xf32>
    %64 = vector.broadcast %63 : vector<16x1xf32> to vector<16x16xf32>
    %65 = arith.mulf %60, %64 : vector<16x16xf32>
    %66 = arith.truncf %65 : vector<16x16xf32> to vector<16x16xbf16>
    %cst_15 = arith.constant dense<0.000000e+00> : vector<16x32xf32>
    %67 = tpu.matmul %66, %52, %cst_15 {dimension_numbers = #tpu.dot_dimension_numbers<[1], [0], [0], [1], [0, 0, 1, 1], [], []>} : vector<16x16xbf16>, vector<16x32xbf16>, vector<16x32xf32> -> vector<16x32xf32>
    %68 = vector.extract_strided_slice %2 {offsets = [0, 96], sizes = [16, 32], strides = [1, 1]} : vector<16x128xf32> to vector<16x32xf32>
    %69 = arith.truncf %68 : vector<16x32xf32> to vector<16x32xbf16>
    %70 = vector.extract_strided_slice %3 {offsets = [0, 96], sizes = [16, 32], strides = [1, 1]} : vector<16x128xf32> to vector<16x32xf32>
    %71 = arith.truncf %70 : vector<16x32xf32> to vector<16x32xbf16>
    %72 = vector.extract_strided_slice %4 {offsets = [0, 96], sizes = [16, 32], strides = [1, 1]} : vector<16x128xf32> to vector<16x32xf32>
    %73 = arith.truncf %72 : vector<16x32xf32> to vector<16x32xbf16>
    %cst_16 = arith.constant dense<0.000000e+00> : vector<16x16xf32>
    %74 = tpu.matmul %69, %71, %cst_16 {dimension_numbers = #tpu.dot_dimension_numbers<[1], [1], [0], [0], [0, 0, 1, 0], [], []>} : vector<16x32xbf16>, vector<16x32xbf16>, vector<16x16xf32> -> vector<16x16xf32>
    %cst_17 = arith.constant 0.176776692 : f32
    %75 = vector.broadcast %cst_17 : f32 to vector<16x16xf32>
    %76 = arith.mulf %74, %75 : vector<16x16xf32>
    %cst_18 = arith.constant dense<0xFF800000> : vector<16xf32>
    %77 = vector.multi_reduction <maximumf>, %76, %cst_18 [1] : vector<16x16xf32> to vector<16xf32>
    %78 = vector.shape_cast %77 : vector<16xf32> to vector<16x1xf32>
    %79 = vector.broadcast %78 : vector<16x1xf32> to vector<16x16xf32>
    %80 = arith.subf %76, %79 : vector<16x16xf32>
    %81 = math.exp %80 : vector<16x16xf32>
    %cst_19 = arith.constant dense<0.000000e+00> : vector<16xf32>
    %82 = vector.multi_reduction <add>, %81, %cst_19 [1] : vector<16x16xf32> to vector<16xf32>
    %83 = vector.shape_cast %82 : vector<16xf32> to vector<16x1xf32>
    %84 = tpu.reciprocal %83 {approx = true} : vector<16x1xf32> -> vector<16x1xf32>
    %85 = vector.broadcast %84 : vector<16x1xf32> to vector<16x16xf32>
    %86 = arith.mulf %81, %85 : vector<16x16xf32>
    %87 = arith.truncf %86 : vector<16x16xf32> to vector<16x16xbf16>
    %cst_20 = arith.constant dense<0.000000e+00> : vector<16x32xf32>
    %88 = tpu.matmul %87, %73, %cst_20 {dimension_numbers = #tpu.dot_dimension_numbers<[1], [0], [0], [1], [0, 0, 1, 1], [], []>} : vector<16x16xbf16>, vector<16x32xbf16>, vector<16x32xf32> -> vector<16x32xf32>
    %89 = tpu.concatenate %25, %46, %67, %88 in 1 : vector<16x32xf32>, vector<16x32xf32>, vector<16x32xf32>, vector<16x32xf32> -> vector<16x128xf32>
    %c0_21 = arith.constant 0 : index
    %c0_22 = arith.constant 0 : index
    %c0_23 = arith.constant 0 : index
    %90 = vector.load %arg2[%c0_21, %c0_22, %c0_23] : memref<1x16x128xf32, #tpu.memory_space<vmem>>, vector<1x16x128xf32>
    %91 = vector.shape_cast %90 : vector<1x16x128xf32> to vector<16x128xf32>
    %92 = vector.shape_cast %89 : vector<16x128xf32> to vector<1x16x128xf32>
    tpu.vector_store %arg2[%c0_21, %c0_22, %c0_23], %92 {strides = array<i32>} : memref<1x16x128xf32, #tpu.memory_space<vmem>>, vector<1x16x128xf32>,
    return
  }
  func.func @transform_0(%arg0: i32) -> (i32, i32, i32) {
    %c0_i32 = arith.constant 0 : i32
    %c0_i32_0 = arith.constant 0 : i32
    %c0_i32_1 = arith.constant 0 : i32
    return %arg0, %c0_i32, %c0_i32_0 : i32, i32, i32
  }
  func.func @transform_1(%arg0: i32) -> (i32, i32, i32) {
    %c0_i32 = arith.constant 0 : i32
    %c0_i32_0 = arith.constant 0 : i32
    %c0_i32_1 = arith.constant 0 : i32
    return %arg0, %c0_i32, %c0_i32_0 : i32, i32, i32
  }
}

module attributes {stable_mosaic.version = 11 : i64} {
  func.func @_proj_res_kernel(%arg0: i32, %arg1: memref<32x128xf32, #tpu.memory_space<vmem>>, %arg2: memref<128x128xbf16, #tpu.memory_space<vmem>>, %arg3: memref<32x128xf32, #tpu.memory_space<vmem>>, %arg4: memref<32x128xf32, #tpu.memory_space<vmem>>) attributes {dimension_semantics = [#tpu.dimension_semantics<parallel>], iteration_bounds = array<i64: 1>, scalar_prefetch = 0 : i64, scratch_operands = 0 : i64, tpu.core_type = #tpu.core_type<tc>, window_params = [{transform_indices = @transform_0, window_bounds = array<i64: 32, 128>}, {pipeline_mode = #tpu.pipeline_mode<synchronous>, transform_indices = @transform_1, window_bounds = array<i64: 128, 128>}, {transform_indices = @transform_2, window_bounds = array<i64: 32, 128>}, {transform_indices = @transform_3, window_bounds = array<i64: 32, 128>}]} {
    %c0 = arith.constant 0 : index
    %c0_0 = arith.constant 0 : index
    %0 = vector.load %arg1[%c0, %c0_0] : memref<32x128xf32, #tpu.memory_space<vmem>>, vector<32x128xf32>
    %1 = arith.truncf %0 : vector<32x128xf32> to vector<32x128xbf16>
    %c0_1 = arith.constant 0 : index
    %c0_2 = arith.constant 0 : index
    %2 = vector.load %arg2[%c0_1, %c0_2] : memref<128x128xbf16, #tpu.memory_space<vmem>>, vector<128x128xbf16>
    %cst = arith.constant dense<0.000000e+00> : vector<32x128xf32>
    %3 = tpu.matmul %1, %2, %cst {dimension_numbers = #tpu.dot_dimension_numbers<[1], [0], [0], [1], [0, 0, 1, 1], [], []>} : vector<32x128xbf16>, vector<128x128xbf16>, vector<32x128xf32> -> vector<32x128xf32>
    %c0_3 = arith.constant 0 : index
    %c0_4 = arith.constant 0 : index
    %4 = vector.load %arg3[%c0_3, %c0_4] : memref<32x128xf32, #tpu.memory_space<vmem>>, vector<32x128xf32>
    %5 = arith.addf %3, %4 : vector<32x128xf32>
    %c0_5 = arith.constant 0 : index
    %c0_6 = arith.constant 0 : index
    %6 = vector.load %arg4[%c0_5, %c0_6] : memref<32x128xf32, #tpu.memory_space<vmem>>, vector<32x128xf32>
    tpu.vector_store %arg4[%c0_5, %c0_6], %5 {strides = array<i32>} : memref<32x128xf32, #tpu.memory_space<vmem>>, vector<32x128xf32>,
    return
  }
  func.func @transform_0(%arg0: i32) -> (i32, i32) {
    %c0_i32 = arith.constant 0 : i32
    %c0_i32_0 = arith.constant 0 : i32
    return %arg0, %c0_i32 : i32, i32
  }
  func.func @transform_1(%arg0: i32) -> (i32, i32) {
    %c0_i32 = arith.constant 0 : i32
    %c0_i32_0 = arith.constant 0 : i32
    %c0_i32_1 = arith.constant 0 : i32
    return %c0_i32, %c0_i32_0 : i32, i32
  }
  func.func @transform_2(%arg0: i32) -> (i32, i32) {
    %c0_i32 = arith.constant 0 : i32
    %c0_i32_0 = arith.constant 0 : i32
    return %arg0, %c0_i32 : i32, i32
  }
  func.func @transform_3(%arg0: i32) -> (i32, i32) {
    %c0_i32 = arith.constant 0 : i32
    %c0_i32_0 = arith.constant 0 : i32
    return %arg0, %c0_i32 : i32, i32
  }
}

module attributes {stable_mosaic.version = 11 : i64} {
  func.func @_ffn_kernel(%arg0: i32, %arg1: memref<32x128xf32, #tpu.memory_space<vmem>>, %arg2: memref<1x128xf32, #tpu.memory_space<vmem>>, %arg3: memref<1x128xf32, #tpu.memory_space<vmem>>, %arg4: memref<128x256xbf16, #tpu.memory_space<vmem>>, %arg5: memref<1x256xf32, #tpu.memory_space<vmem>>, %arg6: memref<256x128xbf16, #tpu.memory_space<vmem>>, %arg7: memref<1x128xf32, #tpu.memory_space<vmem>>, %arg8: memref<32x128xf32, #tpu.memory_space<vmem>>) attributes {dimension_semantics = [#tpu.dimension_semantics<parallel>], iteration_bounds = array<i64: 1>, scalar_prefetch = 0 : i64, scratch_operands = 0 : i64, tpu.core_type = #tpu.core_type<tc>, window_params = [{transform_indices = @transform_0, window_bounds = array<i64: 32, 128>}, {pipeline_mode = #tpu.pipeline_mode<synchronous>, transform_indices = @transform_1, window_bounds = array<i64: 1, 128>}, {pipeline_mode = #tpu.pipeline_mode<synchronous>, transform_indices = @transform_2, window_bounds = array<i64: 1, 128>}, {pipeline_mode = #tpu.pipeline_mode<synchronous>, transform_indices = @transform_3, window_bounds = array<i64: 128, 256>}, {pipeline_mode = #tpu.pipeline_mode<synchronous>, transform_indices = @transform_4, window_bounds = array<i64: 1, 256>}, {pipeline_mode = #tpu.pipeline_mode<synchronous>, transform_indices = @transform_5, window_bounds = array<i64: 256, 128>}, {pipeline_mode = #tpu.pipeline_mode<synchronous>, transform_indices = @transform_6, window_bounds = array<i64: 1, 128>}, {transform_indices = @transform_7, window_bounds = array<i64: 32, 128>}]} {
    %c0 = arith.constant 0 : index
    %c0_0 = arith.constant 0 : index
    %0 = vector.load %arg1[%c0, %c0_0] : memref<32x128xf32, #tpu.memory_space<vmem>>, vector<32x128xf32>
    %cst = arith.constant dense<0.000000e+00> : vector<32xf32>
    %1 = vector.multi_reduction <add>, %0, %cst [1] : vector<32x128xf32> to vector<32xf32>
    %2 = vector.shape_cast %1 : vector<32xf32> to vector<32x1xf32>
    %cst_1 = arith.constant 1.280000e+02 : f32
    %3 = vector.broadcast %cst_1 : f32 to vector<32x1xf32>
    %4 = arith.divf %2, %3 : vector<32x1xf32>
    %5 = vector.broadcast %4 : vector<32x1xf32> to vector<32x128xf32>
    %6 = arith.subf %0, %5 : vector<32x128xf32>
    %7 = arith.mulf %6, %6 : vector<32x128xf32>
    %cst_2 = arith.constant dense<0.000000e+00> : vector<32xf32>
    %8 = vector.multi_reduction <add>, %7, %cst_2 [1] : vector<32x128xf32> to vector<32xf32>
    %9 = vector.shape_cast %8 : vector<32xf32> to vector<32x1xf32>
    %cst_3 = arith.constant 1.280000e+02 : f32
    %10 = vector.broadcast %cst_3 : f32 to vector<32x1xf32>
    %11 = arith.divf %9, %10 : vector<32x1xf32>
    %12 = vector.broadcast %4 : vector<32x1xf32> to vector<32x128xf32>
    %13 = arith.subf %0, %12 : vector<32x128xf32>
    %cst_4 = arith.constant 9.99999997E-7 : f32
    %14 = vector.broadcast %cst_4 : f32 to vector<32x1xf32>
    %15 = arith.addf %11, %14 : vector<32x1xf32>
    %16 = math.rsqrt %15 : vector<32x1xf32>
    %17 = vector.broadcast %16 : vector<32x1xf32> to vector<32x128xf32>
    %18 = arith.mulf %13, %17 : vector<32x128xf32>
    %c0_5 = arith.constant 0 : index
    %c0_6 = arith.constant 0 : index
    %19 = vector.load %arg2[%c0_5, %c0_6] : memref<1x128xf32, #tpu.memory_space<vmem>>, vector<1x128xf32>
    %20 = vector.broadcast %19 : vector<1x128xf32> to vector<32x128xf32>
    %21 = arith.mulf %18, %20 : vector<32x128xf32>
    %c0_7 = arith.constant 0 : index
    %c0_8 = arith.constant 0 : index
    %22 = vector.load %arg3[%c0_7, %c0_8] : memref<1x128xf32, #tpu.memory_space<vmem>>, vector<1x128xf32>
    %23 = vector.broadcast %22 : vector<1x128xf32> to vector<32x128xf32>
    %24 = arith.addf %21, %23 : vector<32x128xf32>
    %25 = arith.truncf %24 : vector<32x128xf32> to vector<32x128xbf16>
    %c0_9 = arith.constant 0 : index
    %c0_10 = arith.constant 0 : index
    %26 = vector.load %arg4[%c0_9, %c0_10] : memref<128x256xbf16, #tpu.memory_space<vmem>>, vector<128x256xbf16>
    %cst_11 = arith.constant dense<0.000000e+00> : vector<32x256xf32>
    %27 = tpu.matmul %25, %26, %cst_11 {dimension_numbers = #tpu.dot_dimension_numbers<[1], [0], [0], [1], [0, 0, 1, 1], [], []>} : vector<32x128xbf16>, vector<128x256xbf16>, vector<32x256xf32> -> vector<32x256xf32>
    %c0_12 = arith.constant 0 : index
    %c0_13 = arith.constant 0 : index
    %28 = vector.load %arg5[%c0_12, %c0_13] : memref<1x256xf32, #tpu.memory_space<vmem>>, vector<1x256xf32>
    %29 = vector.broadcast %28 : vector<1x256xf32> to vector<32x256xf32>
    %30 = arith.addf %27, %29 : vector<32x256xf32>
    %cst_14 = arith.constant 0.000000e+00 : f32
    %31 = vector.broadcast %cst_14 : f32 to vector<32x256xf32>
    %32 = arith.maximumf %30, %31 : vector<32x256xf32>
    %33 = arith.truncf %32 : vector<32x256xf32> to vector<32x256xbf16>
    %c0_15 = arith.constant 0 : index
    %c0_16 = arith.constant 0 : index
    %34 = vector.load %arg6[%c0_15, %c0_16] : memref<256x128xbf16, #tpu.memory_space<vmem>>, vector<256x128xbf16>
    %cst_17 = arith.constant dense<0.000000e+00> : vector<32x128xf32>
    %35 = tpu.matmul %33, %34, %cst_17 {dimension_numbers = #tpu.dot_dimension_numbers<[1], [0], [0], [1], [0, 0, 1, 1], [], []>} : vector<32x256xbf16>, vector<256x128xbf16>, vector<32x128xf32> -> vector<32x128xf32>
    %c0_18 = arith.constant 0 : index
    %c0_19 = arith.constant 0 : index
    %36 = vector.load %arg7[%c0_18, %c0_19] : memref<1x128xf32, #tpu.memory_space<vmem>>, vector<1x128xf32>
    %37 = vector.broadcast %36 : vector<1x128xf32> to vector<32x128xf32>
    %38 = arith.addf %35, %37 : vector<32x128xf32>
    %39 = arith.addf %38, %0 : vector<32x128xf32>
    %c0_20 = arith.constant 0 : index
    %c0_21 = arith.constant 0 : index
    %40 = vector.load %arg8[%c0_20, %c0_21] : memref<32x128xf32, #tpu.memory_space<vmem>>, vector<32x128xf32>
    tpu.vector_store %arg8[%c0_20, %c0_21], %39 {strides = array<i32>} : memref<32x128xf32, #tpu.memory_space<vmem>>, vector<32x128xf32>,
    return
  }
  func.func @transform_0(%arg0: i32) -> (i32, i32) {
    %c0_i32 = arith.constant 0 : i32
    %c0_i32_0 = arith.constant 0 : i32
    return %arg0, %c0_i32 : i32, i32
  }
  func.func @transform_1(%arg0: i32) -> (i32, i32) {
    %c0_i32 = arith.constant 0 : i32
    %c0_i32_0 = arith.constant 0 : i32
    %c0_i32_1 = arith.constant 0 : i32
    return %c0_i32, %c0_i32_0 : i32, i32
  }
  func.func @transform_2(%arg0: i32) -> (i32, i32) {
    %c0_i32 = arith.constant 0 : i32
    %c0_i32_0 = arith.constant 0 : i32
    %c0_i32_1 = arith.constant 0 : i32
    return %c0_i32, %c0_i32_0 : i32, i32
  }
  func.func @transform_3(%arg0: i32) -> (i32, i32) {
    %c0_i32 = arith.constant 0 : i32
    %c0_i32_0 = arith.constant 0 : i32
    %c0_i32_1 = arith.constant 0 : i32
    return %c0_i32, %c0_i32_0 : i32, i32
  }
  func.func @transform_4(%arg0: i32) -> (i32, i32) {
    %c0_i32 = arith.constant 0 : i32
    %c0_i32_0 = arith.constant 0 : i32
    %c0_i32_1 = arith.constant 0 : i32
    return %c0_i32, %c0_i32_0 : i32, i32
  }
  func.func @transform_5(%arg0: i32) -> (i32, i32) {
    %c0_i32 = arith.constant 0 : i32
    %c0_i32_0 = arith.constant 0 : i32
    %c0_i32_1 = arith.constant 0 : i32
    return %c0_i32, %c0_i32_0 : i32, i32
  }
  func.func @transform_6(%arg0: i32) -> (i32, i32) {
    %c0_i32 = arith.constant 0 : i32
    %c0_i32_0 = arith.constant 0 : i32
    %c0_i32_1 = arith.constant 0 : i32
    return %c0_i32, %c0_i32_0 : i32, i32
  }
  func.func @transform_7(%arg0: i32) -> (i32, i32) {
    %c0_i32 = arith.constant 0 : i32
    %c0_i32_0 = arith.constant 0 : i32
    return %arg0, %c0_i32 : i32, i32
  }
}

module attributes {stable_mosaic.version = 11 : i64} {
  func.func @_layernorm_kernel(%arg0: i32, %arg1: memref<32x128xf32, #tpu.memory_space<vmem>>, %arg2: memref<1x128xf32, #tpu.memory_space<vmem>>, %arg3: memref<1x128xf32, #tpu.memory_space<vmem>>, %arg4: memref<32x128xf32, #tpu.memory_space<vmem>>) attributes {dimension_semantics = [#tpu.dimension_semantics<parallel>], iteration_bounds = array<i64: 1>, scalar_prefetch = 0 : i64, scratch_operands = 0 : i64, tpu.core_type = #tpu.core_type<tc>, window_params = [{transform_indices = @transform_0, window_bounds = array<i64: 32, 128>}, {pipeline_mode = #tpu.pipeline_mode<synchronous>, transform_indices = @transform_1, window_bounds = array<i64: 1, 128>}, {pipeline_mode = #tpu.pipeline_mode<synchronous>, transform_indices = @transform_2, window_bounds = array<i64: 1, 128>}, {transform_indices = @transform_3, window_bounds = array<i64: 32, 128>}]} {
    %c0 = arith.constant 0 : index
    %c0_0 = arith.constant 0 : index
    %0 = vector.load %arg1[%c0, %c0_0] : memref<32x128xf32, #tpu.memory_space<vmem>>, vector<32x128xf32>
    %cst = arith.constant dense<0.000000e+00> : vector<32xf32>
    %1 = vector.multi_reduction <add>, %0, %cst [1] : vector<32x128xf32> to vector<32xf32>
    %2 = vector.shape_cast %1 : vector<32xf32> to vector<32x1xf32>
    %cst_1 = arith.constant 1.280000e+02 : f32
    %3 = vector.broadcast %cst_1 : f32 to vector<32x1xf32>
    %4 = arith.divf %2, %3 : vector<32x1xf32>
    %5 = vector.broadcast %4 : vector<32x1xf32> to vector<32x128xf32>
    %6 = arith.subf %0, %5 : vector<32x128xf32>
    %7 = arith.mulf %6, %6 : vector<32x128xf32>
    %cst_2 = arith.constant dense<0.000000e+00> : vector<32xf32>
    %8 = vector.multi_reduction <add>, %7, %cst_2 [1] : vector<32x128xf32> to vector<32xf32>
    %9 = vector.shape_cast %8 : vector<32xf32> to vector<32x1xf32>
    %cst_3 = arith.constant 1.280000e+02 : f32
    %10 = vector.broadcast %cst_3 : f32 to vector<32x1xf32>
    %11 = arith.divf %9, %10 : vector<32x1xf32>
    %12 = vector.broadcast %4 : vector<32x1xf32> to vector<32x128xf32>
    %13 = arith.subf %0, %12 : vector<32x128xf32>
    %cst_4 = arith.constant 9.99999997E-7 : f32
    %14 = vector.broadcast %cst_4 : f32 to vector<32x1xf32>
    %15 = arith.addf %11, %14 : vector<32x1xf32>
    %16 = math.rsqrt %15 : vector<32x1xf32>
    %17 = vector.broadcast %16 : vector<32x1xf32> to vector<32x128xf32>
    %18 = arith.mulf %13, %17 : vector<32x128xf32>
    %c0_5 = arith.constant 0 : index
    %c0_6 = arith.constant 0 : index
    %19 = vector.load %arg2[%c0_5, %c0_6] : memref<1x128xf32, #tpu.memory_space<vmem>>, vector<1x128xf32>
    %20 = vector.broadcast %19 : vector<1x128xf32> to vector<32x128xf32>
    %21 = arith.mulf %18, %20 : vector<32x128xf32>
    %c0_7 = arith.constant 0 : index
    %c0_8 = arith.constant 0 : index
    %22 = vector.load %arg3[%c0_7, %c0_8] : memref<1x128xf32, #tpu.memory_space<vmem>>, vector<1x128xf32>
    %23 = vector.broadcast %22 : vector<1x128xf32> to vector<32x128xf32>
    %24 = arith.addf %21, %23 : vector<32x128xf32>
    %c0_9 = arith.constant 0 : index
    %c0_10 = arith.constant 0 : index
    %25 = vector.load %arg4[%c0_9, %c0_10] : memref<32x128xf32, #tpu.memory_space<vmem>>, vector<32x128xf32>
    tpu.vector_store %arg4[%c0_9, %c0_10], %24 {strides = array<i32>} : memref<32x128xf32, #tpu.memory_space<vmem>>, vector<32x128xf32>,
    return
  }
  func.func @transform_0(%arg0: i32) -> (i32, i32) {
    %c0_i32 = arith.constant 0 : i32
    %c0_i32_0 = arith.constant 0 : i32
    return %arg0, %c0_i32 : i32, i32
  }
  func.func @transform_1(%arg0: i32) -> (i32, i32) {
    %c0_i32 = arith.constant 0 : i32
    %c0_i32_0 = arith.constant 0 : i32
    %c0_i32_1 = arith.constant 0 : i32
    return %c0_i32, %c0_i32_0 : i32, i32
  }
  func.func @transform_2(%arg0: i32) -> (i32, i32) {
    %c0_i32 = arith.constant 0 : i32
    %c0_i32_0 = arith.constant 0 : i32
    %c0_i32_1 = arith.constant 0 : i32
    return %c0_i32, %c0_i32_0 : i32, i32
  }
  func.func @transform_3(%arg0: i32) -> (i32, i32) {
    %c0_i32 = arith.constant 0 : i32
    %c0_i32_0 = arith.constant 0 : i32
    return %arg0, %c0_i32 : i32, i32
  }
}

</mosaic_0001>

<llo_original>
// kernel: encoder_forward.12
$region0: #{encoder_forward.12}
  #allocation0 [shape = 'u32[]', space=smem, size = 0x4, offset = 0x4, fixed_abs, tag = 'smem constant byte address 0x4 - core index']
  #allocation1 [shape = 'u32[144,128]{1,0:T(1,128)}', space=vmem, size = 0x12000, scoped, tag = 'internal scratch']
  %s0 = inlined_call_operand.vmem [shape: f32[256,3], index: 0, kind: input, shape index: {}]
  %s1 = inlined_call_operand.vmem [shape: bf16[3,64], index: 1, kind: input, shape index: {}]
  %s2 = inlined_call_operand.vmem [shape: f32[1,64], index: 2, kind: input, shape index: {}]
  %s3 = inlined_call_operand.vmem [shape: f32[1,64], index: 3, kind: input, shape index: {}]
  %s4 = inlined_call_operand.vmem [shape: f32[256,64], index: 4, kind: output, shape index: {}]
  %s5 = sld [smem:[#allocation0]]
  $region49: #{encoder_forward.12} parent=0
    _
  %s7 = ssub.s32 1, %s5
  %s8 = scalar_select 0, %s7, %s5
  loop: start=0, step=1, limit=4
  $region2: #{encoder_forward.12} parent=0 // loop_pre_header
    _
  $region3: #{encoder_forward.12} parent=0 // loop_header
    %s10 = sphi 0, %s14
    %p11 = scmp.ge.s32.totalorder %s10, 4
    %s20 = sphi 0, %s22
    %s23 = sphi 0, %s20
    %s24 = sphi 0, %s23
    %s40 = sphi 0, %s24
    %s44 = sphi 0, %s44
    %s46 = sphi 0, %s44
    %s47 = sphi 0, %s46
    %s61 = sphi 0, %s47
    %s65 = sphi 0, %s65
    %s67 = sphi 0, %s65
    %s68 = sphi 0, %s67
    %s82 = sphi 0, %s68
    %s86 = sphi 0, %s86
    %s88 = sphi 0, %s86
    %s89 = sphi 0, %s88
    %s103 = sphi 0, %s89
    %s109 = sphi 0, %s111
    %s112 = sphi 0, %s109
    %s113 = sphi 0, %s112
    %s129 = sphi 0, %s113
  $region4: #{encoder_forward.12} parent=0 // loop_header_branch
    %13 = sbr.rel (%p11) target = $region8
  $region5: #{encoder_forward.12} parent=0 // loop_body
    %s15 = ssub.s32 %s10, 1
    %s16 = ssub.s32 %s10, 2
    %s17 = sadd.s32 %s10, 1
    %s18 = ssub.s32 %s10, %s17
    %p19 = scmp.eq.s32.totalorder %s18, 0
    %s21 = sadd.s32 %s20, 1
    %s22 = scalar_select %p19, %s20, %s21
    %p25 = pneg %p19
    %p26 = scmp.eq.s32.totalorder %s10, 1
    %p27 = por %p25, %p26
    %p28 = scmp.ne.s32.totalorder %s20, %s23
    %p29 = scmp.eq.s32.totalorder %s10, 0
    %p30 = por %p28, %p29
    %p31 = scmp.ne.s32.totalorder %s20, %s23
    %p32 = scmp.eq.s32.totalorder %s15, 1
    %p33 = por %p31, %p32
    %p34 = scmp.ne.s32.totalorder %s23, %s24
    %p35 = scmp.eq.s32.totalorder %s15, 0
    %p36 = por %p34, %p35
    %p37 = scmp.ne.s32.totalorder %s23, %s24
    %p38 = scmp.eq.s32.totalorder %s16, 1
    %p39 = por %p37, %p38
    %p41 = scmp.ne.s32.totalorder %s24, %s40
    %p42 = scmp.eq.s32.totalorder %s16, 0
    %p43 = por %p41, %p42
    %s45 = sadd.s32 %s44, 1
    %p48 = scmp.eq.s32.totalorder %s10, 1
    %p49 = scmp.ne.s32.totalorder %s44, %s46
    %p50 = scmp.eq.s32.totalorder %s10, 0
    %p51 = por %p49, %p50
    %p52 = scmp.ne.s32.totalorder %s44, %s46
    %p53 = scmp.eq.s32.totalorder %s15, 1
    %p54 = por %p52, %p53
    %p55 = scmp.ne.s32.totalorder %s46, %s47
    %p56 = scmp.eq.s32.totalorder %s15, 0
    %p57 = por %p55, %p56
    %p58 = scmp.ne.s32.totalorder %s46, %s47
    %p59 = scmp.eq.s32.totalorder %s16, 1
    %p60 = por %p58, %p59
    %p62 = scmp.ne.s32.totalorder %s47, %s61
    %p63 = scmp.eq.s32.totalorder %s16, 0
    %p64 = por %p62, %p63
    %s66 = sadd.s32 %s65, 1
    %p69 = scmp.eq.s32.totalorder %s10, 1
    %p70 = scmp.ne.s32.totalorder %s65, %s67
    %p71 = scmp.eq.s32.totalorder %s10, 0
    %p72 = por %p70, %p71
    %p73 = scmp.ne.s32.totalorder %s65, %s67
    %p74 = scmp.eq.s32.totalorder %s15, 1
    %p75 = por %p73, %p74
    %p76 = scmp.ne.s32.totalorder %s67, %s68
    %p77 = scmp.eq.s32.totalorder %s15, 0
    %p78 = por %p76, %p77
    %p79 = scmp.ne.s32.totalorder %s67, %s68
    %p80 = scmp.eq.s32.totalorder %s16, 1
    %p81 = por %p79, %p80
    %p83 = scmp.ne.s32.totalorder %s68, %s82
    %p84 = scmp.eq.s32.totalorder %s16, 0
    %p85 = por %p83, %p84
    %s87 = sadd.s32 %s86, 1
    %p90 = scmp.eq.s32.totalorder %s10, 1
    %p91 = scmp.ne.s32.totalorder %s86, %s88
    %p92 = scmp.eq.s32.totalorder %s10, 0
    %p93 = por %p91, %p92
    %p94 = scmp.ne.s32.totalorder %s86, %s88
    %p95 = scmp.eq.s32.totalorder %s15, 1
    %p96 = por %p94, %p95
    %p97 = scmp.ne.s32.totalorder %s88, %s89
    %p98 = scmp.eq.s32.totalorder %s15, 0
    %p99 = por %p97, %p98
    %p100 = scmp.ne.s32.totalorder %s88, %s89
    %p101 = scmp.eq.s32.totalorder %s16, 1
    %p102 = por %p100, %p101
    %p104 = scmp.ne.s32.totalorder %s89, %s103
    %p105 = scmp.eq.s32.totalorder %s16, 0
    %p106 = por %p104, %p105
    %s107 = ssub.s32 %s10, %s17
    %p108 = scmp.eq.s32.totalorder %s107, 0
    %s110 = sadd.s32 %s109, 1
    %s111 = scalar_select %p108, %s109, %s110
    %p114 = pneg %p108
    %p115 = scmp.eq.s32.totalorder %s10, 1
    %p116 = por %p114, %p115
    %p117 = scmp.ne.s32.totalorder %s109, %s112
    %p118 = scmp.eq.s32.totalorder %s10, 0
    %p119 = por %p117, %p118
    %p120 = scmp.ne.s32.totalorder %s109, %s112
    %p121 = scmp.eq.s32.totalorder %s15, 1
    %p122 = por %p120, %p121
    %p123 = scmp.ne.s32.totalorder %s112, %s113
    %p124 = scmp.eq.s32.totalorder %s15, 0
    %p125 = por %p123, %p124
    %p126 = scmp.ne.s32.totalorder %s112, %s113
    %p127 = scmp.eq.s32.totalorder %s16, 1
    %p128 = por %p126, %p127
    %p130 = scmp.ne.s32.totalorder %s113, %s129
    %p131 = scmp.eq.s32.totalorder %s16, 0
    %p132 = por %p130, %p131
    %p133 = scmp.le.s32.totalorder 1, %s10
    %p134 = scmp.lt.s32.totalorder %s10, 3
    %p135 = pnand %p133, %p134
    %p136 = pneg %p135
    // Predicated region
    $region9: #{encoder_forward.12} parent=5 // pred_check
      _
    $region10: #{encoder_forward.12} parent=5 // pred_check_branch
      %138 = sbr.rel (%p135) target = $region12
    $region11: #{encoder_forward.12} parent=5 // pred_region
      %s139 = ssub.s32 %s10, 1
      // Predicated region
      $region13: #{encoder_forward.12} parent=11 // pred_check
        %p140 = pneg %p57
      $region14: #{encoder_forward.12} parent=11 // pred_check_branch
        %142 = sbr.rel (%p140) target = $region16
      $region15: #{encoder_forward.12} parent=11 // pred_region
        _
      $region16: #{encoder_forward.12} parent=11 // pred_fallthru
        _
      // Predicated region
      $region17: #{encoder_forward.12} parent=11 // pred_check
        %p143 = pneg %p78
      $region18: #{encoder_forward.12} parent=11 // pred_check_branch
        %145 = sbr.rel (%p143) target = $region20
      $region19: #{encoder_forward.12} parent=11 // pred_region
        _
      $region20: #{encoder_forward.12} parent=11 // pred_fallthru
        _
      // Predicated region
      $region21: #{encoder_forward.12} parent=11 // pred_check
        %p146 = pneg %p99
      $region22: #{encoder_forward.12} parent=11 // pred_check_branch
        %148 = sbr.rel (%p146) target = $region24
      $region23: #{encoder_forward.12} parent=11 // pred_region
        _
      $region24: #{encoder_forward.12} parent=11 // pred_fallthru
        _
    $region12: #{encoder_forward.12} parent=5 // pred_fallthru
      _
    %p149 = scmp.lt.s32.totalorder %s10, 2
    // Predicated region
    $region25: #{encoder_forward.12} parent=5 // pred_check
      %p150 = pneg %p149
    $region26: #{encoder_forward.12} parent=5 // pred_check_branch
      %152 = sbr.rel (%p150) target = $region28
    $region27: #{encoder_forward.12} parent=5 // pred_region
      // Predicated region
      $region29: #{encoder_forward.12} parent=27 // pred_check
        %p153 = pneg %p30
      $region30: #{encoder_forward.12} parent=27 // pred_check_branch
        %155 = sbr.rel (%p153) target = $region32
      $region31: #{encoder_forward.12} parent=27 // pred_region
        %s156 = smul.u32 16, %s10
        %p157 = scmp.lt.s32.totalorder %s156, 31
        %s158 = scalar_select %p157, %s156, 31
        %s159 = smul.addr %s158, 8
        %s160 = scalar_lea.vmem %s0, %s159
        %s161 = smul.u32 16, %s10
      $region32: #{encoder_forward.12} parent=27 // pred_fallthru
        _
    $region28: #{encoder_forward.12} parent=5 // pred_fallthru
      _
    %p162 = scmp.le.s32.totalorder 1, %s10
    %p163 = scmp.lt.s32.totalorder %s10, 3
    %p164 = pnand %p162, %p163
    %p165 = pneg %p164
    // Predicated region
    $region33: #{encoder_forward.12} parent=5 // pred_check
      _
    $region34: #{encoder_forward.12} parent=5 // pred_check_branch
      %167 = sbr.rel (%p164) target = $region36
    $region35: #{encoder_forward.12} parent=5 // pred_region
      %s168 = ssub.s32 %s10, 1
      %s169 = smul.u32 16, %s15
      %p170 = scmp.lt.s32.totalorder %s169, 31
      %s171 = scalar_select %p170, %s169, 31
      %s172 = smul.addr %s171, 8
      %s173 = scalar_lea.vmem %s0, %s172
      %p174 = pneg %p36
      %p175 = pneg %p33
      %p176 = pneg %p57
      %p177 = pneg %p54
      %p178 = pneg %p78
      %p179 = pneg %p75
      %p180 = pneg %p99
      %p181 = pneg %p96
      %p182 = pneg %p125
      %p183 = pneg %p122
      %s184 = smul.u32 16, %s15
      %p185 = scmp.lt.s32.totalorder %s184, 31
      %s186 = scalar_select %p185, %s184, 31
      %s187 = smul.addr %s186, 8
      %s188 = scalar_lea.vmem %s4, %s187
      %s189 = smul.u32 16, %s15
      %p190 = scmp.lt.s32.totalorder %s189, 31
      %s191 = scalar_select %p190, %s189, 31
      %s192 = smul.addr %s191, 8
      %s193 = scalar_lea.vmem %s0, %s192
      %s194 = smul.u32 16, %s15
      %s195 = smul.u32 16, %s15
      %p196 = scmp.lt.s32.totalorder %s195, 31
      %s197 = scalar_select %p196, %s195, 31
      %s198 = smul.addr %s197, 8
      %s199 = scalar_lea.vmem %s4, %s198
      %s200 = smul.u32 16, %s15
      %v202 = vld [vmem:[%s193] sm:$0xff]
      %v203 = vld [vmem:[%s193 + $0x8] sm:$0xff]
      %v204 = vld [vmem:[%s193 + $0x10] sm:$0xff]
      %v205 = vld [vmem:[%s193 + $0x18] sm:$0xff]
      %v206 = vld [vmem:[%s193 + $0x20] sm:$0xff]
      %v207 = vld [vmem:[%s193 + $0x28] sm:$0xff]
      %v208 = vld [vmem:[%s193 + $0x30] sm:$0xff]
      %v209 = vld [vmem:[%s193 + $0x38] sm:$0xff]
      %v210 = vld [vmem:[%s193 + $0x40] sm:$0xff]
      %v211 = vld [vmem:[%s193 + $0x48] sm:$0xff]
      %v212 = vld [vmem:[%s193 + $0x50] sm:$0xff]
      %v213 = vld [vmem:[%s193 + $0x58] sm:$0xff]
      %v214 = vld [vmem:[%s193 + $0x60] sm:$0xff]
      %v215 = vld [vmem:[%s193 + $0x68] sm:$0xff]
      %v216 = vld [vmem:[%s193 + $0x70] sm:$0xff]
      %v217 = vld [vmem:[%s193 + $0x78] sm:$0xff]
      %v218 = vpack.c.bf16 %v203, %v202
      %v219 = vpack.c.bf16 %v205, %v204
      %v220 = vpack.c.bf16 %v207, %v206
      %v221 = vpack.c.bf16 %v209, %v208
      %v222 = vpack.c.bf16 %v211, %v210
      %v223 = vpack.c.bf16 %v213, %v212
      %v224 = vpack.c.bf16 %v215, %v214
      %v225 = vpack.c.bf16 %v217, %v216
      %v226 = vld [vmem:[%s1] sm:$0x3]
      %vm227 = vcmask 23552
      %v229 = vsel %vm227, %v218, 0
      %v232 = vsel %vm227, %v219, 0
      %v235 = vsel %vm227, %v220, 0
      %v238 = vsel %vm227, %v221, 0
      %v241 = vsel %vm227, %v222, 0
      %v244 = vsel %vm227, %v223, 0
      %v247 = vsel %vm227, %v224, 0
      %v250 = vsel %vm227, %v225, 0
      %vm252 = vcmask 1040384
      %vm253 = vcmask 1041408
      %v254 = vsel %vm252, 4294967295, 65535
      %v255 = vsel %vm253, %v254, 0
      %v257 = vand.u32 %v226, %v255
      %259 = vmatprep.subr.bf16.mxu0 0
      %260 = vmatpush1.bf16.msra.mxu0 %v257
      %261 = vmatprep.subr.bf16.mxu0 0
      %262 = vmatpush1.bf16.msra.mxu0 0
      %263 = vmatprep.subr.bf16.mxu0 0
      %264 = vmatpush1.bf16.msra.mxu0 0
      %265 = vmatprep.subr.bf16.mxu0 0
      %266 = vmatpush1.bf16.msra.mxu0 0
      %267 = vmatprep.subr.bf16.mxu0 0
      %268 = vmatpush1.bf16.msra.mxu0 0
      %269 = vmatprep.subr.bf16.mxu0 0
      %270 = vmatpush1.bf16.msra.mxu0 0
      %271 = vmatprep.subr.bf16.mxu0 0
      %272 = vmatpush1.bf16.msra.mxu0 0
      %273 = vmatprep.subr.bf16.mxu0 0
      %274 = vmatpush1.bf16.msra.mxu0 0
      %275 = vmatprep.subr.bf16.mxu0 0
      %276 = vmatpush1.bf16.msra.mxu0 0
      %277 = vmatprep.subr.bf16.mxu0 0
      %278 = vmatpush1.bf16.msra.mxu0 0
      %279 = vmatprep.subr.bf16.mxu0 0
      %280 = vmatpush1.bf16.msra.mxu0 0
      %281 = vmatprep.subr.bf16.mxu0 0
      %282 = vmatpush1.bf16.msra.mxu0 0
      %283 = vmatprep.subr.bf16.mxu0 0
      %284 = vmatpush1.bf16.msra.mxu0 0
      %285 = vmatprep.subr.bf16.mxu0 0
      %286 = vmatpush1.bf16.msra.mxu0 0
      %287 = vmatprep.subr.bf16.mxu0 0
      %288 = vmatpush1.bf16.msra.mxu0 0
      %289 = vmatprep.subr.bf16.mxu0 0
      %290 = vmatpush1.bf16.msra.mxu0 0
      %291 = vmatprep.mubr.bf16.mxu0 0
      %292 = vmatmul.mubr.bf16.gmra.mrb[0].mxu0 %v229
      %v293 = vpop.f32.mrb[0].mxu0
      %v294 = vadd.f32 0.0, %v293
      %v295 = vpop.f32.mrb[0].mxu0
      %v296 = vpop.f32.mrb[0].mxu0
      %v297 = vadd.f32 0.0, %v296
      %v298 = vpop.f32.mrb[0].mxu0
      %299 = vmatprep.mubr.bf16.mxu0 0
      %300 = vmatmul.mubr.bf16.gmra.mrb[0].mxu0 %v232
      %v301 = vpop.f32.mrb[0].mxu0
      %v302 = vadd.f32 0.0, %v301
      %v303 = vpop.f32.mrb[0].mxu0
      %v304 = vpop.f32.mrb[0].mxu0
      %v305 = vadd.f32 0.0, %v304
      %v306 = vpop.f32.mrb[0].mxu0
      %307 = vmatprep.mubr.bf16.mxu0 0
      %308 = vmatmul.mubr.bf16.gmra.mrb[0].mxu0 %v235
      %v309 = vpop.f32.mrb[0].mxu0
      %v310 = vadd.f32 0.0, %v309
      %v311 = vpop.f32.mrb[0].mxu0
      %v312 = vpop.f32.mrb[0].mxu0
      %v313 = vadd.f32 0.0, %v312
      %v314 = vpop.f32.mrb[0].mxu0
      %315 = vmatprep.mubr.bf16.mxu0 0
      %316 = vmatmul.mubr.bf16.gmra.mrb[0].mxu0 %v238
      %v317 = vpop.f32.mrb[0].mxu0
      %v318 = vadd.f32 0.0, %v317
      %v319 = vpop.f32.mrb[0].mxu0
      %v320 = vpop.f32.mrb[0].mxu0
      %v321 = vadd.f32 0.0, %v320
      %v322 = vpop.f32.mrb[0].mxu0
      %323 = vmatprep.mubr.bf16.mxu0 0
      %324 = vmatmul.mubr.bf16.gmra.mrb[0].mxu0 %v241
      %v325 = vpop.f32.mrb[0].mxu0
      %v326 = vadd.f32 0.0, %v325
      %v327 = vpop.f32.mrb[0].mxu0
      %v328 = vpop.f32.mrb[0].mxu0
      %v329 = vadd.f32 0.0, %v328
      %v330 = vpop.f32.mrb[0].mxu0
      %331 = vmatprep.mubr.bf16.mxu0 0
      %332 = vmatmul.mubr.bf16.gmra.mrb[0].mxu0 %v244
      %v333 = vpop.f32.mrb[0].mxu0
      %v334 = vadd.f32 0.0, %v333
      %v335 = vpop.f32.mrb[0].mxu0
      %v336 = vpop.f32.mrb[0].mxu0
      %v337 = vadd.f32 0.0, %v336
      %v338 = vpop.f32.mrb[0].mxu0
      %339 = vmatprep.mubr.bf16.mxu0 0
      %340 = vmatmul.mubr.bf16.gmra.mrb[0].mxu0 %v247
      %v341 = vpop.f32.mrb[0].mxu0
      %v342 = vadd.f32 0.0, %v341
      %v343 = vpop.f32.mrb[0].mxu0
      %v344 = vpop.f32.mrb[0].mxu0
      %v345 = vadd.f32 0.0, %v344
      %v346 = vpop.f32.mrb[0].mxu0
      %347 = vmatprep.mubr.bf16.mxu0 0
      %348 = vmatmul.mubr.bf16.gmra.mrb[0].mxu0 %v250
      %v349 = vpop.f32.mrb[0].mxu0
      %v350 = vadd.f32 0.0, %v349
      %v351 = vpop.f32.mrb[0].mxu0
      %v352 = vpop.f32.mrb[0].mxu0
      %v353 = vadd.f32 0.0, %v352
      %v354 = vpop.f32.mrb[0].mxu0
      %355 = vdwg.mxu0
      %v356 = vld [vmem:[%s2] sm:$0x1]
      %v358 = vlaneseq
      %v359 = vshrl.u32 %v358, 7
      %v360 = vsub.s32 0, %v359
      %v361 = vrot.slane %v356, %v360
      %v363 = vmul.f32 %v294, %v361
      %v364 = vmul.f32 %v297, %v361
      %v365 = vmul.f32 %v302, %v361
      %v366 = vmul.f32 %v305, %v361
      %v367 = vmul.f32 %v310, %v361
      %v368 = vmul.f32 %v313, %v361
      %v369 = vmul.f32 %v318, %v361
      %v370 = vmul.f32 %v321, %v361
      %v371 = vmul.f32 %v326, %v361
      %v372 = vmul.f32 %v329, %v361
      %v373 = vmul.f32 %v334, %v361
      %v374 = vmul.f32 %v337, %v361
      %v375 = vmul.f32 %v342, %v361
      %v376 = vmul.f32 %v345, %v361
      %v377 = vmul.f32 %v350, %v361
      %v378 = vmul.f32 %v353, %v361
      %v379 = vld [vmem:[%s3] sm:$0x1]
      %v381 = vlaneseq
      %v382 = vshrl.u32 %v381, 7
      %v383 = vsub.s32 0, %v382
      %v384 = vrot.slane %v379, %v383
      %v386 = vadd.f32 %v363, %v384
      %v387 = vadd.f32 %v364, %v384
      %v388 = vadd.f32 %v365, %v384
      %v389 = vadd.f32 %v366, %v384
      %v390 = vadd.f32 %v367, %v384
      %v391 = vadd.f32 %v368, %v384
      %v392 = vadd.f32 %v369, %v384
      %v393 = vadd.f32 %v370, %v384
      %v394 = vadd.f32 %v371, %v384
      %v395 = vadd.f32 %v372, %v384
      %v396 = vadd.f32 %v373, %v384
      %v397 = vadd.f32 %v374, %v384
      %v398 = vadd.f32 %v375, %v384
      %v399 = vadd.f32 %v376, %v384
      %v400 = vadd.f32 %v377, %v384
      %v401 = vadd.f32 %v378, %v384
      %v402 = vmax.f32 %v386, 0.0
      %v403 = vmax.f32 %v387, 0.0
      %v404 = vmax.f32 %v388, 0.0
      %v405 = vmax.f32 %v389, 0.0
      %v406 = vmax.f32 %v390, 0.0
      %v407 = vmax.f32 %v391, 0.0
      %v408 = vmax.f32 %v392, 0.0
      %v409 = vmax.f32 %v393, 0.0
      %v410 = vmax.f32 %v394, 0.0
      %v411 = vmax.f32 %v395, 0.0
      %v412 = vmax.f32 %v396, 0.0
      %v413 = vmax.f32 %v397, 0.0
      %v414 = vmax.f32 %v398, 0.0
      %v415 = vmax.f32 %v399, 0.0
      %v416 = vmax.f32 %v400, 0.0
      %v417 = vmax.f32 %v401, 0.0
      %vm418 = vcmask 523264
      %419 = vst.msk [vmem:[%s199] sm:$0xff] %vm418, %v402
      %420 = vst.msk [vmem:[%s199 + $0x8] sm:$0xff] %vm418, %v403
      %421 = vst.msk [vmem:[%s199 + $0x10] sm:$0xff] %vm418, %v404
      %422 = vst.msk [vmem:[%s199 + $0x18] sm:$0xff] %vm418, %v405
      %423 = vst.msk [vmem:[%s199 + $0x20] sm:$0xff] %vm418, %v406
      %424 = vst.msk [vmem:[%s199 + $0x28] sm:$0xff] %vm418, %v407
      %425 = vst.msk [vmem:[%s199 + $0x30] sm:$0xff] %vm418, %v408
      %426 = vst.msk [vmem:[%s199 + $0x38] sm:$0xff] %vm418, %v409
      %427 = vst.msk [vmem:[%s199 + $0x40] sm:$0xff] %vm418, %v410
      %428 = vst.msk [vmem:[%s199 + $0x48] sm:$0xff] %vm418, %v411
      %429 = vst.msk [vmem:[%s199 + $0x50] sm:$0xff] %vm418, %v412
      %430 = vst.msk [vmem:[%s199 + $0x58] sm:$0xff] %vm418, %v413
      %431 = vst.msk [vmem:[%s199 + $0x60] sm:$0xff] %vm418, %v414
      %432 = vst.msk [vmem:[%s199 + $0x68] sm:$0xff] %vm418, %v415
      %433 = vst.msk [vmem:[%s199 + $0x70] sm:$0xff] %vm418, %v416
      %434 = vst.msk [vmem:[%s199 + $0x78] sm:$0xff] %vm418, %v417
      %s435 = smul.u32 16, %s15
      %p436 = scmp.lt.s32.totalorder %s435, 31
      %s437 = scalar_select %p436, %s435, 31
      %s438 = smul.addr %s437, 8
      %s439 = scalar_lea.vmem %s4, %s438
      // Predicated region
      $region37: #{encoder_forward.12} parent=35 // pred_check
        %p440 = pneg %p122
      $region38: #{encoder_forward.12} parent=35 // pred_check_branch
        %442 = sbr.rel (%p440) target = $region40
      $region39: #{encoder_forward.12} parent=35 // pred_region
        %s443 = smul.u32 16, %s15
      $region40: #{encoder_forward.12} parent=35 // pred_fallthru
        _
    $region36: #{encoder_forward.12} parent=5 // pred_fallthru
      _
    %p444 = scmp.le.s32.totalorder 2, %s10
    // Predicated region
    $region41: #{encoder_forward.12} parent=5 // pred_check
      %p445 = pneg %p444
    $region42: #{encoder_forward.12} parent=5 // pred_check_branch
      %447 = sbr.rel (%p445) target = $region44
    $region43: #{encoder_forward.12} parent=5 // pred_region
      %s448 = ssub.s32 %s10, 2
      // Predicated region
      $region45: #{encoder_forward.12} parent=43 // pred_check
        %p449 = pneg %p128
      $region46: #{encoder_forward.12} parent=43 // pred_check_branch
        %451 = sbr.rel (%p449) target = $region48
      $region47: #{encoder_forward.12} parent=43 // pred_region
        %s452 = smul.u32 16, %s16
        %p453 = scmp.lt.s32.totalorder %s452, 31
        %s454 = scalar_select %p453, %s452, 31
        %s455 = smul.addr %s454, 8
        %s456 = scalar_lea.vmem %s4, %s455
      $region48: #{encoder_forward.12} parent=43 // pred_fallthru
        _
    $region44: #{encoder_forward.12} parent=5 // pred_fallthru
      _
  $region6: #{encoder_forward.12} parent=0 // loop_footer
    %s14 = sadd.s32 1, %s10
  $region7: #{encoder_forward.12} parent=0 // loop_footer_branch
    %9 = sbr.rel target = $region3
  $region8: #{encoder_forward.12} parent=0 // loop_exit
    _

// kernel: encoder_forward.13
$region0: #{encoder_forward.13}
  #allocation0 [shape = 'u32[]', space=smem, size = 0x4, offset = 0x4, fixed_abs, tag = 'smem constant byte address 0x4 - core index']
  #allocation1 [shape = 'u32[144,128]{1,0:T(1,128)}', space=vmem, size = 0x12000, scoped, tag = 'internal scratch']
  %s0 = inlined_call_operand.vmem [shape: f32[128,192], index: 0, kind: input, shape index: {}]
  %s1 = inlined_call_operand.vmem [shape: bf16[192,128], index: 1, kind: input, shape index: {}]
  %s2 = inlined_call_operand.vmem [shape: f32[1,128], index: 2, kind: input, shape index: {}]
  %s3 = inlined_call_operand.vmem [shape: f32[1,128], index: 3, kind: input, shape index: {}]
  %s4 = inlined_call_operand.vmem [shape: f32[128,128], index: 4, kind: output, shape index: {}]
  %s5 = sld [smem:[#allocation0]]
  $region26: #{encoder_forward.13} parent=0
    _
  %s7 = ssub.s32 1, %s5
  %s8 = scalar_select 0, %s7, %s5
  // Predicated region
  $region2: #{encoder_forward.13} parent=0 // pred_check
    _
  $region3: #{encoder_forward.13} parent=0 // pred_check_branch
    %10 = sbr.rel (0) target = $region5
  $region4: #{encoder_forward.13} parent=0 // pred_region
    _
  $region5: #{encoder_forward.13} parent=0 // pred_fallthru
    _
  // Predicated region
  $region6: #{encoder_forward.13} parent=0 // pred_check
    _
  $region7: #{encoder_forward.13} parent=0 // pred_check_branch
    %12 = sbr.rel (0) target = $region9
  $region8: #{encoder_forward.13} parent=0 // pred_region
    _
  $region9: #{encoder_forward.13} parent=0 // pred_fallthru
    _
  // Predicated region
  $region10: #{encoder_forward.13} parent=0 // pred_check
    _
  $region11: #{encoder_forward.13} parent=0 // pred_check_branch
    %14 = sbr.rel (0) target = $region13
  $region12: #{encoder_forward.13} parent=0 // pred_region
    _
  $region13: #{encoder_forward.13} parent=0 // pred_fallthru
    _
  // Predicated region
  $region14: #{encoder_forward.13} parent=0 // pred_check
    _
  $region15: #{encoder_forward.13} parent=0 // pred_check_branch
    %16 = sbr.rel (0) target = $region17
  $region16: #{encoder_forward.13} parent=0 // pred_region
    _
  $region17: #{encoder_forward.13} parent=0 // pred_fallthru
    _
  %v18 = vld [vmem:[%s0] sm:$0xff]
  %v19 = vld [vmem:[%s0 + $0x8] sm:$0xff]
  %v20 = vld [vmem:[%s0 + $0x10] sm:$0xff]
  %v21 = vld [vmem:[%s0 + $0x18] sm:$0xff]
  %v22 = vld [vmem:[%s0 + $0x20] sm:$0xff]
  %v23 = vld [vmem:[%s0 + $0x28] sm:$0xff]
  %v24 = vld [vmem:[%s0 + $0x30] sm:$0xff]
  %v25 = vld [vmem:[%s0 + $0x38] sm:$0xff]
  %v26 = vld [vmem:[%s0 + $0x40] sm:$0xff]
  %v27 = vld [vmem:[%s0 + $0x48] sm:$0xff]
  %v28 = vld [vmem:[%s0 + $0x50] sm:$0xff]
  %v29 = vld [vmem:[%s0 + $0x58] sm:$0xff]
  %v30 = vld [vmem:[%s0 + $0x60] sm:$0xff]
  %v31 = vld [vmem:[%s0 + $0x68] sm:$0xff]
  %v32 = vld [vmem:[%s0 + $0x70] sm:$0xff]
  %v33 = vld [vmem:[%s0 + $0x78] sm:$0xff]
  %v34 = vld [vmem:[%s0 + $0x80] sm:$0xff]
  %v35 = vld [vmem:[%s0 + $0x88] sm:$0xff]
  %v36 = vld [vmem:[%s0 + $0x90] sm:$0xff]
  %v37 = vld [vmem:[%s0 + $0x98] sm:$0xff]
  %v38 = vld [vmem:[%s0 + $0xa0] sm:$0xff]
  %v39 = vld [vmem:[%s0 + $0xa8] sm:$0xff]
  %v40 = vld [vmem:[%s0 + $0xb0] sm:$0xff]
  %v41 = vld [vmem:[%s0 + $0xb8] sm:$0xff]
  %v42 = vld [vmem:[%s0 + $0xc0] sm:$0xff]
  %v43 = vld [vmem:[%s0 + $0xc8] sm:$0xff]
  %v44 = vld [vmem:[%s0 + $0xd0] sm:$0xff]
  %v45 = vld [vmem:[%s0 + $0xd8] sm:$0xff]
  %v46 = vld [vmem:[%s0 + $0xe0] sm:$0xff]
  %v47 = vld [vmem:[%s0 + $0xe8] sm:$0xff]
  %v48 = vld [vmem:[%s0 + $0xf0] sm:$0xff]
  %v49 = vld [vmem:[%s0 + $0xf8] sm:$0xff]
  %v50 = vpack.c.bf16 %v20, %v18
  %v51 = vpack.c.bf16 %v21, %v19
  %v52 = vpack.c.bf16 %v24, %v22
  %v53 = vpack.c.bf16 %v25, %v23
  %v54 = vpack.c.bf16 %v28, %v26
  %v55 = vpack.c.bf16 %v29, %v27
  %v56 = vpack.c.bf16 %v32, %v30
  %v57 = vpack.c.bf16 %v33, %v31
  %v58 = vpack.c.bf16 %v36, %v34
  %v59 = vpack.c.bf16 %v37, %v35
  %v60 = vpack.c.bf16 %v40, %v38
  %v61 = vpack.c.bf16 %v41, %v39
  %v62 = vpack.c.bf16 %v44, %v42
  %v63 = vpack.c.bf16 %v45, %v43
  %v64 = vpack.c.bf16 %v48, %v46
  %v65 = vpack.c.bf16 %v49, %v47
  %v66 = vld [vmem:[%s1] sm:$0xf]
  %v67 = vld [vmem:[%s1 + $0x4] sm:$0xf]
  %v68 = vld [vmem:[%s1 + $0x8] sm:$0xf]
  %v69 = vld [vmem:[%s1 + $0xc] sm:$0xf]
  %v70 = vld [vmem:[%s1 + $0x10] sm:$0xf]
  %v71 = vld [vmem:[%s1 + $0x14] sm:$0xf]
  %v72 = vld [vmem:[%s1 + $0x18] sm:$0xf]
  %v73 = vld [vmem:[%s1 + $0x1c] sm:$0xf]
  %v74 = vld [vmem:[%s1 + $0x20] sm:$0xf]
  %v75 = vld [vmem:[%s1 + $0x24] sm:$0xf]
  %v76 = vld [vmem:[%s1 + $0x28] sm:$0xf]
  %v77 = vld [vmem:[%s1 + $0x2c] sm:$0xf]
  %v78 = vld [vmem:[%s1 + $0x30] sm:$0xf]
  %v79 = vld [vmem:[%s1 + $0x34] sm:$0xf]
  %v80 = vld [vmem:[%s1 + $0x38] sm:$0xf]
  %v81 = vld [vmem:[%s1 + $0x3c] sm:$0xf]
  %v82 = vld [vmem:[%s1 + $0x40] sm:$0xf]
  %v83 = vld [vmem:[%s1 + $0x44] sm:$0xf]
  %v84 = vld [vmem:[%s1 + $0x48] sm:$0xf]
  %v85 = vld [vmem:[%s1 + $0x4c] sm:$0xf]
  %v86 = vld [vmem:[%s1 + $0x50] sm:$0xf]
  %v87 = vld [vmem:[%s1 + $0x54] sm:$0xf]
  %v88 = vld [vmem:[%s1 + $0x58] sm:$0xf]
  %v89 = vld [vmem:[%s1 + $0x5c] sm:$0xf]
  %v114 = vunpack.c.l.b16 %v66
  %v115 = vunpack.c.l.b16 %v67
  %v116 = vunpack.c.l.b16 %v68
  %v117 = vunpack.c.l.b16 %v69
  %v118 = vunpack.c.l.b16 %v70
  %v119 = vunpack.c.l.b16 %v71
  %v120 = vunpack.c.l.b16 %v72
  %v121 = vunpack.c.l.b16 %v73
  %v122 = vunpack.c.l.b16 %v74
  %v123 = vunpack.c.l.b16 %v75
  %v124 = vunpack.c.l.b16 %v76
  %v125 = vunpack.c.l.b16 %v77
  %v126 = vunpack.c.l.b16 %v78
  %v127 = vunpack.c.l.b16 %v79
  %v128 = vunpack.c.l.b16 %v80
  %v129 = vunpack.c.l.b16 %v81
  %v130 = vunpack.c.l.b16 %v82
  %v131 = vunpack.c.l.b16 %v83
  %v132 = vunpack.c.l.b16 %v84
  %v133 = vunpack.c.l.b16 %v85
  %v134 = vunpack.c.l.b16 %v86
  %v135 = vunpack.c.l.b16 %v87
  %v136 = vunpack.c.l.b16 %v88
  %v137 = vunpack.c.l.b16 %v89
  %v138 = vpack.c.b16 %v115, %v114
  %v139 = vpack.c.b16 %v117, %v116
  %v140 = vpack.c.b16 %v119, %v118
  %v141 = vpack.c.b16 %v121, %v120
  %v142 = vpack.c.b16 %v123, %v122
  %v143 = vpack.c.b16 %v125, %v124
  %v144 = vpack.c.b16 %v127, %v126
  %v145 = vpack.c.b16 %v129, %v128
  %v146 = vpack.c.b16 %v131, %v130
  %v147 = vpack.c.b16 %v133, %v132
  %v148 = vpack.c.b16 %v135, %v134
  %v149 = vpack.c.b16 %v137, %v136
  %vm162 = vcmask 523264
  %v164 = vsel %vm162, %v51, 0
  %v167 = vsel %vm162, %v53, 0
  %v170 = vsel %vm162, %v55, 0
  %v173 = vsel %vm162, %v57, 0
  %v176 = vsel %vm162, %v59, 0
  %v179 = vsel %vm162, %v61, 0
  %v182 = vsel %vm162, %v63, 0
  %v185 = vsel %vm162, %v65, 0
  %187 = vmatprep.subr.bf16.mxu0 0
  %188 = vmatpush1.bf16.msra.mxu0 %v138
  %189 = vmatprep.subr.bf16.mxu0 0
  %190 = vmatpush1.bf16.msra.mxu0 %v139
  %191 = vmatprep.subr.bf16.mxu0 0
  %192 = vmatpush1.bf16.msra.mxu0 %v140
  %193 = vmatprep.subr.bf16.mxu0 0
  %194 = vmatpush1.bf16.msra.mxu0 %v141
  %195 = vmatprep.subr.bf16.mxu0 0
  %196 = vmatpush1.bf16.msra.mxu0 %v142
  %197 = vmatprep.subr.bf16.mxu0 0
  %198 = vmatpush1.bf16.msra.mxu0 %v143
  %199 = vmatprep.subr.bf16.mxu0 0
  %200 = vmatpush1.bf16.msra.mxu0 %v144
  %201 = vmatprep.subr.bf16.mxu0 0
  %202 = vmatpush1.bf16.msra.mxu0 %v145
  %203 = vmatprep.subr.bf16.mxu0 0
  %204 = vmatpush1.bf16.msra.mxu0 %v146
  %205 = vmatprep.subr.bf16.mxu0 0
  %206 = vmatpush1.bf16.msra.mxu0 %v147
  %207 = vmatprep.subr.bf16.mxu0 0
  %208 = vmatpush1.bf16.msra.mxu0 %v148
  %209 = vmatprep.subr.bf16.mxu0 0
  %210 = vmatpush1.bf16.msra.mxu0 %v149
  %211 = vmatprep.subr.bf16.mxu0 0
  %212 = vmatpush1.bf16.msra.mxu0 0
  %213 = vmatprep.subr.bf16.mxu0 0
  %214 = vmatpush1.bf16.msra.mxu0 0
  %215 = vmatprep.subr.bf16.mxu0 0
  %216 = vmatpush1.bf16.msra.mxu0 0
  %217 = vmatprep.subr.bf16.mxu0 0
  %218 = vmatpush1.bf16.msra.mxu0 0
  %219 = vmatprep.mubr.bf16.mxu0 %v164
  %220 = vmatmul.mubr.bf16.gmra.mrb[0].mxu0 %v50
  %v221 = vpop.f32.mrb[0].mxu0
  %v222 = vadd.f32 0.0, %v221
  %v223 = vpop.f32.mrb[0].mxu0
  %v224 = vpop.f32.mrb[0].mxu0
  %v225 = vadd.f32 0.0, %v224
  %v226 = vpop.f32.mrb[0].mxu0
  %227 = vmatprep.mubr.bf16.mxu0 %v167
  %228 = vmatmul.mubr.bf16.gmra.mrb[0].mxu0 %v52
  %v229 = vpop.f32.mrb[0].mxu0
  %v230 = vadd.f32 0.0, %v229
  %v231 = vpop.f32.mrb[0].mxu0
  %v232 = vpop.f32.mrb[0].mxu0
  %v233 = vadd.f32 0.0, %v232
  %v234 = vpop.f32.mrb[0].mxu0
  %235 = vmatprep.mubr.bf16.mxu0 %v170
  %236 = vmatmul.mubr.bf16.gmra.mrb[0].mxu0 %v54
  %v237 = vpop.f32.mrb[0].mxu0
  %v238 = vadd.f32 0.0, %v237
  %v239 = vpop.f32.mrb[0].mxu0
  %v240 = vpop.f32.mrb[0].mxu0
  %v241 = vadd.f32 0.0, %v240
  %v242 = vpop.f32.mrb[0].mxu0
  %243 = vmatprep.mubr.bf16.mxu0 %v173
  %244 = vmatmul.mubr.bf16.gmra.mrb[0].mxu0 %v56
  %v245 = vpop.f32.mrb[0].mxu0
  %v246 = vadd.f32 0.0, %v245
  %v247 = vpop.f32.mrb[0].mxu0
  %v248 = vpop.f32.mrb[0].mxu0
  %v249 = vadd.f32 0.0, %v248
  %v250 = vpop.f32.mrb[0].mxu0
  %251 = vmatprep.mubr.bf16.mxu0 %v176
  %252 = vmatmul.mubr.bf16.gmra.mrb[0].mxu0 %v58
  %v253 = vpop.f32.mrb[0].mxu0
  %v254 = vadd.f32 0.0, %v253
  %v255 = vpop.f32.mrb[0].mxu0
  %v256 = vpop.f32.mrb[0].mxu0
  %v257 = vadd.f32 0.0, %v256
  %v258 = vpop.f32.mrb[0].mxu0
  %259 = vmatprep.mubr.bf16.mxu0 %v179
  %260 = vmatmul.mubr.bf16.gmra.mrb[0].mxu0 %v60
  %v261 = vpop.f32.mrb[0].mxu0
  %v262 = vadd.f32 0.0, %v261
  %v263 = vpop.f32.mrb[0].mxu0
  %v264 = vpop.f32.mrb[0].mxu0
  %v265 = vadd.f32 0.0, %v264
  %v266 = vpop.f32.mrb[0].mxu0
  %267 = vmatprep.mubr.bf16.mxu0 %v182
  %268 = vmatmul.mubr.bf16.gmra.mrb[0].mxu0 %v62
  %v269 = vpop.f32.mrb[0].mxu0
  %v270 = vadd.f32 0.0, %v269
  %v271 = vpop.f32.mrb[0].mxu0
  %v272 = vpop.f32.mrb[0].mxu0
  %v273 = vadd.f32 0.0, %v272
  %v274 = vpop.f32.mrb[0].mxu0
  %275 = vmatprep.mubr.bf16.mxu0 %v185
  %276 = vmatmul.mubr.bf16.gmra.mrb[0].mxu0 %v64
  %v277 = vpop.f32.mrb[0].mxu0
  %v278 = vadd.f32 0.0, %v277
  %v279 = vpop.f32.mrb[0].mxu0
  %v280 = vpop.f32.mrb[0].mxu0
  %v281 = vadd.f32 0.0, %v280
  %v282 = vpop.f32.mrb[0].mxu0
  %283 = vdwg.mxu0
  %v284 = vld [vmem:[%s2] sm:$0x1]
  %v286 = vlaneseq
  %v287 = vshrl.u32 %v286, 7
  %v288 = vsub.s32 0, %v287
  %v289 = vrot.slane %v284, %v288
  %v291 = vmul.f32 %v222, %v289
  %v292 = vmul.f32 %v225, %v289
  %v293 = vmul.f32 %v230, %v289
  %v294 = vmul.f32 %v233, %v289
  %v295 = vmul.f32 %v238, %v289
  %v296 = vmul.f32 %v241, %v289
  %v297 = vmul.f32 %v246, %v289
  %v298 = vmul.f32 %v249, %v289
  %v299 = vmul.f32 %v254, %v289
  %v300 = vmul.f32 %v257, %v289
  %v301 = vmul.f32 %v262, %v289
  %v302 = vmul.f32 %v265, %v289
  %v303 = vmul.f32 %v270, %v289
  %v304 = vmul.f32 %v273, %v289
  %v305 = vmul.f32 %v278, %v289
  %v306 = vmul.f32 %v281, %v289
  %v307 = vld [vmem:[%s3] sm:$0x1]
  %v309 = vlaneseq
  %v310 = vshrl.u32 %v309, 7
  %v311 = vsub.s32 0, %v310
  %v312 = vrot.slane %v307, %v311
  %v314 = vadd.f32 %v291, %v312
  %v315 = vadd.f32 %v292, %v312
  %v316 = vadd.f32 %v293, %v312
  %v317 = vadd.f32 %v294, %v312
  %v318 = vadd.f32 %v295, %v312
  %v319 = vadd.f32 %v296, %v312
  %v320 = vadd.f32 %v297, %v312
  %v321 = vadd.f32 %v298, %v312
  %v322 = vadd.f32 %v299, %v312
  %v323 = vadd.f32 %v300, %v312
  %v324 = vadd.f32 %v301, %v312
  %v325 = vadd.f32 %v302, %v312
  %v326 = vadd.f32 %v303, %v312
  %v327 = vadd.f32 %v304, %v312
  %v328 = vadd.f32 %v305, %v312
  %v329 = vadd.f32 %v306, %v312
  %v330 = vmax.f32 %v314, 0.0
  %v331 = vmax.f32 %v315, 0.0
  %v332 = vmax.f32 %v316, 0.0
  %v333 = vmax.f32 %v317, 0.0
  %v334 = vmax.f32 %v318, 0.0
  %v335 = vmax.f32 %v319, 0.0
  %v336 = vmax.f32 %v320, 0.0
  %v337 = vmax.f32 %v321, 0.0
  %v338 = vmax.f32 %v322, 0.0
  %v339 = vmax.f32 %v323, 0.0
  %v340 = vmax.f32 %v324, 0.0
  %v341 = vmax.f32 %v325, 0.0
  %v342 = vmax.f32 %v326, 0.0
  %v343 = vmax.f32 %v327, 0.0
  %v344 = vmax.f32 %v328, 0.0
  %v345 = vmax.f32 %v329, 0.0
  %346 = vst [vmem:[%s4] sm:$0xff] %v330
  %347 = vst [vmem:[%s4 + $0x8] sm:$0xff] %v331
  %348 = vst [vmem:[%s4 + $0x10] sm:$0xff] %v332
  %349 = vst [vmem:[%s4 + $0x18] sm:$0xff] %v333
  %350 = vst [vmem:[%s4 + $0x20] sm:$0xff] %v334
  %351 = vst [vmem:[%s4 + $0x28] sm:$0xff] %v335
  %352 = vst [vmem:[%s4 + $0x30] sm:$0xff] %v336
  %353 = vst [vmem:[%s4 + $0x38] sm:$0xff] %v337
  %354 = vst [vmem:[%s4 + $0x40] sm:$0xff] %v338
  %355 = vst [vmem:[%s4 + $0x48] sm:$0xff] %v339
  %356 = vst [vmem:[%s4 + $0x50] sm:$0xff] %v340
  %357 = vst [vmem:[%s4 + $0x58] sm:$0xff] %v341
  %358 = vst [vmem:[%s4 + $0x60] sm:$0xff] %v342
  %359 = vst [vmem:[%s4 + $0x68] sm:$0xff] %v343
  %360 = vst [vmem:[%s4 + $0x70] sm:$0xff] %v344
  %361 = vst [vmem:[%s4 + $0x78] sm:$0xff] %v345
  // Predicated region
  $region18: #{encoder_forward.13} parent=0 // pred_check
    _
  $region19: #{encoder_forward.13} parent=0 // pred_check_branch
    %363 = sbr.rel (0) target = $region21
  $region20: #{encoder_forward.13} parent=0 // pred_region
    _
  $region21: #{encoder_forward.13} parent=0 // pred_fallthru
    _
  // Predicated region
  $region22: #{encoder_forward.13} parent=0 // pred_check
    _
  $region23: #{encoder_forward.13} parent=0 // pred_check_branch
    %365 = sbr.rel (0) target = $region25
  $region24: #{encoder_forward.13} parent=0 // pred_region
    _
  $region25: #{encoder_forward.13} parent=0 // pred_fallthru
    _

// kernel: encoder_forward.15
$region0: #{encoder_forward.15}
  #allocation0 [shape = 'u32[]', space=smem, size = 0x4, offset = 0x4, fixed_abs, tag = 'smem constant byte address 0x4 - core index']
  #allocation1 [shape = 'u32[144,128]{1,0:T(1,128)}', space=vmem, size = 0x12000, scoped, tag = 'internal scratch']
  %s0 = inlined_call_operand.vmem [shape: f32[32,128], index: 0, kind: input, shape index: {}]
  %s1 = inlined_call_operand.vmem [shape: f32[1,128], index: 1, kind: input, shape index: {}]
  %s2 = inlined_call_operand.vmem [shape: f32[1,128], index: 2, kind: input, shape index: {}]
  %s3 = inlined_call_operand.vmem [shape: bf16[128,384], index: 3, kind: input, shape index: {}]
  %s4 = inlined_call_operand.vmem [shape: f32[32,384], index: 4, kind: output, shape index: {}]
  %s5 = sld [smem:[#allocation0]]
  $region26: #{encoder_forward.15} parent=0
    _
  %s7 = ssub.s32 1, %s5
  %s8 = scalar_select 0, %s7, %s5
  // Predicated region
  $region2: #{encoder_forward.15} parent=0 // pred_check
    _
  $region3: #{encoder_forward.15} parent=0 // pred_check_branch
    %10 = sbr.rel (0) target = $region5
  $region4: #{encoder_forward.15} parent=0 // pred_region
    _
  $region5: #{encoder_forward.15} parent=0 // pred_fallthru
    _
  // Predicated region
  $region6: #{encoder_forward.15} parent=0 // pred_check
    _
  $region7: #{encoder_forward.15} parent=0 // pred_check_branch
    %12 = sbr.rel (0) target = $region9
  $region8: #{encoder_forward.15} parent=0 // pred_region
    _
  $region9: #{encoder_forward.15} parent=0 // pred_fallthru
    _
  // Predicated region
  $region10: #{encoder_forward.15} parent=0 // pred_check
    _
  $region11: #{encoder_forward.15} parent=0 // pred_check_branch
    %14 = sbr.rel (0) target = $region13
  $region12: #{encoder_forward.15} parent=0 // pred_region
    _
  $region13: #{encoder_forward.15} parent=0 // pred_fallthru
    _
  // Predicated region
  $region14: #{encoder_forward.15} parent=0 // pred_check
    _
  $region15: #{encoder_forward.15} parent=0 // pred_check_branch
    %16 = sbr.rel (0) target = $region17
  $region16: #{encoder_forward.15} parent=0 // pred_region
    _
  $region17: #{encoder_forward.15} parent=0 // pred_fallthru
    _
  %v18 = vld [vmem:[%s0] sm:$0xff]
  %v19 = vld [vmem:[%s0 + $0x8] sm:$0xff]
  %v20 = vld [vmem:[%s0 + $0x10] sm:$0xff]
  %v21 = vld [vmem:[%s0 + $0x18] sm:$0xff]
  %22 = vadd.xlane.f32.xlu0 %v18
  %v23 = vpop.xlane.xlu0 %22
  %24 = vadd.xlane.f32.xlu0 %v19
  %v25 = vpop.xlane.xlu0 %24
  %26 = vadd.xlane.f32.xlu0 %v20
  %v27 = vpop.xlane.xlu0 %26
  %28 = vadd.xlane.f32.xlu0 %v21
  %v29 = vpop.xlane.xlu0 %28
  %v30 = vrcp.pop 128.0
  %v31 = vmul.f32 %v23, %v30
  %v32 = vmul.f32 %v25, %v30
  %v33 = vmul.f32 %v27, %v30
  %v34 = vmul.f32 %v29, %v30
  %v35 = vsub.f32 %v18, %v31
  %v36 = vsub.f32 %v19, %v32
  %v37 = vsub.f32 %v20, %v33
  %v38 = vsub.f32 %v21, %v34
  %v39 = vmul.f32 %v35, %v35
  %v40 = vmul.f32 %v36, %v36
  %v41 = vmul.f32 %v37, %v37
  %v42 = vmul.f32 %v38, %v38
  %43 = vadd.xlane.f32.xlu0 %v39
  %v44 = vpop.xlane.xlu0 %43
  %45 = vadd.xlane.f32.xlu0 %v40
  %v46 = vpop.xlane.xlu0 %45
  %47 = vadd.xlane.f32.xlu0 %v41
  %v48 = vpop.xlane.xlu0 %47
  %49 = vadd.xlane.f32.xlu0 %v42
  %v50 = vpop.xlane.xlu0 %49
  %v51 = vmul.f32 %v44, %v30
  %v52 = vmul.f32 %v46, %v30
  %v53 = vmul.f32 %v48, %v30
  %v54 = vmul.f32 %v50, %v30
  %v55 = vadd.f32 %v51, 1e-06
  %v56 = vadd.f32 %v52, 1e-06
  %v57 = vadd.f32 %v53, 1e-06
  %v58 = vadd.f32 %v54, 1e-06
  %v59 = vrsqrt.pop %v55
  %v60 = vrsqrt.pop %v56
  %v61 = vrsqrt.pop %v57
  %v62 = vrsqrt.pop %v58
  %v63 = vmul.f32 %v35, %v59
  %v64 = vmul.f32 %v36, %v60
  %v65 = vmul.f32 %v37, %v61
  %v66 = vmul.f32 %v38, %v62
  %v67 = vld [vmem:[%s1] sm:$0x1]
  %v69 = vlaneseq
  %v70 = vshrl.u32 %v69, 7
  %v71 = vsub.s32 0, %v70
  %v72 = vrot.slane %v67, %v71
  %v74 = vmul.f32 %v63, %v72
  %v75 = vmul.f32 %v64, %v72
  %v76 = vmul.f32 %v65, %v72
  %v77 = vmul.f32 %v66, %v72
  %v78 = vld [vmem:[%s2] sm:$0x1]
  %v80 = vlaneseq
  %v81 = vshrl.u32 %v80, 7
  %v82 = vsub.s32 0, %v81
  %v83 = vrot.slane %v78, %v82
  %v85 = vadd.f32 %v74, %v83
  %v86 = vadd.f32 %v75, %v83
  %v87 = vadd.f32 %v76, %v83
  %v88 = vadd.f32 %v77, %v83
  %v89 = vpack.c.bf16 %v86, %v85
  %v90 = vpack.c.bf16 %v88, %v87
  %v91 = vld [vmem:[%s3] sm:$0xff]
  %v92 = vld [vmem:[%s3 + $0x8] sm:$0xf]
  %v93 = vld [vmem:[%s3 + $0xc] sm:$0xff]
  %v94 = vld [vmem:[%s3 + $0x14] sm:$0xf]
  %v95 = vld [vmem:[%s3 + $0x18] sm:$0xff]
  %v96 = vld [vmem:[%s3 + $0x20] sm:$0xf]
  %v97 = vld [vmem:[%s3 + $0x24] sm:$0xff]
  %v98 = vld [vmem:[%s3 + $0x2c] sm:$0xf]
  %v99 = vld [vmem:[%s3 + $0x30] sm:$0xff]
  %v100 = vld [vmem:[%s3 + $0x38] sm:$0xf]
  %v101 = vld [vmem:[%s3 + $0x3c] sm:$0xff]
  %v102 = vld [vmem:[%s3 + $0x44] sm:$0xf]
  %v103 = vld [vmem:[%s3 + $0x48] sm:$0xff]
  %v104 = vld [vmem:[%s3 + $0x50] sm:$0xf]
  %v105 = vld [vmem:[%s3 + $0x54] sm:$0xff]
  %v106 = vld [vmem:[%s3 + $0x5c] sm:$0xf]
  %v107 = vld [vmem:[%s3 + $0x60] sm:$0xff]
  %v108 = vld [vmem:[%s3 + $0x68] sm:$0xf]
  %v109 = vld [vmem:[%s3 + $0x6c] sm:$0xff]
  %v110 = vld [vmem:[%s3 + $0x74] sm:$0xf]
  %v111 = vld [vmem:[%s3 + $0x78] sm:$0xff]
  %v112 = vld [vmem:[%s3 + $0x80] sm:$0xf]
  %v113 = vld [vmem:[%s3 + $0x84] sm:$0xff]
  %v114 = vld [vmem:[%s3 + $0x8c] sm:$0xf]
  %v115 = vld [vmem:[%s3 + $0x90] sm:$0xff]
  %v116 = vld [vmem:[%s3 + $0x98] sm:$0xf]
  %v117 = vld [vmem:[%s3 + $0x9c] sm:$0xff]
  %v118 = vld [vmem:[%s3 + $0xa4] sm:$0xf]
  %v119 = vld [vmem:[%s3 + $0xa8] sm:$0xff]
  %v120 = vld [vmem:[%s3 + $0xb0] sm:$0xf]
  %v121 = vld [vmem:[%s3 + $0xb4] sm:$0xff]
  %v122 = vld [vmem:[%s3 + $0xbc] sm:$0xf]
  %v155 = vunpack.c.l.b16 %v91
  %v156 = vunpack.c.h.b16 %v91
  %v157 = vunpack.c.l.b16 %v92
  %v158 = vunpack.c.l.b16 %v93
  %v159 = vunpack.c.h.b16 %v93
  %v160 = vunpack.c.l.b16 %v94
  %v161 = vunpack.c.l.b16 %v95
  %v162 = vunpack.c.h.b16 %v95
  %v163 = vunpack.c.l.b16 %v96
  %v164 = vunpack.c.l.b16 %v97
  %v165 = vunpack.c.h.b16 %v97
  %v166 = vunpack.c.l.b16 %v98
  %v167 = vunpack.c.l.b16 %v99
  %v168 = vunpack.c.h.b16 %v99
  %v169 = vunpack.c.l.b16 %v100
  %v170 = vunpack.c.l.b16 %v101
  %v171 = vunpack.c.h.b16 %v101
  %v172 = vunpack.c.l.b16 %v102
  %v173 = vunpack.c.l.b16 %v103
  %v174 = vunpack.c.h.b16 %v103
  %v175 = vunpack.c.l.b16 %v104
  %v176 = vunpack.c.l.b16 %v105
  %v177 = vunpack.c.h.b16 %v105
  %v178 = vunpack.c.l.b16 %v106
  %v179 = vunpack.c.l.b16 %v107
  %v180 = vunpack.c.h.b16 %v107
  %v181 = vunpack.c.l.b16 %v108
  %v182 = vunpack.c.l.b16 %v109
  %v183 = vunpack.c.h.b16 %v109
  %v184 = vunpack.c.l.b16 %v110
  %v185 = vunpack.c.l.b16 %v111
  %v186 = vunpack.c.h.b16 %v111
  %v187 = vunpack.c.l.b16 %v112
  %v188 = vunpack.c.l.b16 %v113
  %v189 = vunpack.c.h.b16 %v113
  %v190 = vunpack.c.l.b16 %v114
  %v191 = vunpack.c.l.b16 %v115
  %v192 = vunpack.c.h.b16 %v115
  %v193 = vunpack.c.l.b16 %v116
  %v194 = vunpack.c.l.b16 %v117
  %v195 = vunpack.c.h.b16 %v117
  %v196 = vunpack.c.l.b16 %v118
  %v197 = vunpack.c.l.b16 %v119
  %v198 = vunpack.c.h.b16 %v119
  %v199 = vunpack.c.l.b16 %v120
  %v200 = vunpack.c.l.b16 %v121
  %v201 = vunpack.c.h.b16 %v121
  %v202 = vunpack.c.l.b16 %v122
  %v203 = vpack.c.b16 %v158, %v155
  %v204 = vpack.c.b16 %v159, %v156
  %v205 = vpack.c.b16 %v160, %v157
  %v206 = vpack.c.b16 %v164, %v161
  %v207 = vpack.c.b16 %v165, %v162
  %v208 = vpack.c.b16 %v166, %v163
  %v209 = vpack.c.b16 %v170, %v167
  %v210 = vpack.c.b16 %v171, %v168
  %v211 = vpack.c.b16 %v172, %v169
  %v212 = vpack.c.b16 %v176, %v173
  %v213 = vpack.c.b16 %v177, %v174
  %v214 = vpack.c.b16 %v178, %v175
  %v215 = vpack.c.b16 %v182, %v179
  %v216 = vpack.c.b16 %v183, %v180
  %v217 = vpack.c.b16 %v184, %v181
  %v218 = vpack.c.b16 %v188, %v185
  %v219 = vpack.c.b16 %v189, %v186
  %v220 = vpack.c.b16 %v190, %v187
  %v221 = vpack.c.b16 %v194, %v191
  %v222 = vpack.c.b16 %v195, %v192
  %v223 = vpack.c.b16 %v196, %v193
  %v224 = vpack.c.b16 %v200, %v197
  %v225 = vpack.c.b16 %v201, %v198
  %v226 = vpack.c.b16 %v202, %v199
  %251 = vmatprep.subr.bf16.mxu0 %v204
  %252 = vmatpush1.bf16.msra.mxu0 %v203
  %253 = vmatprep.subr.bf16.mxu0 %v207
  %254 = vmatpush1.bf16.msra.mxu0 %v206
  %255 = vmatprep.subr.bf16.mxu0 %v210
  %256 = vmatpush1.bf16.msra.mxu0 %v209
  %257 = vmatprep.subr.bf16.mxu0 %v213
  %258 = vmatpush1.bf16.msra.mxu0 %v212
  %259 = vmatprep.subr.bf16.mxu0 %v216
  %260 = vmatpush1.bf16.msra.mxu0 %v215
  %261 = vmatprep.subr.bf16.mxu0 %v219
  %262 = vmatpush1.bf16.msra.mxu0 %v218
  %263 = vmatprep.subr.bf16.mxu0 %v222
  %264 = vmatpush1.bf16.msra.mxu0 %v221
  %265 = vmatprep.subr.bf16.mxu0 %v225
  %266 = vmatpush1.bf16.msra.mxu0 %v224
  %267 = vmatprep.subr.bf16.mxu0 0
  %268 = vmatpush1.bf16.msra.mxu0 0
  %269 = vmatprep.subr.bf16.mxu0 0
  %270 = vmatpush1.bf16.msra.mxu0 0
  %271 = vmatprep.subr.bf16.mxu0 0
  %272 = vmatpush1.bf16.msra.mxu0 0
  %273 = vmatprep.subr.bf16.mxu0 0
  %274 = vmatpush1.bf16.msra.mxu0 0
  %275 = vmatprep.subr.bf16.mxu0 0
  %276 = vmatpush1.bf16.msra.mxu0 0
  %277 = vmatprep.subr.bf16.mxu0 0
  %278 = vmatpush1.bf16.msra.mxu0 0
  %279 = vmatprep.subr.bf16.mxu0 0
  %280 = vmatpush1.bf16.msra.mxu0 0
  %281 = vmatprep.subr.bf16.mxu0 0
  %282 = vmatpush1.bf16.msra.mxu0 0
  %283 = vmatprep.mubr.bf16.mxu0 0
  %284 = vmatmul.mubr.bf16.gmra.mrb[0].mxu0 %v89
  %v285 = vpop.f32.mrb[0].mxu0
  %v286 = vadd.f32 0.0, %v285
  %v287 = vpop.f32.mrb[0].mxu0
  %v288 = vadd.f32 0.0, %v287
  %v289 = vpop.f32.mrb[0].mxu0
  %v290 = vadd.f32 0.0, %v289
  %v291 = vpop.f32.mrb[0].mxu0
  %v292 = vadd.f32 0.0, %v291
  %293 = vmatprep.mubr.bf16.mxu0 0
  %294 = vmatmul.mubr.bf16.gmra.mrb[0].mxu0 %v90
  %v295 = vpop.f32.mrb[0].mxu0
  %v296 = vadd.f32 0.0, %v295
  %v297 = vpop.f32.mrb[0].mxu0
  %v298 = vadd.f32 0.0, %v297
  %v299 = vpop.f32.mrb[0].mxu0
  %v300 = vadd.f32 0.0, %v299
  %v301 = vpop.f32.mrb[0].mxu0
  %v302 = vadd.f32 0.0, %v301
  %303 = vdwg.mxu0
  %304 = vmatprep.subr.bf16.mxu0 0
  %305 = vmatpush1.bf16.msra.mxu0 %v205
  %306 = vmatprep.subr.bf16.mxu0 0
  %307 = vmatpush1.bf16.msra.mxu0 %v208
  %308 = vmatprep.subr.bf16.mxu0 0
  %309 = vmatpush1.bf16.msra.mxu0 %v211
  %310 = vmatprep.subr.bf16.mxu0 0
  %311 = vmatpush1.bf16.msra.mxu0 %v214
  %312 = vmatprep.subr.bf16.mxu0 0
  %313 = vmatpush1.bf16.msra.mxu0 %v217
  %314 = vmatprep.subr.bf16.mxu0 0
  %315 = vmatpush1.bf16.msra.mxu0 %v220
  %316 = vmatprep.subr.bf16.mxu0 0
  %317 = vmatpush1.bf16.msra.mxu0 %v223
  %318 = vmatprep.subr.bf16.mxu0 0
  %319 = vmatpush1.bf16.msra.mxu0 %v226
  %320 = vmatprep.subr.bf16.mxu0 0
  %321 = vmatpush1.bf16.msra.mxu0 0
  %322 = vmatprep.subr.bf16.mxu0 0
  %323 = vmatpush1.bf16.msra.mxu0 0
  %324 = vmatprep.subr.bf16.mxu0 0
  %325 = vmatpush1.bf16.msra.mxu0 0
  %326 = vmatprep.subr.bf16.mxu0 0
  %327 = vmatpush1.bf16.msra.mxu0 0
  %328 = vmatprep.subr.bf16.mxu0 0
  %329 = vmatpush1.bf16.msra.mxu0 0
  %330 = vmatprep.subr.bf16.mxu0 0
  %331 = vmatpush1.bf16.msra.mxu0 0
  %332 = vmatprep.subr.bf16.mxu0 0
  %333 = vmatpush1.bf16.msra.mxu0 0
  %334 = vmatprep.subr.bf16.mxu0 0
  %335 = vmatpush1.bf16.msra.mxu0 0
  %336 = vmatprep.mubr.bf16.mxu0 0
  %337 = vmatmul.mubr.bf16.gmra.mrb[0].mxu0 %v89
  %v338 = vpop.f32.mrb[0].mxu0
  %v339 = vadd.f32 0.0, %v338
  %v340 = vpop.f32.mrb[0].mxu0
  %v341 = vpop.f32.mrb[0].mxu0
  %v342 = vadd.f32 0.0, %v341
  %v343 = vpop.f32.mrb[0].mxu0
  %344 = vmatprep.mubr.bf16.mxu0 0
  %345 = vmatmul.mubr.bf16.gmra.mrb[0].mxu0 %v90
  %v346 = vpop.f32.mrb[0].mxu0
  %v347 = vadd.f32 0.0, %v346
  %v348 = vpop.f32.mrb[0].mxu0
  %v349 = vpop.f32.mrb[0].mxu0
  %v350 = vadd.f32 0.0, %v349
  %v351 = vpop.f32.mrb[0].mxu0
  %352 = vdwg.mxu0
  %353 = vst [vmem:[%s4] sm:$0xff] %v286
  %354 = vst [vmem:[%s4 + $0x8] sm:$0xff] %v288
  %355 = vst [vmem:[%s4 + $0x10] sm:$0xff] %v339
  %356 = vst [vmem:[%s4 + $0x18] sm:$0xff] %v290
  %357 = vst [vmem:[%s4 + $0x20] sm:$0xff] %v292
  %358 = vst [vmem:[%s4 + $0x28] sm:$0xff] %v342
  %359 = vst [vmem:[%s4 + $0x30] sm:$0xff] %v296
  %360 = vst [vmem:[%s4 + $0x38] sm:$0xff] %v298
  %361 = vst [vmem:[%s4 + $0x40] sm:$0xff] %v347
  %362 = vst [vmem:[%s4 + $0x48] sm:$0xff] %v300
  %363 = vst [vmem:[%s4 + $0x50] sm:$0xff] %v302
  %364 = vst [vmem:[%s4 + $0x58] sm:$0xff] %v350
  // Predicated region
  $region18: #{encoder_forward.15} parent=0 // pred_check
    _
  $region19: #{encoder_forward.15} parent=0 // pred_check_branch
    %366 = sbr.rel (0) target = $region21
  $region20: #{encoder_forward.15} parent=0 // pred_region
    _
  $region21: #{encoder_forward.15} parent=0 // pred_fallthru
    _
  // Predicated region
  $region22: #{encoder_forward.15} parent=0 // pred_check
    _
  $region23: #{encoder_forward.15} parent=0 // pred_check_branch
    %368 = sbr.rel (0) target = $region25
  $region24: #{encoder_forward.15} parent=0 // pred_region
    _
  $region25: #{encoder_forward.15} parent=0 // pred_fallthru
    _

// kernel: encoder_forward.14
$region0: #{encoder_forward.14}
  #allocation0 [shape = 'u32[]', space=smem, size = 0x4, offset = 0x4, fixed_abs, tag = 'smem constant byte address 0x4 - core index']
  #allocation1 [shape = 'u32[144,128]{1,0:T(1,128)}', space=vmem, size = 0x12000, scoped, tag = 'internal scratch']
  %s0 = inlined_call_operand.vmem [shape: f32[64,384], index: 0, kind: input, shape index: {}]
  %s1 = inlined_call_operand.vmem [shape: bf16[384,128], index: 1, kind: input, shape index: {}]
  %s2 = inlined_call_operand.vmem [shape: f32[1,128], index: 2, kind: input, shape index: {}]
  %s3 = inlined_call_operand.vmem [shape: f32[1,128], index: 3, kind: input, shape index: {}]
  %s4 = inlined_call_operand.vmem [shape: f32[64,128], index: 4, kind: output, shape index: {}]
  %s5 = sld [smem:[#allocation0]]
  $region26: #{encoder_forward.14} parent=0
    _
  %s7 = ssub.s32 1, %s5
  %s8 = scalar_select 0, %s7, %s5
  // Predicated region
  $region2: #{encoder_forward.14} parent=0 // pred_check
    _
  $region3: #{encoder_forward.14} parent=0 // pred_check_branch
    %10 = sbr.rel (0) target = $region5
  $region4: #{encoder_forward.14} parent=0 // pred_region
    _
  $region5: #{encoder_forward.14} parent=0 // pred_fallthru
    _
  // Predicated region
  $region6: #{encoder_forward.14} parent=0 // pred_check
    _
  $region7: #{encoder_forward.14} parent=0 // pred_check_branch
    %12 = sbr.rel (0) target = $region9
  $region8: #{encoder_forward.14} parent=0 // pred_region
    _
  $region9: #{encoder_forward.14} parent=0 // pred_fallthru
    _
  // Predicated region
  $region10: #{encoder_forward.14} parent=0 // pred_check
    _
  $region11: #{encoder_forward.14} parent=0 // pred_check_branch
    %14 = sbr.rel (0) target = $region13
  $region12: #{encoder_forward.14} parent=0 // pred_region
    _
  $region13: #{encoder_forward.14} parent=0 // pred_fallthru
    _
  // Predicated region
  $region14: #{encoder_forward.14} parent=0 // pred_check
    _
  $region15: #{encoder_forward.14} parent=0 // pred_check_branch
    %16 = sbr.rel (0) target = $region17
  $region16: #{encoder_forward.14} parent=0 // pred_region
    _
  $region17: #{encoder_forward.14} parent=0 // pred_fallthru
    _
  %v18 = vld [vmem:[%s0] sm:$0xff]
  %v19 = vld [vmem:[%s0 + $0x8] sm:$0xff]
  %v20 = vld [vmem:[%s0 + $0x10] sm:$0xff]
  %v21 = vld [vmem:[%s0 + $0x18] sm:$0xff]
  %v22 = vld [vmem:[%s0 + $0x20] sm:$0xff]
  %v23 = vld [vmem:[%s0 + $0x28] sm:$0xff]
  %v24 = vld [vmem:[%s0 + $0x30] sm:$0xff]
  %v25 = vld [vmem:[%s0 + $0x38] sm:$0xff]
  %v26 = vld [vmem:[%s0 + $0x40] sm:$0xff]
  %v27 = vld [vmem:[%s0 + $0x48] sm:$0xff]
  %v28 = vld [vmem:[%s0 + $0x50] sm:$0xff]
  %v29 = vld [vmem:[%s0 + $0x58] sm:$0xff]
  %v30 = vld [vmem:[%s0 + $0x60] sm:$0xff]
  %v31 = vld [vmem:[%s0 + $0x68] sm:$0xff]
  %v32 = vld [vmem:[%s0 + $0x70] sm:$0xff]
  %v33 = vld [vmem:[%s0 + $0x78] sm:$0xff]
  %v34 = vld [vmem:[%s0 + $0x80] sm:$0xff]
  %v35 = vld [vmem:[%s0 + $0x88] sm:$0xff]
  %v36 = vld [vmem:[%s0 + $0x90] sm:$0xff]
  %v37 = vld [vmem:[%s0 + $0x98] sm:$0xff]
  %v38 = vld [vmem:[%s0 + $0xa0] sm:$0xff]
  %v39 = vld [vmem:[%s0 + $0xa8] sm:$0xff]
  %v40 = vld [vmem:[%s0 + $0xb0] sm:$0xff]
  %v41 = vld [vmem:[%s0 + $0xb8] sm:$0xff]
  %v42 = vpack.c.bf16 %v21, %v18
  %v43 = vpack.c.bf16 %v22, %v19
  %v44 = vpack.c.bf16 %v23, %v20
  %v45 = vpack.c.bf16 %v27, %v24
  %v46 = vpack.c.bf16 %v28, %v25
  %v47 = vpack.c.bf16 %v29, %v26
  %v48 = vpack.c.bf16 %v33, %v30
  %v49 = vpack.c.bf16 %v34, %v31
  %v50 = vpack.c.bf16 %v35, %v32
  %v51 = vpack.c.bf16 %v39, %v36
  %v52 = vpack.c.bf16 %v40, %v37
  %v53 = vpack.c.bf16 %v41, %v38
  %v54 = vld [vmem:[%s1] sm:$0xf]
  %v55 = vld [vmem:[%s1 + $0x4] sm:$0xf]
  %v56 = vld [vmem:[%s1 + $0x8] sm:$0xf]
  %v57 = vld [vmem:[%s1 + $0xc] sm:$0xf]
  %v58 = vld [vmem:[%s1 + $0x10] sm:$0xf]
  %v59 = vld [vmem:[%s1 + $0x14] sm:$0xf]
  %v60 = vld [vmem:[%s1 + $0x18] sm:$0xf]
  %v61 = vld [vmem:[%s1 + $0x1c] sm:$0xf]
  %v62 = vld [vmem:[%s1 + $0x20] sm:$0xf]
  %v63 = vld [vmem:[%s1 + $0x24] sm:$0xf]
  %v64 = vld [vmem:[%s1 + $0x28] sm:$0xf]
  %v65 = vld [vmem:[%s1 + $0x2c] sm:$0xf]
  %v66 = vld [vmem:[%s1 + $0x30] sm:$0xf]
  %v67 = vld [vmem:[%s1 + $0x34] sm:$0xf]
  %v68 = vld [vmem:[%s1 + $0x38] sm:$0xf]
  %v69 = vld [vmem:[%s1 + $0x3c] sm:$0xf]
  %v70 = vld [vmem:[%s1 + $0x40] sm:$0xf]
  %v71 = vld [vmem:[%s1 + $0x44] sm:$0xf]
  %v72 = vld [vmem:[%s1 + $0x48] sm:$0xf]
  %v73 = vld [vmem:[%s1 + $0x4c] sm:$0xf]
  %v74 = vld [vmem:[%s1 + $0x50] sm:$0xf]
  %v75 = vld [vmem:[%s1 + $0x54] sm:$0xf]
  %v76 = vld [vmem:[%s1 + $0x58] sm:$0xf]
  %v77 = vld [vmem:[%s1 + $0x5c] sm:$0xf]
  %v78 = vld [vmem:[%s1 + $0x60] sm:$0xf]
  %v79 = vld [vmem:[%s1 + $0x64] sm:$0xf]
  %v80 = vld [vmem:[%s1 + $0x68] sm:$0xf]
  %v81 = vld [vmem:[%s1 + $0x6c] sm:$0xf]
  %v82 = vld [vmem:[%s1 + $0x70] sm:$0xf]
  %v83 = vld [vmem:[%s1 + $0x74] sm:$0xf]
  %v84 = vld [vmem:[%s1 + $0x78] sm:$0xf]
  %v85 = vld [vmem:[%s1 + $0x7c] sm:$0xf]
  %v86 = vld [vmem:[%s1 + $0x80] sm:$0xf]
  %v87 = vld [vmem:[%s1 + $0x84] sm:$0xf]
  %v88 = vld [vmem:[%s1 + $0x88] sm:$0xf]
  %v89 = vld [vmem:[%s1 + $0x8c] sm:$0xf]
  %v90 = vld [vmem:[%s1 + $0x90] sm:$0xf]
  %v91 = vld [vmem:[%s1 + $0x94] sm:$0xf]
  %v92 = vld [vmem:[%s1 + $0x98] sm:$0xf]
  %v93 = vld [vmem:[%s1 + $0x9c] sm:$0xf]
  %v94 = vld [vmem:[%s1 + $0xa0] sm:$0xf]
  %v95 = vld [vmem:[%s1 + $0xa4] sm:$0xf]
  %v96 = vld [vmem:[%s1 + $0xa8] sm:$0xf]
  %v97 = vld [vmem:[%s1 + $0xac] sm:$0xf]
  %v98 = vld [vmem:[%s1 + $0xb0] sm:$0xf]
  %v99 = vld [vmem:[%s1 + $0xb4] sm:$0xf]
  %v100 = vld [vmem:[%s1 + $0xb8] sm:$0xf]
  %v101 = vld [vmem:[%s1 + $0xbc] sm:$0xf]
  %v150 = vunpack.c.l.b16 %v54
  %v151 = vunpack.c.l.b16 %v55
  %v152 = vunpack.c.l.b16 %v56
  %v153 = vunpack.c.l.b16 %v57
  %v154 = vunpack.c.l.b16 %v58
  %v155 = vunpack.c.l.b16 %v59
  %v156 = vunpack.c.l.b16 %v60
  %v157 = vunpack.c.l.b16 %v61
  %v158 = vunpack.c.l.b16 %v62
  %v159 = vunpack.c.l.b16 %v63
  %v160 = vunpack.c.l.b16 %v64
  %v161 = vunpack.c.l.b16 %v65
  %v162 = vunpack.c.l.b16 %v66
  %v163 = vunpack.c.l.b16 %v67
  %v164 = vunpack.c.l.b16 %v68
  %v165 = vunpack.c.l.b16 %v69
  %v166 = vunpack.c.l.b16 %v70
  %v167 = vunpack.c.l.b16 %v71
  %v168 = vunpack.c.l.b16 %v72
  %v169 = vunpack.c.l.b16 %v73
  %v170 = vunpack.c.l.b16 %v74
  %v171 = vunpack.c.l.b16 %v75
  %v172 = vunpack.c.l.b16 %v76
  %v173 = vunpack.c.l.b16 %v77
  %v174 = vunpack.c.l.b16 %v78
  %v175 = vunpack.c.l.b16 %v79
  %v176 = vunpack.c.l.b16 %v80
  %v177 = vunpack.c.l.b16 %v81
  %v178 = vunpack.c.l.b16 %v82
  %v179 = vunpack.c.l.b16 %v83
  %v180 = vunpack.c.l.b16 %v84
  %v181 = vunpack.c.l.b16 %v85
  %v182 = vunpack.c.l.b16 %v86
  %v183 = vunpack.c.l.b16 %v87
  %v184 = vunpack.c.l.b16 %v88
  %v185 = vunpack.c.l.b16 %v89
  %v186 = vunpack.c.l.b16 %v90
  %v187 = vunpack.c.l.b16 %v91
  %v188 = vunpack.c.l.b16 %v92
  %v189 = vunpack.c.l.b16 %v93
  %v190 = vunpack.c.l.b16 %v94
  %v191 = vunpack.c.l.b16 %v95
  %v192 = vunpack.c.l.b16 %v96
  %v193 = vunpack.c.l.b16 %v97
  %v194 = vunpack.c.l.b16 %v98
  %v195 = vunpack.c.l.b16 %v99
  %v196 = vunpack.c.l.b16 %v100
  %v197 = vunpack.c.l.b16 %v101
  %v198 = vpack.c.b16 %v151, %v150
  %v199 = vpack.c.b16 %v153, %v152
  %v200 = vpack.c.b16 %v155, %v154
  %v201 = vpack.c.b16 %v157, %v156
  %v202 = vpack.c.b16 %v159, %v158
  %v203 = vpack.c.b16 %v161, %v160
  %v204 = vpack.c.b16 %v163, %v162
  %v205 = vpack.c.b16 %v165, %v164
  %v206 = vpack.c.b16 %v167, %v166
  %v207 = vpack.c.b16 %v169, %v168
  %v208 = vpack.c.b16 %v171, %v170
  %v209 = vpack.c.b16 %v173, %v172
  %v210 = vpack.c.b16 %v175, %v174
  %v211 = vpack.c.b16 %v177, %v176
  %v212 = vpack.c.b16 %v179, %v178
  %v213 = vpack.c.b16 %v181, %v180
  %v214 = vpack.c.b16 %v183, %v182
  %v215 = vpack.c.b16 %v185, %v184
  %v216 = vpack.c.b16 %v187, %v186
  %v217 = vpack.c.b16 %v189, %v188
  %v218 = vpack.c.b16 %v191, %v190
  %v219 = vpack.c.b16 %v193, %v192
  %v220 = vpack.c.b16 %v195, %v194
  %v221 = vpack.c.b16 %v197, %v196
  %246 = vmatprep.subr.bf16.mxu0 0
  %247 = vmatpush1.bf16.msra.mxu0 %v198
  %248 = vmatprep.subr.bf16.mxu0 0
  %249 = vmatpush1.bf16.msra.mxu0 %v199
  %250 = vmatprep.subr.bf16.mxu0 0
  %251 = vmatpush1.bf16.msra.mxu0 %v200
  %252 = vmatprep.subr.bf16.mxu0 0
  %253 = vmatpush1.bf16.msra.mxu0 %v201
  %254 = vmatprep.subr.bf16.mxu0 0
  %255 = vmatpush1.bf16.msra.mxu0 %v202
  %256 = vmatprep.subr.bf16.mxu0 0
  %257 = vmatpush1.bf16.msra.mxu0 %v203
  %258 = vmatprep.subr.bf16.mxu0 0
  %259 = vmatpush1.bf16.msra.mxu0 %v204
  %260 = vmatprep.subr.bf16.mxu0 0
  %261 = vmatpush1.bf16.msra.mxu0 %v205
  %262 = vmatprep.subr.bf16.mxu0 0
  %263 = vmatpush1.bf16.msra.mxu0 %v206
  %264 = vmatprep.subr.bf16.mxu0 0
  %265 = vmatpush1.bf16.msra.mxu0 %v207
  %266 = vmatprep.subr.bf16.mxu0 0
  %267 = vmatpush1.bf16.msra.mxu0 %v208
  %268 = vmatprep.subr.bf16.mxu0 0
  %269 = vmatpush1.bf16.msra.mxu0 %v209
  %270 = vmatprep.subr.bf16.mxu0 0
  %271 = vmatpush1.bf16.msra.mxu0 %v210
  %272 = vmatprep.subr.bf16.mxu0 0
  %273 = vmatpush1.bf16.msra.mxu0 %v211
  %274 = vmatprep.subr.bf16.mxu0 0
  %275 = vmatpush1.bf16.msra.mxu0 %v212
  %276 = vmatprep.subr.bf16.mxu0 0
  %277 = vmatpush1.bf16.msra.mxu0 %v213
  %278 = vmatprep.mubr.bf16.mxu0 %v43
  %279 = vmatmul.mubr.bf16.gmra.mrb[0].mxu0 %v42
  %v280 = vpop.f32.mrb[0].mxu0
  %v281 = vadd.f32 0.0, %v280
  %v282 = vpop.f32.mrb[0].mxu0
  %v283 = vpop.f32.mrb[0].mxu0
  %v284 = vadd.f32 0.0, %v283
  %v285 = vpop.f32.mrb[0].mxu0
  %286 = vmatprep.mubr.bf16.mxu0 %v46
  %287 = vmatmul.mubr.bf16.gmra.mrb[0].mxu0 %v45
  %v288 = vpop.f32.mrb[0].mxu0
  %v289 = vadd.f32 0.0, %v288
  %v290 = vpop.f32.mrb[0].mxu0
  %v291 = vpop.f32.mrb[0].mxu0
  %v292 = vadd.f32 0.0, %v291
  %v293 = vpop.f32.mrb[0].mxu0
  %294 = vmatprep.mubr.bf16.mxu0 %v49
  %295 = vmatmul.mubr.bf16.gmra.mrb[0].mxu0 %v48
  %v296 = vpop.f32.mrb[0].mxu0
  %v297 = vadd.f32 0.0, %v296
  %v298 = vpop.f32.mrb[0].mxu0
  %v299 = vpop.f32.mrb[0].mxu0
  %v300 = vadd.f32 0.0, %v299
  %v301 = vpop.f32.mrb[0].mxu0
  %302 = vmatprep.mubr.bf16.mxu0 %v52
  %303 = vmatmul.mubr.bf16.gmra.mrb[0].mxu0 %v51
  %v304 = vpop.f32.mrb[0].mxu0
  %v305 = vadd.f32 0.0, %v304
  %v306 = vpop.f32.mrb[0].mxu0
  %v307 = vpop.f32.mrb[0].mxu0
  %v308 = vadd.f32 0.0, %v307
  %v309 = vpop.f32.mrb[0].mxu0
  %310 = vdwg.mxu0
  %311 = vmatprep.subr.bf16.mxu0 0
  %312 = vmatpush1.bf16.msra.mxu0 %v214
  %313 = vmatprep.subr.bf16.mxu0 0
  %314 = vmatpush1.bf16.msra.mxu0 %v215
  %315 = vmatprep.subr.bf16.mxu0 0
  %316 = vmatpush1.bf16.msra.mxu0 %v216
  %317 = vmatprep.subr.bf16.mxu0 0
  %318 = vmatpush1.bf16.msra.mxu0 %v217
  %319 = vmatprep.subr.bf16.mxu0 0
  %320 = vmatpush1.bf16.msra.mxu0 %v218
  %321 = vmatprep.subr.bf16.mxu0 0
  %322 = vmatpush1.bf16.msra.mxu0 %v219
  %323 = vmatprep.subr.bf16.mxu0 0
  %324 = vmatpush1.bf16.msra.mxu0 %v220
  %325 = vmatprep.subr.bf16.mxu0 0
  %326 = vmatpush1.bf16.msra.mxu0 %v221
  %327 = vmatprep.subr.bf16.mxu0 0
  %328 = vmatpush1.bf16.msra.mxu0 0
  %329 = vmatprep.subr.bf16.mxu0 0
  %330 = vmatpush1.bf16.msra.mxu0 0
  %331 = vmatprep.subr.bf16.mxu0 0
  %332 = vmatpush1.bf16.msra.mxu0 0
  %333 = vmatprep.subr.bf16.mxu0 0
  %334 = vmatpush1.bf16.msra.mxu0 0
  %335 = vmatprep.subr.bf16.mxu0 0
  %336 = vmatpush1.bf16.msra.mxu0 0
  %337 = vmatprep.subr.bf16.mxu0 0
  %338 = vmatpush1.bf16.msra.mxu0 0
  %339 = vmatprep.subr.bf16.mxu0 0
  %340 = vmatpush1.bf16.msra.mxu0 0
  %341 = vmatprep.subr.bf16.mxu0 0
  %342 = vmatpush1.bf16.msra.mxu0 0
  %343 = vmatprep.mubr.bf16.mxu0 0
  %344 = vmatmul.mubr.bf16.gmra.mrb[0].mxu0 %v44
  %v345 = vpop.f32.mrb[0].mxu0
  %v346 = vadd.f32 %v281, %v345
  %v347 = vpop.f32.mrb[0].mxu0
  %v348 = vpop.f32.mrb[0].mxu0
  %v349 = vadd.f32 %v284, %v348
  %v350 = vpop.f32.mrb[0].mxu0
  %351 = vmatprep.mubr.bf16.mxu0 0
  %352 = vmatmul.mubr.bf16.gmra.mrb[0].mxu0 %v47
  %v353 = vpop.f32.mrb[0].mxu0
  %v354 = vadd.f32 %v289, %v353
  %v355 = vpop.f32.mrb[0].mxu0
  %v356 = vpop.f32.mrb[0].mxu0
  %v357 = vadd.f32 %v292, %v356
  %v358 = vpop.f32.mrb[0].mxu0
  %359 = vmatprep.mubr.bf16.mxu0 0
  %360 = vmatmul.mubr.bf16.gmra.mrb[0].mxu0 %v50
  %v361 = vpop.f32.mrb[0].mxu0
  %v362 = vadd.f32 %v297, %v361
  %v363 = vpop.f32.mrb[0].mxu0
  %v364 = vpop.f32.mrb[0].mxu0
  %v365 = vadd.f32 %v300, %v364
  %v366 = vpop.f32.mrb[0].mxu0
  %367 = vmatprep.mubr.bf16.mxu0 0
  %368 = vmatmul.mubr.bf16.gmra.mrb[0].mxu0 %v53
  %v369 = vpop.f32.mrb[0].mxu0
  %v370 = vadd.f32 %v305, %v369
  %v371 = vpop.f32.mrb[0].mxu0
  %v372 = vpop.f32.mrb[0].mxu0
  %v373 = vadd.f32 %v308, %v372
  %v374 = vpop.f32.mrb[0].mxu0
  %375 = vdwg.mxu0
  %v376 = vld [vmem:[%s2] sm:$0x1]
  %v378 = vlaneseq
  %v379 = vshrl.u32 %v378, 7
  %v380 = vsub.s32 0, %v379
  %v381 = vrot.slane %v376, %v380
  %v383 = vmul.f32 %v346, %v381
  %v384 = vmul.f32 %v349, %v381
  %v385 = vmul.f32 %v354, %v381
  %v386 = vmul.f32 %v357, %v381
  %v387 = vmul.f32 %v362, %v381
  %v388 = vmul.f32 %v365, %v381
  %v389 = vmul.f32 %v370, %v381
  %v390 = vmul.f32 %v373, %v381
  %v391 = vld [vmem:[%s3] sm:$0x1]
  %v393 = vlaneseq
  %v394 = vshrl.u32 %v393, 7
  %v395 = vsub.s32 0, %v394
  %v396 = vrot.slane %v391, %v395
  %v398 = vadd.f32 %v383, %v396
  %v399 = vadd.f32 %v384, %v396
  %v400 = vadd.f32 %v385, %v396
  %v401 = vadd.f32 %v386, %v396
  %v402 = vadd.f32 %v387, %v396
  %v403 = vadd.f32 %v388, %v396
  %v404 = vadd.f32 %v389, %v396
  %v405 = vadd.f32 %v390, %v396
  %v406 = vmax.f32 %v398, 0.0
  %v407 = vmax.f32 %v399, 0.0
  %v408 = vmax.f32 %v400, 0.0
  %v409 = vmax.f32 %v401, 0.0
  %v410 = vmax.f32 %v402, 0.0
  %v411 = vmax.f32 %v403, 0.0
  %v412 = vmax.f32 %v404, 0.0
  %v413 = vmax.f32 %v405, 0.0
  %414 = vst [vmem:[%s4] sm:$0xff] %v406
  %415 = vst [vmem:[%s4 + $0x8] sm:$0xff] %v407
  %416 = vst [vmem:[%s4 + $0x10] sm:$0xff] %v408
  %417 = vst [vmem:[%s4 + $0x18] sm:$0xff] %v409
  %418 = vst [vmem:[%s4 + $0x20] sm:$0xff] %v410
  %419 = vst [vmem:[%s4 + $0x28] sm:$0xff] %v411
  %420 = vst [vmem:[%s4 + $0x30] sm:$0xff] %v412
  %421 = vst [vmem:[%s4 + $0x38] sm:$0xff] %v413
  // Predicated region
  $region18: #{encoder_forward.14} parent=0 // pred_check
    _
  $region19: #{encoder_forward.14} parent=0 // pred_check_branch
    %423 = sbr.rel (0) target = $region21
  $region20: #{encoder_forward.14} parent=0 // pred_region
    _
  $region21: #{encoder_forward.14} parent=0 // pred_fallthru
    _
  // Predicated region
  $region22: #{encoder_forward.14} parent=0 // pred_check
    _
  $region23: #{encoder_forward.14} parent=0 // pred_check_branch
    %425 = sbr.rel (0) target = $region25
  $region24: #{encoder_forward.14} parent=0 // pred_region
    _
  $region25: #{encoder_forward.14} parent=0 // pred_fallthru
    _

// kernel: encoder_forward.17
$region0: #{encoder_forward.17}
  #allocation0 [shape = 'u32[]', space=smem, size = 0x4, offset = 0x4, fixed_abs, tag = 'smem constant byte address 0x4 - core index']
  #allocation1 [shape = 'u32[144,128]{1,0:T(1,128)}', space=vmem, size = 0x12000, scoped, tag = 'internal scratch']
  %s0 = inlined_call_operand.vmem [shape: f32[32,128], index: 0, kind: input, shape index: {}]
  %s1 = inlined_call_operand.vmem [shape: bf16[128,128], index: 1, kind: input, shape index: {}]
  %s2 = inlined_call_operand.vmem [shape: f32[32,128], index: 2, kind: input, shape index: {}]
  %s3 = inlined_call_operand.vmem [shape: f32[32,128], index: 3, kind: output, shape index: {}]
  %s4 = sld [smem:[#allocation0]]
  $region22: #{encoder_forward.17} parent=0
    _
  %s6 = ssub.s32 1, %s4
  %s7 = scalar_select 0, %s6, %s4
  // Predicated region
  $region2: #{encoder_forward.17} parent=0 // pred_check
    _
  $region3: #{encoder_forward.17} parent=0 // pred_check_branch
    %9 = sbr.rel (0) target = $region5
  $region4: #{encoder_forward.17} parent=0 // pred_region
    _
  $region5: #{encoder_forward.17} parent=0 // pred_fallthru
    _
  // Predicated region
  $region6: #{encoder_forward.17} parent=0 // pred_check
    _
  $region7: #{encoder_forward.17} parent=0 // pred_check_branch
    %11 = sbr.rel (0) target = $region9
  $region8: #{encoder_forward.17} parent=0 // pred_region
    _
  $region9: #{encoder_forward.17} parent=0 // pred_fallthru
    _
  // Predicated region
  $region10: #{encoder_forward.17} parent=0 // pred_check
    _
  $region11: #{encoder_forward.17} parent=0 // pred_check_branch
    %13 = sbr.rel (0) target = $region13
  $region12: #{encoder_forward.17} parent=0 // pred_region
    _
  $region13: #{encoder_forward.17} parent=0 // pred_fallthru
    _
  %v15 = vld [vmem:[%s0] sm:$0xff]
  %v16 = vld [vmem:[%s0 + $0x8] sm:$0xff]
  %v17 = vld [vmem:[%s0 + $0x10] sm:$0xff]
  %v18 = vld [vmem:[%s0 + $0x18] sm:$0xff]
  %v19 = vpack.c.bf16 %v16, %v15
  %v20 = vpack.c.bf16 %v18, %v17
  %v21 = vld [vmem:[%s1] sm:$0xf]
  %v22 = vld [vmem:[%s1 + $0x4] sm:$0xf]
  %v23 = vld [vmem:[%s1 + $0x8] sm:$0xf]
  %v24 = vld [vmem:[%s1 + $0xc] sm:$0xf]
  %v25 = vld [vmem:[%s1 + $0x10] sm:$0xf]
  %v26 = vld [vmem:[%s1 + $0x14] sm:$0xf]
  %v27 = vld [vmem:[%s1 + $0x18] sm:$0xf]
  %v28 = vld [vmem:[%s1 + $0x1c] sm:$0xf]
  %v29 = vld [vmem:[%s1 + $0x20] sm:$0xf]
  %v30 = vld [vmem:[%s1 + $0x24] sm:$0xf]
  %v31 = vld [vmem:[%s1 + $0x28] sm:$0xf]
  %v32 = vld [vmem:[%s1 + $0x2c] sm:$0xf]
  %v33 = vld [vmem:[%s1 + $0x30] sm:$0xf]
  %v34 = vld [vmem:[%s1 + $0x34] sm:$0xf]
  %v35 = vld [vmem:[%s1 + $0x38] sm:$0xf]
  %v36 = vld [vmem:[%s1 + $0x3c] sm:$0xf]
  %v37 = vld [vmem:[%s2] sm:$0xff]
  %v38 = vld [vmem:[%s2 + $0x8] sm:$0xff]
  %v39 = vld [vmem:[%s2 + $0x10] sm:$0xff]
  %v40 = vld [vmem:[%s2 + $0x18] sm:$0xff]
  %v57 = vunpack.c.l.b16 %v21
  %v58 = vunpack.c.l.b16 %v22
  %v59 = vunpack.c.l.b16 %v23
  %v60 = vunpack.c.l.b16 %v24
  %v61 = vunpack.c.l.b16 %v25
  %v62 = vunpack.c.l.b16 %v26
  %v63 = vunpack.c.l.b16 %v27
  %v64 = vunpack.c.l.b16 %v28
  %v65 = vunpack.c.l.b16 %v29
  %v66 = vunpack.c.l.b16 %v30
  %v67 = vunpack.c.l.b16 %v31
  %v68 = vunpack.c.l.b16 %v32
  %v69 = vunpack.c.l.b16 %v33
  %v70 = vunpack.c.l.b16 %v34
  %v71 = vunpack.c.l.b16 %v35
  %v72 = vunpack.c.l.b16 %v36
  %v73 = vpack.c.b16 %v58, %v57
  %v74 = vpack.c.b16 %v60, %v59
  %v75 = vpack.c.b16 %v62, %v61
  %v76 = vpack.c.b16 %v64, %v63
  %v77 = vpack.c.b16 %v66, %v65
  %v78 = vpack.c.b16 %v68, %v67
  %v79 = vpack.c.b16 %v70, %v69
  %v80 = vpack.c.b16 %v72, %v71
  %89 = vmatprep.subr.bf16.mxu0 0
  %90 = vmatpush1.bf16.msra.mxu0 %v73
  %91 = vmatprep.subr.bf16.mxu0 0
  %92 = vmatpush1.bf16.msra.mxu0 %v74
  %93 = vmatprep.subr.bf16.mxu0 0
  %94 = vmatpush1.bf16.msra.mxu0 %v75
  %95 = vmatprep.subr.bf16.mxu0 0
  %96 = vmatpush1.bf16.msra.mxu0 %v76
  %97 = vmatprep.subr.bf16.mxu0 0
  %98 = vmatpush1.bf16.msra.mxu0 %v77
  %99 = vmatprep.subr.bf16.mxu0 0
  %100 = vmatpush1.bf16.msra.mxu0 %v78
  %101 = vmatprep.subr.bf16.mxu0 0
  %102 = vmatpush1.bf16.msra.mxu0 %v79
  %103 = vmatprep.subr.bf16.mxu0 0
  %104 = vmatpush1.bf16.msra.mxu0 %v80
  %105 = vmatprep.subr.bf16.mxu0 0
  %106 = vmatpush1.bf16.msra.mxu0 0
  %107 = vmatprep.subr.bf16.mxu0 0
  %108 = vmatpush1.bf16.msra.mxu0 0
  %109 = vmatprep.subr.bf16.mxu0 0
  %110 = vmatpush1.bf16.msra.mxu0 0
  %111 = vmatprep.subr.bf16.mxu0 0
  %112 = vmatpush1.bf16.msra.mxu0 0
  %113 = vmatprep.subr.bf16.mxu0 0
  %114 = vmatpush1.bf16.msra.mxu0 0
  %115 = vmatprep.subr.bf16.mxu0 0
  %116 = vmatpush1.bf16.msra.mxu0 0
  %117 = vmatprep.subr.bf16.mxu0 0
  %118 = vmatpush1.bf16.msra.mxu0 0
  %119 = vmatprep.subr.bf16.mxu0 0
  %120 = vmatpush1.bf16.msra.mxu0 0
  %121 = vmatprep.mubr.bf16.mxu0 0
  %122 = vmatmul.mubr.bf16.gmra.mrb[0].mxu0 %v19
  %v123 = vpop.f32.mrb[0].mxu0
  %v124 = vadd.f32 %v37, %v123
  %v125 = vpop.f32.mrb[0].mxu0
  %v126 = vpop.f32.mrb[0].mxu0
  %v127 = vadd.f32 %v38, %v126
  %v128 = vpop.f32.mrb[0].mxu0
  %129 = vmatprep.mubr.bf16.mxu0 0
  %130 = vmatmul.mubr.bf16.gmra.mrb[0].mxu0 %v20
  %v131 = vpop.f32.mrb[0].mxu0
  %v132 = vadd.f32 %v39, %v131
  %v133 = vpop.f32.mrb[0].mxu0
  %v134 = vpop.f32.mrb[0].mxu0
  %v135 = vadd.f32 %v40, %v134
  %v136 = vpop.f32.mrb[0].mxu0
  %137 = vdwg.mxu0
  %138 = vst [vmem:[%s3] sm:$0xff] %v124
  %139 = vst [vmem:[%s3 + $0x8] sm:$0xff] %v127
  %140 = vst [vmem:[%s3 + $0x10] sm:$0xff] %v132
  %141 = vst [vmem:[%s3 + $0x18] sm:$0xff] %v135
  // Predicated region
  $region14: #{encoder_forward.17} parent=0 // pred_check
    _
  $region15: #{encoder_forward.17} parent=0 // pred_check_branch
    %143 = sbr.rel (0) target = $region17
  $region16: #{encoder_forward.17} parent=0 // pred_region
    _
  $region17: #{encoder_forward.17} parent=0 // pred_fallthru
    _
  // Predicated region
  $region18: #{encoder_forward.17} parent=0 // pred_check
    _
  $region19: #{encoder_forward.17} parent=0 // pred_check_branch
    %145 = sbr.rel (0) target = $region21
  $region20: #{encoder_forward.17} parent=0 // pred_region
    _
  $region21: #{encoder_forward.17} parent=0 // pred_fallthru
    _

// kernel: encoder_forward.16
$region0: #{encoder_forward.16}
  #allocation0 [shape = 'u32[]', space=smem, size = 0x4, offset = 0x4, fixed_abs, tag = 'smem constant byte address 0x4 - core index']
  #allocation1 [shape = 'u32[144,128]{1,0:T(1,128)}', space=vmem, size = 0x12000, scoped, tag = 'internal scratch']
  %s0 = inlined_call_operand.vmem [shape: f32[2,16,384], index: 0, kind: input, shape index: {}]
  %s1 = inlined_call_operand.vmem [shape: f32[2,16,128], index: 1, kind: output, shape index: {}]
  %s2 = sld [smem:[#allocation0]]
  $region37: #{encoder_forward.16} parent=0
    _
  %s4 = ssub.s32 1, %s2
  %s5 = scalar_select 0, %s4, %s2
  loop: start=0, step=1, limit=4
  $region2: #{encoder_forward.16} parent=0 // loop_pre_header
    _
  $region3: #{encoder_forward.16} parent=0 // loop_header
    %s7 = sphi 0, %s11
    %p8 = scmp.ge.s32.totalorder %s7, 4
    %s17 = sphi 0, %s19
    %s20 = sphi 0, %s17
    %s21 = sphi 0, %s20
    %s37 = sphi 0, %s21
    %s43 = sphi 0, %s45
    %s46 = sphi 0, %s43
    %s47 = sphi 0, %s46
    %s63 = sphi 0, %s47
  $region4: #{encoder_forward.16} parent=0 // loop_header_branch
    %10 = sbr.rel (%p8) target = $region8
  $region5: #{encoder_forward.16} parent=0 // loop_body
    %s12 = ssub.s32 %s7, 1
    %s13 = ssub.s32 %s7, 2
    %s14 = sadd.s32 %s7, 1
    %s15 = ssub.s32 %s7, %s14
    %p16 = scmp.eq.s32.totalorder %s15, 0
    %s18 = sadd.s32 %s17, 1
    %s19 = scalar_select %p16, %s17, %s18
    %p22 = pneg %p16
    %p23 = scmp.eq.s32.totalorder %s7, 1
    %p24 = por %p22, %p23
    %p25 = scmp.ne.s32.totalorder %s17, %s20
    %p26 = scmp.eq.s32.totalorder %s7, 0
    %p27 = por %p25, %p26
    %p28 = scmp.ne.s32.totalorder %s17, %s20
    %p29 = scmp.eq.s32.totalorder %s12, 1
    %p30 = por %p28, %p29
    %p31 = scmp.ne.s32.totalorder %s20, %s21
    %p32 = scmp.eq.s32.totalorder %s12, 0
    %p33 = por %p31, %p32
    %p34 = scmp.ne.s32.totalorder %s20, %s21
    %p35 = scmp.eq.s32.totalorder %s13, 1
    %p36 = por %p34, %p35
    %p38 = scmp.ne.s32.totalorder %s21, %s37
    %p39 = scmp.eq.s32.totalorder %s13, 0
    %p40 = por %p38, %p39
    %s41 = ssub.s32 %s7, %s14
    %p42 = scmp.eq.s32.totalorder %s41, 0
    %s44 = sadd.s32 %s43, 1
    %s45 = scalar_select %p42, %s43, %s44
    %p48 = pneg %p42
    %p49 = scmp.eq.s32.totalorder %s7, 1
    %p50 = por %p48, %p49
    %p51 = scmp.ne.s32.totalorder %s43, %s46
    %p52 = scmp.eq.s32.totalorder %s7, 0
    %p53 = por %p51, %p52
    %p54 = scmp.ne.s32.totalorder %s43, %s46
    %p55 = scmp.eq.s32.totalorder %s12, 1
    %p56 = por %p54, %p55
    %p57 = scmp.ne.s32.totalorder %s46, %s47
    %p58 = scmp.eq.s32.totalorder %s12, 0
    %p59 = por %p57, %p58
    %p60 = scmp.ne.s32.totalorder %s46, %s47
    %p61 = scmp.eq.s32.totalorder %s13, 1
    %p62 = por %p60, %p61
    %p64 = scmp.ne.s32.totalorder %s47, %s63
    %p65 = scmp.eq.s32.totalorder %s13, 0
    %p66 = por %p64, %p65
    %p67 = scmp.le.s32.totalorder 1, %s7
    %p68 = scmp.lt.s32.totalorder %s7, 3
    %p69 = pnand %p67, %p68
    %p70 = pneg %p69
    // Predicated region
    $region9: #{encoder_forward.16} parent=5 // pred_check
      _
    $region10: #{encoder_forward.16} parent=5 // pred_check_branch
      %72 = sbr.rel (%p69) target = $region12
    $region11: #{encoder_forward.16} parent=5 // pred_region
      %s73 = ssub.s32 %s7, 1
    $region12: #{encoder_forward.16} parent=5 // pred_fallthru
      _
    %p74 = scmp.lt.s32.totalorder %s7, 2
    // Predicated region
    $region13: #{encoder_forward.16} parent=5 // pred_check
      %p75 = pneg %p74
    $region14: #{encoder_forward.16} parent=5 // pred_check_branch
      %77 = sbr.rel (%p75) target = $region16
    $region15: #{encoder_forward.16} parent=5 // pred_region
      // Predicated region
      $region17: #{encoder_forward.16} parent=15 // pred_check
        %p78 = pneg %p27
      $region18: #{encoder_forward.16} parent=15 // pred_check_branch
        %80 = sbr.rel (%p78) target = $region20
      $region19: #{encoder_forward.16} parent=15 // pred_region
        %p81 = scmp.lt.s32.totalorder %s7, 1
        %s82 = scalar_select %p81, %s7, 1
        %s83 = smul.addr %s82, 6
        %s84 = smul.addr %s83, 8
        %s85 = scalar_lea.vmem %s0, %s84
      $region20: #{encoder_forward.16} parent=15 // pred_fallthru
        _
    $region16: #{encoder_forward.16} parent=5 // pred_fallthru
      _
    %p86 = scmp.le.s32.totalorder 1, %s7
    %p87 = scmp.lt.s32.totalorder %s7, 3
    %p88 = pnand %p86, %p87
    %p89 = pneg %p88
    // Predicated region
    $region21: #{encoder_forward.16} parent=5 // pred_check
      _
    $region22: #{encoder_forward.16} parent=5 // pred_check_branch
      %91 = sbr.rel (%p88) target = $region24
    $region23: #{encoder_forward.16} parent=5 // pred_region
      %s92 = ssub.s32 %s7, 1
      %p93 = scmp.lt.s32.totalorder %s12, 1
      %s94 = scalar_select %p93, %s12, 1
      %s95 = smul.addr %s94, 6
      %s96 = smul.addr %s95, 8
      %s97 = scalar_lea.vmem %s0, %s96
      %p98 = pneg %p33
      %p99 = pneg %p30
      %p100 = pneg %p59
      %p101 = pneg %p56
      %p102 = scmp.lt.s32.totalorder %s12, 1
      %s103 = scalar_select %p102, %s12, 1
      %s104 = smul.addr %s103, 2
      %s105 = smul.addr %s104, 8
      %s106 = scalar_lea.vmem %s1, %s105
      %p107 = scmp.lt.s32.totalorder %s12, 1
      %s108 = scalar_select %p107, %s12, 1
      %s109 = smul.addr %s108, 6
      %s110 = smul.addr %s109, 8
      %s111 = scalar_lea.vmem %s0, %s110
      %p112 = scmp.lt.s32.totalorder %s12, 1
      %s113 = scalar_select %p112, %s12, 1
      %s114 = smul.addr %s113, 2
      %s115 = smul.addr %s114, 8
      %s116 = scalar_lea.vmem %s1, %s115
      %v118 = vld [vmem:[%s111] sm:$0xff]
      %v119 = vld [vmem:[%s111 + $0x8] sm:$0xff]
      %v120 = vld [vmem:[%s111 + $0x10] sm:$0xff]
      %v121 = vld [vmem:[%s111 + $0x18] sm:$0xff]
      %v122 = vld [vmem:[%s111 + $0x20] sm:$0xff]
      %v123 = vld [vmem:[%s111 + $0x28] sm:$0xff]
      %v124 = vpack.c.bf16 %v121, %v118
      %v125 = vpack.c.bf16 %v122, %v119
      %v126 = vpack.c.bf16 %v123, %v120
      %vm127 = vcmask 261120
      %v129 = vsel %vm127, %v124, 0
      %v132 = vsel %vm127, %v125, 0
      %134 = vmatprep.subr.bf16.mxu0 0
      %135 = vmatpush1.bf16.xpose.msra.mxu0 %v132
      %136 = vmatprep.subr.bf16.mxu0 0
      %137 = vmatpush1.bf16.xpose.msra.mxu0 0
      %138 = vmatprep.subr.bf16.mxu0 0
      %139 = vmatpush1.bf16.xpose.msra.mxu0 0
      %140 = vmatprep.subr.bf16.mxu0 0
      %141 = vmatpush1.bf16.xpose.msra.mxu0 0
      %142 = vmatprep.subr.bf16.mxu0 0
      %143 = vmatpush1.bf16.xpose.msra.mxu0 0
      %144 = vmatprep.subr.bf16.mxu0 0
      %145 = vmatpush1.bf16.xpose.msra.mxu0 0
      %146 = vmatprep.subr.bf16.mxu0 0
      %147 = vmatpush1.bf16.xpose.msra.mxu0 0
      %148 = vmatprep.subr.bf16.mxu0 0
      %149 = vmatpush1.bf16.xpose.msra.mxu0 0
      %150 = vmatprep.subr.bf16.mxu0 0
      %151 = vmatpush1.bf16.xpose.msra.mxu0 0
      %152 = vmatprep.subr.bf16.mxu0 0
      %153 = vmatpush1.bf16.xpose.msra.mxu0 0
      %154 = vmatprep.subr.bf16.mxu0 0
      %155 = vmatpush1.bf16.xpose.msra.mxu0 0
      %156 = vmatprep.subr.bf16.mxu0 0
      %157 = vmatpush1.bf16.xpose.msra.mxu0 0
      %158 = vmatprep.subr.bf16.mxu0 0
      %159 = vmatpush1.bf16.xpose.msra.mxu0 0
      %160 = vmatprep.subr.bf16.mxu0 0
      %161 = vmatpush1.bf16.xpose.msra.mxu0 0
      %162 = vmatprep.subr.bf16.mxu0 0
      %163 = vmatpush1.bf16.xpose.msra.mxu0 0
      %164 = vmatprep.subr.bf16.mxu0 0
      %165 = vmatpush1.bf16.xpose.msra.mxu0 0
      %166 = vmatprep.mubr.bf16.mxu0 0
      %167 = vmatmul.mubr.bf16.gmra.mrb[0].mxu0 %v129
      %v168 = vpop.f32.mrb[0].mxu0
      %v169 = vadd.f32 0.0, %v168
      %v170 = vpop.f32.mrb[0].mxu0
      %v171 = vpop.f32.mrb[0].mxu0
      %v172 = vadd.f32 0.0, %v171
      %v173 = vpop.f32.mrb[0].mxu0
      %174 = vdwg.mxu0
      %v175 = vmul.f32 %v169, 0.17677669
      %v176 = vmul.f32 %v172, 0.17677669
      %vm177 = vcmask 130048
      %v178 = vsel %vm177, %v175, -inf
      %179 = vmax.xlane.f32.xlu0 %v178
      %v180 = vpop.xlane.xlu0 %179
      %v181 = vsel %vm177, %v176, -inf
      %182 = vmax.xlane.f32.xlu0 %v181
      %v183 = vpop.xlane.xlu0 %182
      %v184 = vsub.f32 %v175, %v180
      %v185 = vsub.f32 %v176, %v183
      %v186 = vmul.f32 %v184, 1.442695
      %v187 = vpow.pop %v186
      %v188 = vmul.f32 %v185, 1.442695
      %v189 = vpow.pop %v188
      %v190 = vsel %vm177, %v187, 0.0
      %191 = vadd.xlane.f32.xlu0 %v190
      %v192 = vpop.xlane.xlu0 %191
      %v193 = vsel %vm177, %v189, 0.0
      %194 = vadd.xlane.f32.xlu0 %v193
      %v195 = vpop.xlane.xlu0 %194
      %v196 = vrcp.pop %v192
      %v197 = vrcp.pop %v195
      %v198 = vmul.f32 %v187, %v196
      %v199 = vmul.f32 %v189, %v197
      %v200 = vpack.c.bf16 %v199, %v198
      %v202 = vsel %vm177, %v200, 0
      %204 = vmatprep.subr.bf16.mxu0 0
      %205 = vmatpush1.bf16.msra.mxu0 %v126
      %206 = vmatprep.subr.bf16.mxu0 0
      %207 = vmatpush1.bf16.msra.mxu0 0
      %208 = vmatprep.subr.bf16.mxu0 0
      %209 = vmatpush1.bf16.msra.mxu0 0
      %210 = vmatprep.subr.bf16.mxu0 0
      %211 = vmatpush1.bf16.msra.mxu0 0
      %212 = vmatprep.subr.bf16.mxu0 0
      %213 = vmatpush1.bf16.msra.mxu0 0
      %214 = vmatprep.subr.bf16.mxu0 0
      %215 = vmatpush1.bf16.msra.mxu0 0
      %216 = vmatprep.subr.bf16.mxu0 0
      %217 = vmatpush1.bf16.msra.mxu0 0
      %218 = vmatprep.subr.bf16.mxu0 0
      %219 = vmatpush1.bf16.msra.mxu0 0
      %220 = vmatprep.subr.bf16.mxu0 0
      %221 = vmatpush1.bf16.msra.mxu0 0
      %222 = vmatprep.subr.bf16.mxu0 0
      %223 = vmatpush1.bf16.msra.mxu0 0
      %224 = vmatprep.subr.bf16.mxu0 0
      %225 = vmatpush1.bf16.msra.mxu0 0
      %226 = vmatprep.subr.bf16.mxu0 0
      %227 = vmatpush1.bf16.msra.mxu0 0
      %228 = vmatprep.subr.bf16.mxu0 0
      %229 = vmatpush1.bf16.msra.mxu0 0
      %230 = vmatprep.subr.bf16.mxu0 0
      %231 = vmatpush1.bf16.msra.mxu0 0
      %232 = vmatprep.subr.bf16.mxu0 0
      %233 = vmatpush1.bf16.msra.mxu0 0
      %234 = vmatprep.subr.bf16.mxu0 0
      %235 = vmatpush1.bf16.msra.mxu0 0
      %236 = vmatprep.mubr.bf16.mxu0 0
      %237 = vmatmul.mubr.bf16.gmra.mrb[0].mxu0 %v202
      %v238 = vpop.f32.mrb[0].mxu0
      %v239 = vadd.f32 0.0, %v238
      %v240 = vpop.f32.mrb[0].mxu0
      %v241 = vpop.f32.mrb[0].mxu0
      %v242 = vadd.f32 0.0, %v241
      %v243 = vpop.f32.mrb[0].mxu0
      %244 = vdwg.mxu0
      %246 = vrot.lane.b32.xlu0 %v124, 96
      %v247 = vpop.permute.xlu0 %246
      %249 = vrot.lane.b32.xlu0 %v125, 96
      %v250 = vpop.permute.xlu0 %249
      %v252 = vsel %vm127, %v247, 0
      %v255 = vsel %vm127, %v250, 0
      %257 = vmatprep.subr.bf16.mxu0 0
      %258 = vmatpush1.bf16.xpose.msra.mxu0 %v255
      %259 = vmatprep.subr.bf16.mxu0 0
      %260 = vmatpush1.bf16.xpose.msra.mxu0 0
      %261 = vmatprep.subr.bf16.mxu0 0
      %262 = vmatpush1.bf16.xpose.msra.mxu0 0
      %263 = vmatprep.subr.bf16.mxu0 0
      %264 = vmatpush1.bf16.xpose.msra.mxu0 0
      %265 = vmatprep.subr.bf16.mxu0 0
      %266 = vmatpush1.bf16.xpose.msra.mxu0 0
      %267 = vmatprep.subr.bf16.mxu0 0
      %268 = vmatpush1.bf16.xpose.msra.mxu0 0
      %269 = vmatprep.subr.bf16.mxu0 0
      %270 = vmatpush1.bf16.xpose.msra.mxu0 0
      %271 = vmatprep.subr.bf16.mxu0 0
      %272 = vmatpush1.bf16.xpose.msra.mxu0 0
      %273 = vmatprep.subr.bf16.mxu0 0
      %274 = vmatpush1.bf16.xpose.msra.mxu0 0
      %275 = vmatprep.subr.bf16.mxu0 0
      %276 = vmatpush1.bf16.xpose.msra.mxu0 0
      %277 = vmatprep.subr.bf16.mxu0 0
      %278 = vmatpush1.bf16.xpose.msra.mxu0 0
      %279 = vmatprep.subr.bf16.mxu0 0
      %280 = vmatpush1.bf16.xpose.msra.mxu0 0
      %281 = vmatprep.subr.bf16.mxu0 0
      %282 = vmatpush1.bf16.xpose.msra.mxu0 0
      %283 = vmatprep.subr.bf16.mxu0 0
      %284 = vmatpush1.bf16.xpose.msra.mxu0 0
      %285 = vmatprep.subr.bf16.mxu0 0
      %286 = vmatpush1.bf16.xpose.msra.mxu0 0
      %287 = vmatprep.subr.bf16.mxu0 0
      %288 = vmatpush1.bf16.xpose.msra.mxu0 0
      %289 = vmatprep.mubr.bf16.mxu0 0
      %290 = vmatmul.mubr.bf16.gmra.mrb[0].mxu0 %v252
      %v291 = vpop.f32.mrb[0].mxu0
      %v292 = vadd.f32 0.0, %v291
      %v293 = vpop.f32.mrb[0].mxu0
      %v294 = vpop.f32.mrb[0].mxu0
      %v295 = vadd.f32 0.0, %v294
      %v296 = vpop.f32.mrb[0].mxu0
      %297 = vdwg.mxu0
      %v298 = vmul.f32 %v292, 0.17677669
      %v299 = vmul.f32 %v295, 0.17677669
      %v300 = vsel %vm177, %v298, -inf
      %301 = vmax.xlane.f32.xlu0 %v300
      %v302 = vpop.xlane.xlu0 %301
      %v303 = vsel %vm177, %v299, -inf
      %304 = vmax.xlane.f32.xlu0 %v303
      %v305 = vpop.xlane.xlu0 %304
      %v306 = vsub.f32 %v298, %v302
      %v307 = vsub.f32 %v299, %v305
      %v308 = vmul.f32 %v306, 1.442695
      %v309 = vpow.pop %v308
      %v310 = vmul.f32 %v307, 1.442695
      %v311 = vpow.pop %v310
      %v312 = vsel %vm177, %v309, 0.0
      %313 = vadd.xlane.f32.xlu0 %v312
      %v314 = vpop.xlane.xlu0 %313
      %v315 = vsel %vm177, %v311, 0.0
      %316 = vadd.xlane.f32.xlu0 %v315
      %v317 = vpop.xlane.xlu0 %316
      %v318 = vrcp.pop %v314
      %v319 = vrcp.pop %v317
      %v320 = vmul.f32 %v309, %v318
      %v321 = vmul.f32 %v311, %v319
      %v322 = vpack.c.bf16 %v321, %v320
      %324 = vrot.lane.b32.xlu0 %v126, 96
      %v325 = vpop.permute.xlu0 %324
      %v328 = vsel %vm177, %v322, 0
      %330 = vmatprep.subr.bf16.mxu0 0
      %331 = vmatpush1.bf16.msra.mxu0 %v325
      %332 = vmatprep.subr.bf16.mxu0 0
      %333 = vmatpush1.bf16.msra.mxu0 0
      %334 = vmatprep.subr.bf16.mxu0 0
      %335 = vmatpush1.bf16.msra.mxu0 0
      %336 = vmatprep.subr.bf16.mxu0 0
      %337 = vmatpush1.bf16.msra.mxu0 0
      %338 = vmatprep.subr.bf16.mxu0 0
      %339 = vmatpush1.bf16.msra.mxu0 0
      %340 = vmatprep.subr.bf16.mxu0 0
      %341 = vmatpush1.bf16.msra.mxu0 0
      %342 = vmatprep.subr.bf16.mxu0 0
      %343 = vmatpush1.bf16.msra.mxu0 0
      %344 = vmatprep.subr.bf16.mxu0 0
      %345 = vmatpush1.bf16.msra.mxu0 0
      %346 = vmatprep.subr.bf16.mxu0 0
      %347 = vmatpush1.bf16.msra.mxu0 0
      %348 = vmatprep.subr.bf16.mxu0 0
      %349 = vmatpush1.bf16.msra.mxu0 0
      %350 = vmatprep.subr.bf16.mxu0 0
      %351 = vmatpush1.bf16.msra.mxu0 0
      %352 = vmatprep.subr.bf16.mxu0 0
      %353 = vmatpush1.bf16.msra.mxu0 0
      %354 = vmatprep.subr.bf16.mxu0 0
      %355 = vmatpush1.bf16.msra.mxu0 0
      %356 = vmatprep.subr.bf16.mxu0 0
      %357 = vmatpush1.bf16.msra.mxu0 0
      %358 = vmatprep.subr.bf16.mxu0 0
      %359 = vmatpush1.bf16.msra.mxu0 0
      %360 = vmatprep.subr.bf16.mxu0 0
      %361 = vmatpush1.bf16.msra.mxu0 0
      %362 = vmatprep.mubr.bf16.mxu0 0
      %363 = vmatmul.mubr.bf16.gmra.mrb[0].mxu0 %v328
      %v364 = vpop.f32.mrb[0].mxu0
      %v365 = vadd.f32 0.0, %v364
      %v366 = vpop.f32.mrb[0].mxu0
      %v367 = vpop.f32.mrb[0].mxu0
      %v368 = vadd.f32 0.0, %v367
      %v369 = vpop.f32.mrb[0].mxu0
      %370 = vdwg.mxu0
      %371 = vrot.lane.b32.xlu0 %v124, 64
      %v372 = vpop.permute.xlu0 %371
      %373 = vrot.lane.b32.xlu0 %v125, 64
      %v374 = vpop.permute.xlu0 %373
      %v376 = vsel %vm127, %v372, 0
      %v379 = vsel %vm127, %v374, 0
      %381 = vmatprep.subr.bf16.mxu0 0
      %382 = vmatpush1.bf16.xpose.msra.mxu0 %v379
      %383 = vmatprep.subr.bf16.mxu0 0
      %384 = vmatpush1.bf16.xpose.msra.mxu0 0
      %385 = vmatprep.subr.bf16.mxu0 0
      %386 = vmatpush1.bf16.xpose.msra.mxu0 0
      %387 = vmatprep.subr.bf16.mxu0 0
      %388 = vmatpush1.bf16.xpose.msra.mxu0 0
      %389 = vmatprep.subr.bf16.mxu0 0
      %390 = vmatpush1.bf16.xpose.msra.mxu0 0
      %391 = vmatprep.subr.bf16.mxu0 0
      %392 = vmatpush1.bf16.xpose.msra.mxu0 0
      %393 = vmatprep.subr.bf16.mxu0 0
      %394 = vmatpush1.bf16.xpose.msra.mxu0 0
      %395 = vmatprep.subr.bf16.mxu0 0
      %396 = vmatpush1.bf16.xpose.msra.mxu0 0
      %397 = vmatprep.subr.bf16.mxu0 0
      %398 = vmatpush1.bf16.xpose.msra.mxu0 0
      %399 = vmatprep.subr.bf16.mxu0 0
      %400 = vmatpush1.bf16.xpose.msra.mxu0 0
      %401 = vmatprep.subr.bf16.mxu0 0
      %402 = vmatpush1.bf16.xpose.msra.mxu0 0
      %403 = vmatprep.subr.bf16.mxu0 0
      %404 = vmatpush1.bf16.xpose.msra.mxu0 0
      %405 = vmatprep.subr.bf16.mxu0 0
      %406 = vmatpush1.bf16.xpose.msra.mxu0 0
      %407 = vmatprep.subr.bf16.mxu0 0
      %408 = vmatpush1.bf16.xpose.msra.mxu0 0
      %409 = vmatprep.subr.bf16.mxu0 0
      %410 = vmatpush1.bf16.xpose.msra.mxu0 0
      %411 = vmatprep.subr.bf16.mxu0 0
      %412 = vmatpush1.bf16.xpose.msra.mxu0 0
      %413 = vmatprep.mubr.bf16.mxu0 0
      %414 = vmatmul.mubr.bf16.gmra.mrb[0].mxu0 %v376
      %v415 = vpop.f32.mrb[0].mxu0
      %v416 = vadd.f32 0.0, %v415
      %v417 = vpop.f32.mrb[0].mxu0
      %v418 = vpop.f32.mrb[0].mxu0
      %v419 = vadd.f32 0.0, %v418
      %v420 = vpop.f32.mrb[0].mxu0
      %421 = vdwg.mxu0
      %v422 = vmul.f32 %v416, 0.17677669
      %v423 = vmul.f32 %v419, 0.17677669
      %v424 = vsel %vm177, %v422, -inf
      %425 = vmax.xlane.f32.xlu0 %v424
      %v426 = vpop.xlane.xlu0 %425
      %v427 = vsel %vm177, %v423, -inf
      %428 = vmax.xlane.f32.xlu0 %v427
      %v429 = vpop.xlane.xlu0 %428
      %v430 = vsub.f32 %v422, %v426
      %v431 = vsub.f32 %v423, %v429
      %v432 = vmul.f32 %v430, 1.442695
      %v433 = vpow.pop %v432
      %v434 = vmul.f32 %v431, 1.442695
      %v435 = vpow.pop %v434
      %v436 = vsel %vm177, %v433, 0.0
      %437 = vadd.xlane.f32.xlu0 %v436
      %v438 = vpop.xlane.xlu0 %437
      %v439 = vsel %vm177, %v435, 0.0
      %440 = vadd.xlane.f32.xlu0 %v439
      %v441 = vpop.xlane.xlu0 %440
      %v442 = vrcp.pop %v438
      %v443 = vrcp.pop %v441
      %v444 = vmul.f32 %v433, %v442
      %v445 = vmul.f32 %v435, %v443
      %v446 = vpack.c.bf16 %v445, %v444
      %447 = vrot.lane.b32.xlu0 %v126, 64
      %v448 = vpop.permute.xlu0 %447
      %v451 = vsel %vm177, %v446, 0
      %453 = vmatprep.subr.bf16.mxu0 0
      %454 = vmatpush1.bf16.msra.mxu0 %v448
      %455 = vmatprep.subr.bf16.mxu0 0
      %456 = vmatpush1.bf16.msra.mxu0 0
      %457 = vmatprep.subr.bf16.mxu0 0
      %458 = vmatpush1.bf16.msra.mxu0 0
      %459 = vmatprep.subr.bf16.mxu0 0
      %460 = vmatpush1.bf16.msra.mxu0 0
      %461 = vmatprep.subr.bf16.mxu0 0
      %462 = vmatpush1.bf16.msra.mxu0 0
      %463 = vmatprep.subr.bf16.mxu0 0
      %464 = vmatpush1.bf16.msra.mxu0 0
      %465 = vmatprep.subr.bf16.mxu0 0
      %466 = vmatpush1.bf16.msra.mxu0 0
      %467 = vmatprep.subr.bf16.mxu0 0
      %468 = vmatpush1.bf16.msra.mxu0 0
      %469 = vmatprep.subr.bf16.mxu0 0
      %470 = vmatpush1.bf16.msra.mxu0 0
      %471 = vmatprep.subr.bf16.mxu0 0
      %472 = vmatpush1.bf16.msra.mxu0 0
      %473 = vmatprep.subr.bf16.mxu0 0
      %474 = vmatpush1.bf16.msra.mxu0 0
      %475 = vmatprep.subr.bf16.mxu0 0
      %476 = vmatpush1.bf16.msra.mxu0 0
      %477 = vmatprep.subr.bf16.mxu0 0
      %478 = vmatpush1.bf16.msra.mxu0 0
      %479 = vmatprep.subr.bf16.mxu0 0
      %480 = vmatpush1.bf16.msra.mxu0 0
      %481 = vmatprep.subr.bf16.mxu0 0
      %482 = vmatpush1.bf16.msra.mxu0 0
      %483 = vmatprep.subr.bf16.mxu0 0
      %484 = vmatpush1.bf16.msra.mxu0 0
      %485 = vmatprep.mubr.bf16.mxu0 0
      %486 = vmatmul.mubr.bf16.gmra.mrb[0].mxu0 %v451
      %v487 = vpop.f32.mrb[0].mxu0
      %v488 = vadd.f32 0.0, %v487
      %v489 = vpop.f32.mrb[0].mxu0
      %v490 = vpop.f32.mrb[0].mxu0
      %v491 = vadd.f32 0.0, %v490
      %v492 = vpop.f32.mrb[0].mxu0
      %493 = vdwg.mxu0
      %494 = vrot.lane.b32.xlu0 %v124, 32
      %v495 = vpop.permute.xlu0 %494
      %496 = vrot.lane.b32.xlu0 %v125, 32
      %v497 = vpop.permute.xlu0 %496
      %v499 = vsel %vm127, %v495, 0
      %v502 = vsel %vm127, %v497, 0
      %504 = vmatprep.subr.bf16.mxu0 0
      %505 = vmatpush1.bf16.xpose.msra.mxu0 %v502
      %506 = vmatprep.subr.bf16.mxu0 0
      %507 = vmatpush1.bf16.xpose.msra.mxu0 0
      %508 = vmatprep.subr.bf16.mxu0 0
      %509 = vmatpush1.bf16.xpose.msra.mxu0 0
      %510 = vmatprep.subr.bf16.mxu0 0
      %511 = vmatpush1.bf16.xpose.msra.mxu0 0
      %512 = vmatprep.subr.bf16.mxu0 0
      %513 = vmatpush1.bf16.xpose.msra.mxu0 0
      %514 = vmatprep.subr.bf16.mxu0 0
      %515 = vmatpush1.bf16.xpose.msra.mxu0 0
      %516 = vmatprep.subr.bf16.mxu0 0
      %517 = vmatpush1.bf16.xpose.msra.mxu0 0
      %518 = vmatprep.subr.bf16.mxu0 0
      %519 = vmatpush1.bf16.xpose.msra.mxu0 0
      %520 = vmatprep.subr.bf16.mxu0 0
      %521 = vmatpush1.bf16.xpose.msra.mxu0 0
      %522 = vmatprep.subr.bf16.mxu0 0
      %523 = vmatpush1.bf16.xpose.msra.mxu0 0
      %524 = vmatprep.subr.bf16.mxu0 0
      %525 = vmatpush1.bf16.xpose.msra.mxu0 0
      %526 = vmatprep.subr.bf16.mxu0 0
      %527 = vmatpush1.bf16.xpose.msra.mxu0 0
      %528 = vmatprep.subr.bf16.mxu0 0
      %529 = vmatpush1.bf16.xpose.msra.mxu0 0
      %530 = vmatprep.subr.bf16.mxu0 0
      %531 = vmatpush1.bf16.xpose.msra.mxu0 0
      %532 = vmatprep.subr.bf16.mxu0 0
      %533 = vmatpush1.bf16.xpose.msra.mxu0 0
      %534 = vmatprep.subr.bf16.mxu0 0
      %535 = vmatpush1.bf16.xpose.msra.mxu0 0
      %536 = vmatprep.mubr.bf16.mxu0 0
      %537 = vmatmul.mubr.bf16.gmra.mrb[0].mxu0 %v499
      %v538 = vpop.f32.mrb[0].mxu0
      %v539 = vadd.f32 0.0, %v538
      %v540 = vpop.f32.mrb[0].mxu0
      %v541 = vpop.f32.mrb[0].mxu0
      %v542 = vadd.f32 0.0, %v541
      %v543 = vpop.f32.mrb[0].mxu0
      %544 = vdwg.mxu0
      %v545 = vmul.f32 %v539, 0.17677669
      %v546 = vmul.f32 %v542, 0.17677669
      %v547 = vsel %vm177, %v545, -inf
      %548 = vmax.xlane.f32.xlu0 %v547
      %v549 = vpop.xlane.xlu0 %548
      %v550 = vsel %vm177, %v546, -inf
      %551 = vmax.xlane.f32.xlu0 %v550
      %v552 = vpop.xlane.xlu0 %551
      %v553 = vsub.f32 %v545, %v549
      %v554 = vsub.f32 %v546, %v552
      %v555 = vmul.f32 %v553, 1.442695
      %v556 = vpow.pop %v555
      %v557 = vmul.f32 %v554, 1.442695
      %v558 = vpow.pop %v557
      %v559 = vsel %vm177, %v556, 0.0
      %560 = vadd.xlane.f32.xlu0 %v559
      %v561 = vpop.xlane.xlu0 %560
      %v562 = vsel %vm177, %v558, 0.0
      %563 = vadd.xlane.f32.xlu0 %v562
      %v564 = vpop.xlane.xlu0 %563
      %v565 = vrcp.pop %v561
      %v566 = vrcp.pop %v564
      %v567 = vmul.f32 %v556, %v565
      %v568 = vmul.f32 %v558, %v566
      %v569 = vpack.c.bf16 %v568, %v567
      %570 = vrot.lane.b32.xlu0 %v126, 32
      %v571 = vpop.permute.xlu0 %570
      %v574 = vsel %vm177, %v569, 0
      %576 = vmatprep.subr.bf16.mxu0 0
      %577 = vmatpush1.bf16.msra.mxu0 %v571
      %578 = vmatprep.subr.bf16.mxu0 0
      %579 = vmatpush1.bf16.msra.mxu0 0
      %580 = vmatprep.subr.bf16.mxu0 0
      %581 = vmatpush1.bf16.msra.mxu0 0
      %582 = vmatprep.subr.bf16.mxu0 0
      %583 = vmatpush1.bf16.msra.mxu0 0
      %584 = vmatprep.subr.bf16.mxu0 0
      %585 = vmatpush1.bf16.msra.mxu0 0
      %586 = vmatprep.subr.bf16.mxu0 0
      %587 = vmatpush1.bf16.msra.mxu0 0
      %588 = vmatprep.subr.bf16.mxu0 0
      %589 = vmatpush1.bf16.msra.mxu0 0
      %590 = vmatprep.subr.bf16.mxu0 0
      %591 = vmatpush1.bf16.msra.mxu0 0
      %592 = vmatprep.subr.bf16.mxu0 0
      %593 = vmatpush1.bf16.msra.mxu0 0
      %594 = vmatprep.subr.bf16.mxu0 0
      %595 = vmatpush1.bf16.msra.mxu0 0
      %596 = vmatprep.subr.bf16.mxu0 0
      %597 = vmatpush1.bf16.msra.mxu0 0
      %598 = vmatprep.subr.bf16.mxu0 0
      %599 = vmatpush1.bf16.msra.mxu0 0
      %600 = vmatprep.subr.bf16.mxu0 0
      %601 = vmatpush1.bf16.msra.mxu0 0
      %602 = vmatprep.subr.bf16.mxu0 0
      %603 = vmatpush1.bf16.msra.mxu0 0
      %604 = vmatprep.subr.bf16.mxu0 0
      %605 = vmatpush1.bf16.msra.mxu0 0
      %606 = vmatprep.subr.bf16.mxu0 0
      %607 = vmatpush1.bf16.msra.mxu0 0
      %608 = vmatprep.mubr.bf16.mxu0 0
      %609 = vmatmul.mubr.bf16.gmra.mrb[0].mxu0 %v574
      %v610 = vpop.f32.mrb[0].mxu0
      %v611 = vadd.f32 0.0, %v610
      %v612 = vpop.f32.mrb[0].mxu0
      %v613 = vpop.f32.mrb[0].mxu0
      %v614 = vadd.f32 0.0, %v613
      %v615 = vpop.f32.mrb[0].mxu0
      %616 = vdwg.mxu0
      %619 = vrot.lane.b32.xlu0 %v365, 32
      %v620 = vpop.permute.xlu0 %619
      %621 = vrot.lane.b32.xlu0 %v368, 32
      %v622 = vpop.permute.xlu0 %621
      %627 = vrot.lane.b32.xlu0 %v488, 64
      %v628 = vpop.permute.xlu0 %627
      %629 = vrot.lane.b32.xlu0 %v491, 64
      %v630 = vpop.permute.xlu0 %629
      %635 = vrot.lane.b32.xlu0 %v611, 96
      %v636 = vpop.permute.xlu0 %635
      %637 = vrot.lane.b32.xlu0 %v614, 96
      %v638 = vpop.permute.xlu0 %637
      %v641 = vsel %vm127, %v239, %v620
      %v642 = vsel %vm127, %v242, %v622
      %vm643 = vcmask 523264
      %v644 = vsel %vm643, %v641, %v628
      %v645 = vsel %vm643, %v642, %v630
      %vm646 = vcmask 785408
      %v647 = vsel %vm646, %v644, %v636
      %v648 = vsel %vm646, %v645, %v638
      %649 = vst [vmem:[%s116] sm:$0xff] %v647
      %650 = vst [vmem:[%s116 + $0x8] sm:$0xff] %v648
      %p651 = scmp.lt.s32.totalorder %s12, 1
      %s652 = scalar_select %p651, %s12, 1
      %s653 = smul.addr %s652, 2
      %s654 = smul.addr %s653, 8
      %s655 = scalar_lea.vmem %s1, %s654
      // Predicated region
      $region25: #{encoder_forward.16} parent=23 // pred_check
        %p656 = pneg %p56
      $region26: #{encoder_forward.16} parent=23 // pred_check_branch
        %658 = sbr.rel (%p656) target = $region28
      $region27: #{encoder_forward.16} parent=23 // pred_region
        _
      $region28: #{encoder_forward.16} parent=23 // pred_fallthru
        _
    $region24: #{encoder_forward.16} parent=5 // pred_fallthru
      _
    %p659 = scmp.le.s32.totalorder 2, %s7
    // Predicated region
    $region29: #{encoder_forward.16} parent=5 // pred_check
      %p660 = pneg %p659
    $region30: #{encoder_forward.16} parent=5 // pred_check_branch
      %662 = sbr.rel (%p660) target = $region32
    $region31: #{encoder_forward.16} parent=5 // pred_region
      %s663 = ssub.s32 %s7, 2
      // Predicated region
      $region33: #{encoder_forward.16} parent=31 // pred_check
        %p664 = pneg %p62
      $region34: #{encoder_forward.16} parent=31 // pred_check_branch
        %666 = sbr.rel (%p664) target = $region36
      $region35: #{encoder_forward.16} parent=31 // pred_region
        %p667 = scmp.lt.s32.totalorder %s13, 1
        %s668 = scalar_select %p667, %s13, 1
        %s669 = smul.addr %s668, 2
        %s670 = smul.addr %s669, 8
        %s671 = scalar_lea.vmem %s1, %s670
      $region36: #{encoder_forward.16} parent=31 // pred_fallthru
        _
    $region32: #{encoder_forward.16} parent=5 // pred_fallthru
      _
  $region6: #{encoder_forward.16} parent=0 // loop_footer
    %s11 = sadd.s32 1, %s7
  $region7: #{encoder_forward.16} parent=0 // loop_footer_branch
    %6 = sbr.rel target = $region3
  $region8: #{encoder_forward.16} parent=0 // loop_exit
    _

// kernel: encoder_forward.23
$region0: #{encoder_forward.23}
  #allocation0 [shape = 'u32[]', space=smem, size = 0x4, offset = 0x4, fixed_abs, tag = 'smem constant byte address 0x4 - core index']
  #allocation1 [shape = 'u32[144,128]{1,0:T(1,128)}', space=vmem, size = 0x12000, scoped, tag = 'internal scratch']
  %s0 = inlined_call_operand.vmem [shape: f32[32,128], index: 0, kind: input, shape index: {}]
  %s1 = inlined_call_operand.vmem [shape: f32[1,128], index: 1, kind: input, shape index: {}]
  %s2 = inlined_call_operand.vmem [shape: f32[1,128], index: 2, kind: input, shape index: {}]
  %s3 = inlined_call_operand.hbm [shape: f32[32,128], index: 3, kind: output, shape index: {}]
  %s4 = sld [smem:[#allocation0]]
  $region22: #{encoder_forward.23} parent=0
    _
  %s6 = ssub.s32 1, %s4
  %s7 = scalar_select 0, %s6, %s4
  $region1: #{encoder_forward.23} parent=0
    #allocation2 [shape = 'u8[16384]{0}', space=vmem, size = 0x4000, scoped, tag = 'output window, operand 0, single buffered']
    #allocation3 [shape = 's32[1]{0}', space=sflag, size = 0x4, scoped, tag = 'scoped memory for encoder_forward.23']
    %8 = vsyncpa [#allocation3], 0
    // Predicated region
    $region2: #{encoder_forward.23} parent=1 // pred_check
      _
    $region3: #{encoder_forward.23} parent=1 // pred_check_branch
      %10 = sbr.rel (0) target = $region5
    $region4: #{encoder_forward.23} parent=1 // pred_region
      _
    $region5: #{encoder_forward.23} parent=1 // pred_fallthru
      _
    // Predicated region
    $region6: #{encoder_forward.23} parent=1 // pred_check
      _
    $region7: #{encoder_forward.23} parent=1 // pred_check_branch
      %12 = sbr.rel (0) target = $region9
    $region8: #{encoder_forward.23} parent=1 // pred_region
      _
    $region9: #{encoder_forward.23} parent=1 // pred_fallthru
      _
    // Predicated region
    $region10: #{encoder_forward.23} parent=1 // pred_check
      _
    $region11: #{encoder_forward.23} parent=1 // pred_check_branch
      %14 = sbr.rel (0) target = $region13
    $region12: #{encoder_forward.23} parent=1 // pred_region
      _
    $region13: #{encoder_forward.23} parent=1 // pred_fallthru
      _
    %v15 = vld [vmem:[%s0] sm:$0xff]
    %v16 = vld [vmem:[%s0 + $0x8] sm:$0xff]
    %v17 = vld [vmem:[%s0 + $0x10] sm:$0xff]
    %v18 = vld [vmem:[%s0 + $0x18] sm:$0xff]
    %19 = vadd.xlane.f32.xlu0 %v15
    %v20 = vpop.xlane.xlu0 %19
    %21 = vadd.xlane.f32.xlu0 %v16
    %v22 = vpop.xlane.xlu0 %21
    %23 = vadd.xlane.f32.xlu0 %v17
    %v24 = vpop.xlane.xlu0 %23
    %25 = vadd.xlane.f32.xlu0 %v18
    %v26 = vpop.xlane.xlu0 %25
    %v27 = vrcp.pop 128.0
    %v28 = vmul.f32 %v20, %v27
    %v29 = vmul.f32 %v22, %v27
    %v30 = vmul.f32 %v24, %v27
    %v31 = vmul.f32 %v26, %v27
    %v32 = vsub.f32 %v15, %v28
    %v33 = vsub.f32 %v16, %v29
    %v34 = vsub.f32 %v17, %v30
    %v35 = vsub.f32 %v18, %v31
    %v36 = vmul.f32 %v32, %v32
    %v37 = vmul.f32 %v33, %v33
    %v38 = vmul.f32 %v34, %v34
    %v39 = vmul.f32 %v35, %v35
    %40 = vadd.xlane.f32.xlu0 %v36
    %v41 = vpop.xlane.xlu0 %40
    %42 = vadd.xlane.f32.xlu0 %v37
    %v43 = vpop.xlane.xlu0 %42
    %44 = vadd.xlane.f32.xlu0 %v38
    %v45 = vpop.xlane.xlu0 %44
    %46 = vadd.xlane.f32.xlu0 %v39
    %v47 = vpop.xlane.xlu0 %46
    %v48 = vmul.f32 %v41, %v27
    %v49 = vmul.f32 %v43, %v27
    %v50 = vmul.f32 %v45, %v27
    %v51 = vmul.f32 %v47, %v27
    %v52 = vadd.f32 %v48, 1e-06
    %v53 = vadd.f32 %v49, 1e-06
    %v54 = vadd.f32 %v50, 1e-06
    %v55 = vadd.f32 %v51, 1e-06
    %v56 = vrsqrt.pop %v52
    %v57 = vrsqrt.pop %v53
    %v58 = vrsqrt.pop %v54
    %v59 = vrsqrt.pop %v55
    %v60 = vmul.f32 %v32, %v56
    %v61 = vmul.f32 %v33, %v57
    %v62 = vmul.f32 %v34, %v58
    %v63 = vmul.f32 %v35, %v59
    %v64 = vld [vmem:[%s1] sm:$0x1]
    %v66 = vlaneseq
    %v67 = vshrl.u32 %v66, 7
    %v68 = vsub.s32 0, %v67
    %v69 = vrot.slane %v64, %v68
    %v71 = vmul.f32 %v60, %v69
    %v72 = vmul.f32 %v61, %v69
    %v73 = vmul.f32 %v62, %v69
    %v74 = vmul.f32 %v63, %v69
    %v75 = vld [vmem:[%s2] sm:$0x1]
    %v77 = vlaneseq
    %v78 = vshrl.u32 %v77, 7
    %v79 = vsub.s32 0, %v78
    %v80 = vrot.slane %v75, %v79
    %v82 = vadd.f32 %v71, %v80
    %v83 = vadd.f32 %v72, %v80
    %v84 = vadd.f32 %v73, %v80
    %v85 = vadd.f32 %v74, %v80
    %86 = vst [vmem:[#allocation2] sm:$0xff] %v82
    %87 = vst [vmem:[#allocation2 + $0x8] sm:$0xff] %v83
    %88 = vst [vmem:[#allocation2 + $0x10] sm:$0xff] %v84
    %89 = vst [vmem:[#allocation2 + $0x18] sm:$0xff] %v85
    // Predicated region
    $region14: #{encoder_forward.23} parent=1 // pred_check
      _
    $region15: #{encoder_forward.23} parent=1 // pred_check_branch
      %91 = sbr.rel (0) target = $region17
    $region16: #{encoder_forward.23} parent=1 // pred_region
      %s93 = ssub.s32 512, 512
      %94 = vsyncadd [#allocation3], %s93
      %s95 = sshll.u32 [#allocation2], 4
      %s96 = int_to_ptr.vmem [resolvable:$true] %s95
      %101 = dma.vmem_to_hbm [thread:$0]  %s96, 512, %s3, [#allocation3], 128, 128, 8
    $region17: #{encoder_forward.23} parent=1 // pred_fallthru
      _
    // Predicated region
    $region18: #{encoder_forward.23} parent=1 // pred_check
      _
    $region19: #{encoder_forward.23} parent=1 // pred_check_branch
      %103 = sbr.rel (0) target = $region21
    $region20: #{encoder_forward.23} parent=1 // pred_region
      %104 = dma.done [#allocation3], 512
    $region21: #{encoder_forward.23} parent=1 // pred_fallthru
      _
    %105 = vsyncpa [#allocation3], 1

// kernel: encoder_forward.18
$region0: #{encoder_forward.18}
  #allocation0 [shape = 'u32[]', space=smem, size = 0x4, offset = 0x4, fixed_abs, tag = 'smem constant byte address 0x4 - core index']
  #allocation1 [shape = 'u32[144,128]{1,0:T(1,128)}', space=vmem, size = 0x12000, scoped, tag = 'internal scratch']
  %s0 = inlined_call_operand.vmem [shape: f32[32,128], index: 0, kind: input, shape index: {}]
  %s1 = inlined_call_operand.vmem [shape: f32[1,128], index: 1, kind: input, shape index: {}]
  %s2 = inlined_call_operand.vmem [shape: f32[1,128], index: 2, kind: input, shape index: {}]
  %s3 = inlined_call_operand.vmem [shape: bf16[128,256], index: 3, kind: input, shape index: {}]
  %s4 = inlined_call_operand.vmem [shape: f32[1,256], index: 4, kind: input, shape index: {}]
  %s5 = inlined_call_operand.vmem [shape: bf16[256,128], index: 5, kind: input, shape index: {}]
  %s6 = inlined_call_operand.vmem [shape: f32[1,128], index: 6, kind: input, shape index: {}]
  %s7 = inlined_call_operand.vmem [shape: f32[32,128], index: 7, kind: output, shape index: {}]
  %s8 = sld [smem:[#allocation0]]
  $region38: #{encoder_forward.18} parent=0
    _
  %s10 = ssub.s32 1, %s8
  %s11 = scalar_select 0, %s10, %s8
  // Predicated region
  $region2: #{encoder_forward.18} parent=0 // pred_check
    _
  $region3: #{encoder_forward.18} parent=0 // pred_check_branch
    %13 = sbr.rel (0) target = $region5
  $region4: #{encoder_forward.18} parent=0 // pred_region
    _
  $region5: #{encoder_forward.18} parent=0 // pred_fallthru
    _
  // Predicated region
  $region6: #{encoder_forward.18} parent=0 // pred_check
    _
  $region7: #{encoder_forward.18} parent=0 // pred_check_branch
    %15 = sbr.rel (0) target = $region9
  $region8: #{encoder_forward.18} parent=0 // pred_region
    _
  $region9: #{encoder_forward.18} parent=0 // pred_fallthru
    _
  // Predicated region
  $region10: #{encoder_forward.18} parent=0 // pred_check
    _
  $region11: #{encoder_forward.18} parent=0 // pred_check_branch
    %17 = sbr.rel (0) target = $region13
  $region12: #{encoder_forward.18} parent=0 // pred_region
    _
  $region13: #{encoder_forward.18} parent=0 // pred_fallthru
    _
  // Predicated region
  $region14: #{encoder_forward.18} parent=0 // pred_check
    _
  $region15: #{encoder_forward.18} parent=0 // pred_check_branch
    %19 = sbr.rel (0) target = $region17
  $region16: #{encoder_forward.18} parent=0 // pred_region
    _
  $region17: #{encoder_forward.18} parent=0 // pred_fallthru
    _
  // Predicated region
  $region18: #{encoder_forward.18} parent=0 // pred_check
    _
  $region19: #{encoder_forward.18} parent=0 // pred_check_branch
    %21 = sbr.rel (0) target = $region21
  $region20: #{encoder_forward.18} parent=0 // pred_region
    _
  $region21: #{encoder_forward.18} parent=0 // pred_fallthru
    _
  // Predicated region
  $region22: #{encoder_forward.18} parent=0 // pred_check
    _
  $region23: #{encoder_forward.18} parent=0 // pred_check_branch
    %23 = sbr.rel (0) target = $region25
  $region24: #{encoder_forward.18} parent=0 // pred_region
    _
  $region25: #{encoder_forward.18} parent=0 // pred_fallthru
    _
  // Predicated region
  $region26: #{encoder_forward.18} parent=0 // pred_check
    _
  $region27: #{encoder_forward.18} parent=0 // pred_check_branch
    %25 = sbr.rel (0) target = $region29
  $region28: #{encoder_forward.18} parent=0 // pred_region
    _
  $region29: #{encoder_forward.18} parent=0 // pred_fallthru
    _
  %v27 = vld [vmem:[%s0] sm:$0xff]
  %v28 = vld [vmem:[%s0 + $0x8] sm:$0xff]
  %v29 = vld [vmem:[%s0 + $0x10] sm:$0xff]
  %v30 = vld [vmem:[%s0 + $0x18] sm:$0xff]
  %31 = vadd.xlane.f32.xlu0 %v27
  %v32 = vpop.xlane.xlu0 %31
  %33 = vadd.xlane.f32.xlu0 %v28
  %v34 = vpop.xlane.xlu0 %33
  %35 = vadd.xlane.f32.xlu0 %v29
  %v36 = vpop.xlane.xlu0 %35
  %37 = vadd.xlane.f32.xlu0 %v30
  %v38 = vpop.xlane.xlu0 %37
  %v39 = vrcp.pop 128.0
  %v40 = vmul.f32 %v32, %v39
  %v41 = vmul.f32 %v34, %v39
  %v42 = vmul.f32 %v36, %v39
  %v43 = vmul.f32 %v38, %v39
  %v44 = vsub.f32 %v27, %v40
  %v45 = vsub.f32 %v28, %v41
  %v46 = vsub.f32 %v29, %v42
  %v47 = vsub.f32 %v30, %v43
  %v48 = vmul.f32 %v44, %v44
  %v49 = vmul.f32 %v45, %v45
  %v50 = vmul.f32 %v46, %v46
  %v51 = vmul.f32 %v47, %v47
  %52 = vadd.xlane.f32.xlu0 %v48
  %v53 = vpop.xlane.xlu0 %52
  %54 = vadd.xlane.f32.xlu0 %v49
  %v55 = vpop.xlane.xlu0 %54
  %56 = vadd.xlane.f32.xlu0 %v50
  %v57 = vpop.xlane.xlu0 %56
  %58 = vadd.xlane.f32.xlu0 %v51
  %v59 = vpop.xlane.xlu0 %58
  %v60 = vmul.f32 %v53, %v39
  %v61 = vmul.f32 %v55, %v39
  %v62 = vmul.f32 %v57, %v39
  %v63 = vmul.f32 %v59, %v39
  %v64 = vadd.f32 %v60, 1e-06
  %v65 = vadd.f32 %v61, 1e-06
  %v66 = vadd.f32 %v62, 1e-06
  %v67 = vadd.f32 %v63, 1e-06
  %v68 = vrsqrt.pop %v64
  %v69 = vrsqrt.pop %v65
  %v70 = vrsqrt.pop %v66
  %v71 = vrsqrt.pop %v67
  %v72 = vmul.f32 %v44, %v68
  %v73 = vmul.f32 %v45, %v69
  %v74 = vmul.f32 %v46, %v70
  %v75 = vmul.f32 %v47, %v71
  %v76 = vld [vmem:[%s1] sm:$0x1]
  %v78 = vlaneseq
  %v79 = vshrl.u32 %v78, 7
  %v80 = vsub.s32 0, %v79
  %v81 = vrot.slane %v76, %v80
  %v83 = vmul.f32 %v72, %v81
  %v84 = vmul.f32 %v73, %v81
  %v85 = vmul.f32 %v74, %v81
  %v86 = vmul.f32 %v75, %v81
  %v87 = vld [vmem:[%s2] sm:$0x1]
  %v89 = vlaneseq
  %v90 = vshrl.u32 %v89, 7
  %v91 = vsub.s32 0, %v90
  %v92 = vrot.slane %v87, %v91
  %v94 = vadd.f32 %v83, %v92
  %v95 = vadd.f32 %v84, %v92
  %v96 = vadd.f32 %v85, %v92
  %v97 = vadd.f32 %v86, %v92
  %v98 = vpack.c.bf16 %v95, %v94
  %v99 = vpack.c.bf16 %v97, %v96
  %v100 = vld [vmem:[%s3] sm:$0xff]
  %v101 = vld [vmem:[%s3 + $0x8] sm:$0xff]
  %v102 = vld [vmem:[%s3 + $0x10] sm:$0xff]
  %v103 = vld [vmem:[%s3 + $0x18] sm:$0xff]
  %v104 = vld [vmem:[%s3 + $0x20] sm:$0xff]
  %v105 = vld [vmem:[%s3 + $0x28] sm:$0xff]
  %v106 = vld [vmem:[%s3 + $0x30] sm:$0xff]
  %v107 = vld [vmem:[%s3 + $0x38] sm:$0xff]
  %v108 = vld [vmem:[%s3 + $0x40] sm:$0xff]
  %v109 = vld [vmem:[%s3 + $0x48] sm:$0xff]
  %v110 = vld [vmem:[%s3 + $0x50] sm:$0xff]
  %v111 = vld [vmem:[%s3 + $0x58] sm:$0xff]
  %v112 = vld [vmem:[%s3 + $0x60] sm:$0xff]
  %v113 = vld [vmem:[%s3 + $0x68] sm:$0xff]
  %v114 = vld [vmem:[%s3 + $0x70] sm:$0xff]
  %v115 = vld [vmem:[%s3 + $0x78] sm:$0xff]
  %v116 = vld [vmem:[%s4] sm:$0x3]
  %v118 = vlaneseq
  %v119 = vshrl.u32 %v118, 7
  %v120 = vsub.s32 0, %v119
  %v121 = vrot.slane %v116, %v120
  %v122 = vlaneseq
  %v123 = vshrl.u32 %v122, 7
  %v124 = vsub.s32 1, %v123
  %v125 = vrot.slane %v116, %v124
  %v144 = vunpack.c.l.b16 %v100
  %v145 = vunpack.c.h.b16 %v100
  %v146 = vunpack.c.l.b16 %v101
  %v147 = vunpack.c.h.b16 %v101
  %v148 = vunpack.c.l.b16 %v102
  %v149 = vunpack.c.h.b16 %v102
  %v150 = vunpack.c.l.b16 %v103
  %v151 = vunpack.c.h.b16 %v103
  %v152 = vunpack.c.l.b16 %v104
  %v153 = vunpack.c.h.b16 %v104
  %v154 = vunpack.c.l.b16 %v105
  %v155 = vunpack.c.h.b16 %v105
  %v156 = vunpack.c.l.b16 %v106
  %v157 = vunpack.c.h.b16 %v106
  %v158 = vunpack.c.l.b16 %v107
  %v159 = vunpack.c.h.b16 %v107
  %v160 = vunpack.c.l.b16 %v108
  %v161 = vunpack.c.h.b16 %v108
  %v162 = vunpack.c.l.b16 %v109
  %v163 = vunpack.c.h.b16 %v109
  %v164 = vunpack.c.l.b16 %v110
  %v165 = vunpack.c.h.b16 %v110
  %v166 = vunpack.c.l.b16 %v111
  %v167 = vunpack.c.h.b16 %v111
  %v168 = vunpack.c.l.b16 %v112
  %v169 = vunpack.c.h.b16 %v112
  %v170 = vunpack.c.l.b16 %v113
  %v171 = vunpack.c.h.b16 %v113
  %v172 = vunpack.c.l.b16 %v114
  %v173 = vunpack.c.h.b16 %v114
  %v174 = vunpack.c.l.b16 %v115
  %v175 = vunpack.c.h.b16 %v115
  %v176 = vpack.c.b16 %v146, %v144
  %v177 = vpack.c.b16 %v147, %v145
  %v178 = vpack.c.b16 %v150, %v148
  %v179 = vpack.c.b16 %v151, %v149
  %v180 = vpack.c.b16 %v154, %v152
  %v181 = vpack.c.b16 %v155, %v153
  %v182 = vpack.c.b16 %v158, %v156
  %v183 = vpack.c.b16 %v159, %v157
  %v184 = vpack.c.b16 %v162, %v160
  %v185 = vpack.c.b16 %v163, %v161
  %v186 = vpack.c.b16 %v166, %v164
  %v187 = vpack.c.b16 %v167, %v165
  %v188 = vpack.c.b16 %v170, %v168
  %v189 = vpack.c.b16 %v171, %v169
  %v190 = vpack.c.b16 %v174, %v172
  %v191 = vpack.c.b16 %v175, %v173
  %208 = vmatprep.subr.bf16.mxu0 %v177
  %209 = vmatpush1.bf16.msra.mxu0 %v176
  %210 = vmatprep.subr.bf16.mxu0 %v179
  %211 = vmatpush1.bf16.msra.mxu0 %v178
  %212 = vmatprep.subr.bf16.mxu0 %v181
  %213 = vmatpush1.bf16.msra.mxu0 %v180
  %214 = vmatprep.subr.bf16.mxu0 %v183
  %215 = vmatpush1.bf16.msra.mxu0 %v182
  %216 = vmatprep.subr.bf16.mxu0 %v185
  %217 = vmatpush1.bf16.msra.mxu0 %v184
  %218 = vmatprep.subr.bf16.mxu0 %v187
  %219 = vmatpush1.bf16.msra.mxu0 %v186
  %220 = vmatprep.subr.bf16.mxu0 %v189
  %221 = vmatpush1.bf16.msra.mxu0 %v188
  %222 = vmatprep.subr.bf16.mxu0 %v191
  %223 = vmatpush1.bf16.msra.mxu0 %v190
  %224 = vmatprep.subr.bf16.mxu0 0
  %225 = vmatpush1.bf16.msra.mxu0 0
  %226 = vmatprep.subr.bf16.mxu0 0
  %227 = vmatpush1.bf16.msra.mxu0 0
  %228 = vmatprep.subr.bf16.mxu0 0
  %229 = vmatpush1.bf16.msra.mxu0 0
  %230 = vmatprep.subr.bf16.mxu0 0
  %231 = vmatpush1.bf16.msra.mxu0 0
  %232 = vmatprep.subr.bf16.mxu0 0
  %233 = vmatpush1.bf16.msra.mxu0 0
  %234 = vmatprep.subr.bf16.mxu0 0
  %235 = vmatpush1.bf16.msra.mxu0 0
  %236 = vmatprep.subr.bf16.mxu0 0
  %237 = vmatpush1.bf16.msra.mxu0 0
  %238 = vmatprep.subr.bf16.mxu0 0
  %239 = vmatpush1.bf16.msra.mxu0 0
  %240 = vmatprep.mubr.bf16.mxu0 0
  %241 = vmatmul.mubr.bf16.gmra.mrb[0].mxu0 %v98
  %v242 = vpop.f32.mrb[0].mxu0
  %v243 = vadd.f32 %v121, %v242
  %v244 = vpop.f32.mrb[0].mxu0
  %v245 = vadd.f32 %v125, %v244
  %v246 = vpop.f32.mrb[0].mxu0
  %v247 = vadd.f32 %v121, %v246
  %v248 = vpop.f32.mrb[0].mxu0
  %v249 = vadd.f32 %v125, %v248
  %250 = vmatprep.mubr.bf16.mxu0 0
  %251 = vmatmul.mubr.bf16.gmra.mrb[0].mxu0 %v99
  %v252 = vpop.f32.mrb[0].mxu0
  %v253 = vadd.f32 %v121, %v252
  %v254 = vpop.f32.mrb[0].mxu0
  %v255 = vadd.f32 %v125, %v254
  %v256 = vpop.f32.mrb[0].mxu0
  %v257 = vadd.f32 %v121, %v256
  %v258 = vpop.f32.mrb[0].mxu0
  %v259 = vadd.f32 %v125, %v258
  %260 = vdwg.mxu0
  %v261 = vmax.f32 %v243, 0.0
  %v262 = vmax.f32 %v245, 0.0
  %v263 = vmax.f32 %v247, 0.0
  %v264 = vmax.f32 %v249, 0.0
  %v265 = vmax.f32 %v253, 0.0
  %v266 = vmax.f32 %v255, 0.0
  %v267 = vmax.f32 %v257, 0.0
  %v268 = vmax.f32 %v259, 0.0
  %v269 = vpack.c.bf16 %v263, %v261
  %v270 = vpack.c.bf16 %v264, %v262
  %v271 = vpack.c.bf16 %v267, %v265
  %v272 = vpack.c.bf16 %v268, %v266
  %v273 = vld [vmem:[%s5] sm:$0xf]
  %v274 = vld [vmem:[%s5 + $0x4] sm:$0xf]
  %v275 = vld [vmem:[%s5 + $0x8] sm:$0xf]
  %v276 = vld [vmem:[%s5 + $0xc] sm:$0xf]
  %v277 = vld [vmem:[%s5 + $0x10] sm:$0xf]
  %v278 = vld [vmem:[%s5 + $0x14] sm:$0xf]
  %v279 = vld [vmem:[%s5 + $0x18] sm:$0xf]
  %v280 = vld [vmem:[%s5 + $0x1c] sm:$0xf]
  %v281 = vld [vmem:[%s5 + $0x20] sm:$0xf]
  %v282 = vld [vmem:[%s5 + $0x24] sm:$0xf]
  %v283 = vld [vmem:[%s5 + $0x28] sm:$0xf]
  %v284 = vld [vmem:[%s5 + $0x2c] sm:$0xf]
  %v285 = vld [vmem:[%s5 + $0x30] sm:$0xf]
  %v286 = vld [vmem:[%s5 + $0x34] sm:$0xf]
  %v287 = vld [vmem:[%s5 + $0x38] sm:$0xf]
  %v288 = vld [vmem:[%s5 + $0x3c] sm:$0xf]
  %v289 = vld [vmem:[%s5 + $0x40] sm:$0xf]
  %v290 = vld [vmem:[%s5 + $0x44] sm:$0xf]
  %v291 = vld [vmem:[%s5 + $0x48] sm:$0xf]
  %v292 = vld [vmem:[%s5 + $0x4c] sm:$0xf]
  %v293 = vld [vmem:[%s5 + $0x50] sm:$0xf]
  %v294 = vld [vmem:[%s5 + $0x54] sm:$0xf]
  %v295 = vld [vmem:[%s5 + $0x58] sm:$0xf]
  %v296 = vld [vmem:[%s5 + $0x5c] sm:$0xf]
  %v297 = vld [vmem:[%s5 + $0x60] sm:$0xf]
  %v298 = vld [vmem:[%s5 + $0x64] sm:$0xf]
  %v299 = vld [vmem:[%s5 + $0x68] sm:$0xf]
  %v300 = vld [vmem:[%s5 + $0x6c] sm:$0xf]
  %v301 = vld [vmem:[%s5 + $0x70] sm:$0xf]
  %v302 = vld [vmem:[%s5 + $0x74] sm:$0xf]
  %v303 = vld [vmem:[%s5 + $0x78] sm:$0xf]
  %v304 = vld [vmem:[%s5 + $0x7c] sm:$0xf]
  %v305 = vld [vmem:[%s6] sm:$0x1]
  %v307 = vlaneseq
  %v308 = vshrl.u32 %v307, 7
  %v309 = vsub.s32 0, %v308
  %v310 = vrot.slane %v305, %v309
  %v344 = vunpack.c.l.b16 %v273
  %v345 = vunpack.c.l.b16 %v274
  %v346 = vunpack.c.l.b16 %v275
  %v347 = vunpack.c.l.b16 %v276
  %v348 = vunpack.c.l.b16 %v277
  %v349 = vunpack.c.l.b16 %v278
  %v350 = vunpack.c.l.b16 %v279
  %v351 = vunpack.c.l.b16 %v280
  %v352 = vunpack.c.l.b16 %v281
  %v353 = vunpack.c.l.b16 %v282
  %v354 = vunpack.c.l.b16 %v283
  %v355 = vunpack.c.l.b16 %v284
  %v356 = vunpack.c.l.b16 %v285
  %v357 = vunpack.c.l.b16 %v286
  %v358 = vunpack.c.l.b16 %v287
  %v359 = vunpack.c.l.b16 %v288
  %v360 = vunpack.c.l.b16 %v289
  %v361 = vunpack.c.l.b16 %v290
  %v362 = vunpack.c.l.b16 %v291
  %v363 = vunpack.c.l.b16 %v292
  %v364 = vunpack.c.l.b16 %v293
  %v365 = vunpack.c.l.b16 %v294
  %v366 = vunpack.c.l.b16 %v295
  %v367 = vunpack.c.l.b16 %v296
  %v368 = vunpack.c.l.b16 %v297
  %v369 = vunpack.c.l.b16 %v298
  %v370 = vunpack.c.l.b16 %v299
  %v371 = vunpack.c.l.b16 %v300
  %v372 = vunpack.c.l.b16 %v301
  %v373 = vunpack.c.l.b16 %v302
  %v374 = vunpack.c.l.b16 %v303
  %v375 = vunpack.c.l.b16 %v304
  %v376 = vpack.c.b16 %v345, %v344
  %v377 = vpack.c.b16 %v347, %v346
  %v378 = vpack.c.b16 %v349, %v348
  %v379 = vpack.c.b16 %v351, %v350
  %v380 = vpack.c.b16 %v353, %v352
  %v381 = vpack.c.b16 %v355, %v354
  %v382 = vpack.c.b16 %v357, %v356
  %v383 = vpack.c.b16 %v359, %v358
  %v384 = vpack.c.b16 %v361, %v360
  %v385 = vpack.c.b16 %v363, %v362
  %v386 = vpack.c.b16 %v365, %v364
  %v387 = vpack.c.b16 %v367, %v366
  %v388 = vpack.c.b16 %v369, %v368
  %v389 = vpack.c.b16 %v371, %v370
  %v390 = vpack.c.b16 %v373, %v372
  %v391 = vpack.c.b16 %v375, %v374
  %408 = vmatprep.subr.bf16.mxu0 0
  %409 = vmatpush1.bf16.msra.mxu0 %v376
  %410 = vmatprep.subr.bf16.mxu0 0
  %411 = vmatpush1.bf16.msra.mxu0 %v377
  %412 = vmatprep.subr.bf16.mxu0 0
  %413 = vmatpush1.bf16.msra.mxu0 %v378
  %414 = vmatprep.subr.bf16.mxu0 0
  %415 = vmatpush1.bf16.msra.mxu0 %v379
  %416 = vmatprep.subr.bf16.mxu0 0
  %417 = vmatpush1.bf16.msra.mxu0 %v380
  %418 = vmatprep.subr.bf16.mxu0 0
  %419 = vmatpush1.bf16.msra.mxu0 %v381
  %420 = vmatprep.subr.bf16.mxu0 0
  %421 = vmatpush1.bf16.msra.mxu0 %v382
  %422 = vmatprep.subr.bf16.mxu0 0
  %423 = vmatpush1.bf16.msra.mxu0 %v383
  %424 = vmatprep.subr.bf16.mxu0 0
  %425 = vmatpush1.bf16.msra.mxu0 %v384
  %426 = vmatprep.subr.bf16.mxu0 0
  %427 = vmatpush1.bf16.msra.mxu0 %v385
  %428 = vmatprep.subr.bf16.mxu0 0
  %429 = vmatpush1.bf16.msra.mxu0 %v386
  %430 = vmatprep.subr.bf16.mxu0 0
  %431 = vmatpush1.bf16.msra.mxu0 %v387
  %432 = vmatprep.subr.bf16.mxu0 0
  %433 = vmatpush1.bf16.msra.mxu0 %v388
  %434 = vmatprep.subr.bf16.mxu0 0
  %435 = vmatpush1.bf16.msra.mxu0 %v389
  %436 = vmatprep.subr.bf16.mxu0 0
  %437 = vmatpush1.bf16.msra.mxu0 %v390
  %438 = vmatprep.subr.bf16.mxu0 0
  %439 = vmatpush1.bf16.msra.mxu0 %v391
  %440 = vmatprep.mubr.bf16.mxu0 %v270
  %441 = vmatmul.mubr.bf16.gmra.mrb[0].mxu0 %v269
  %v442 = vpop.f32.mrb[0].mxu0
  %v443 = vadd.f32 %v310, %v442
  %v444 = vpop.f32.mrb[0].mxu0
  %v445 = vpop.f32.mrb[0].mxu0
  %v446 = vadd.f32 %v310, %v445
  %v447 = vpop.f32.mrb[0].mxu0
  %448 = vmatprep.mubr.bf16.mxu0 %v272
  %449 = vmatmul.mubr.bf16.gmra.mrb[0].mxu0 %v271
  %v450 = vpop.f32.mrb[0].mxu0
  %v451 = vadd.f32 %v310, %v450
  %v452 = vpop.f32.mrb[0].mxu0
  %v453 = vpop.f32.mrb[0].mxu0
  %v454 = vadd.f32 %v310, %v453
  %v455 = vpop.f32.mrb[0].mxu0
  %456 = vdwg.mxu0
  %v457 = vadd.f32 %v443, %v27
  %v458 = vadd.f32 %v446, %v28
  %v459 = vadd.f32 %v451, %v29
  %v460 = vadd.f32 %v454, %v30
  %461 = vst [vmem:[%s7] sm:$0xff] %v457
  %462 = vst [vmem:[%s7 + $0x8] sm:$0xff] %v458
  %463 = vst [vmem:[%s7 + $0x10] sm:$0xff] %v459
  %464 = vst [vmem:[%s7 + $0x18] sm:$0xff] %v460
  // Predicated region
  $region30: #{encoder_forward.18} parent=0 // pred_check
    _
  $region31: #{encoder_forward.18} parent=0 // pred_check_branch
    %466 = sbr.rel (0) target = $region33
  $region32: #{encoder_forward.18} parent=0 // pred_region
    _
  $region33: #{encoder_forward.18} parent=0 // pred_fallthru
    _
  // Predicated region
  $region34: #{encoder_forward.18} parent=0 // pred_check
    _
  $region35: #{encoder_forward.18} parent=0 // pred_check_branch
    %468 = sbr.rel (0) target = $region37
  $region36: #{encoder_forward.18} parent=0 // pred_region
    _
  $region37: #{encoder_forward.18} parent=0 // pred_fallthru
    _

</llo_original>
